<compile_context>
chip_gen: v7x
topology: tpu7x:2x2x1
jax: 0.10.0
libtpu: 0.0.40
codegen_flags: <defaults>
</compile_context>

<pallas_src>
import functools
import math

import jax
import jax.numpy as jnp
from jax import lax
from jax.experimental import pallas as pl
from jax.experimental.pallas import tpu as pltpu

_LANES = 128
_MAX_TK = 512
_VMEM_LIMIT = 32 * 1024 * 1024  # conservative scoped-VMEM cap (fits v5e/v6e/v7x)


def _round_up(x, m):
    return (x + m - 1) // m * m


def _choose_tm(m):
    """Row tile: as large as useful (<=512) but keep >=2 grid tiles when
    possible so v7x's two TensorCores both get work."""
    if m >= 1024:
        return 512
    if m <= 16:
        return _round_up(m, 8)
    return min(512, _round_up((m + 1) // 2, 8))


# ---------------------------------------------------------------------------
# Pallas kernels: tiled GEMM + folded-BN bias epilogue (+ residual / ReLU)
# ---------------------------------------------------------------------------
def _gemm_bn_kernel(x_ref, w_ref, b_ref, o_ref, acc_ref, *, relu):
    @pl.when(pl.program_id(1) == 0)
    def _init():
        acc_ref[...] = jnp.zeros_like(acc_ref)

    acc_ref[...] += jnp.dot(x_ref[...], w_ref[...],
                            preferred_element_type=jnp.float32)

    @pl.when(pl.program_id(1) == pl.num_programs(1) - 1)
    def _fin():
        y = acc_ref[...] + b_ref[...]
        if relu:
            y = jnp.maximum(y, 0.0)
        o_ref[...] = y.astype(o_ref.dtype)


def _gemm_bn_res_relu_kernel(x_ref, w_ref, b_ref, r_ref, o_ref, acc_ref):
    """out = relu( x @ w + b + residual )  (conv3 -> bn3 -> += residual -> relu)."""
    @pl.when(pl.program_id(1) == 0)
    def _init():
        acc_ref[...] = jnp.zeros_like(acc_ref)

    acc_ref[...] += jnp.dot(x_ref[...], w_ref[...],
                            preferred_element_type=jnp.float32)

    @pl.when(pl.program_id(1) == pl.num_programs(1) - 1)
    def _fin():
        y = acc_ref[...] + b_ref[...] + r_ref[...]
        o_ref[...] = jnp.maximum(y, 0.0).astype(o_ref.dtype)


def _pallas_gemm_bn(x2d, w_kc, shift_c, residual2d=None, *, relu,
                    compute_dtype, out_dtype):
    """(M,K) @ (K,C) + shift [+ residual] [-> relu], lane-dense padded output."""
    m, k = x2d.shape
    k2, c = w_kc.shape
    assert k == k2 and shift_c.shape == (c,)

    c_pad = _round_up(c, _LANES)          # lane-dense output (unmasked stores)
    if k <= _MAX_TK:                      # single full-K block
        tk, k_pad = k, k
    else:                                 # K-tiled reduction axis
        tk = _MAX_TK
        k_pad = _round_up(k, tk)
    tm = _choose_tm(m)
    m_pad = _round_up(m, tm)

    x_p = jnp.pad(x2d.astype(compute_dtype), ((0, m_pad - m), (0, k_pad - k)))
    w_p = jnp.pad(w_kc.astype(compute_dtype), ((0, k_pad - k), (0, c_pad - c)))
    b_p = jnp.pad(shift_c.astype(jnp.float32)[None, :], ((0, 0), (0, c_pad - c)))

    in_specs = [
        pl.BlockSpec((tm, tk), lambda i, kk: (i, kk)),
        pl.BlockSpec((tk, c_pad), lambda i, kk: (kk, 0)),
        pl.BlockSpec((1, c_pad), lambda i, kk: (0, 0)),
    ]
    operands = [x_p, w_p, b_p]

    if residual2d is not None:
        r_p = jnp.pad(residual2d.astype(jnp.float32),
                      ((0, m_pad - m), (0, c_pad - c)))
        in_specs.append(pl.BlockSpec((tm, c_pad), lambda i, kk: (i, 0)))
        operands.append(r_p)
        kernel = _gemm_bn_res_relu_kernel
    else:
        kernel = functools.partial(_gemm_bn_kernel, relu=relu)

    out = pl.pallas_call(
        kernel,
        out_shape=jax.ShapeDtypeStruct((m_pad, c_pad), out_dtype),
        grid_spec=pltpu.PrefetchScalarGridSpec(
            num_scalar_prefetch=0,
            grid=(m_pad // tm, k_pad // tk),
            in_specs=in_specs,
            out_specs=pl.BlockSpec((tm, c_pad), lambda i, kk: (i, 0)),
            scratch_shapes=[pltpu.VMEM((tm, c_pad), jnp.float32)],
        ),
        compiler_params=pltpu.CompilerParams(
            dimension_semantics=("parallel", "arbitrary"),
            vmem_limit_bytes=_VMEM_LIMIT,
        ),
    )(*operands)

    return out[:m, :c]


# ---------------------------------------------------------------------------
# Conv + BN wrappers (layout glue in plain JAX, GEMM in Pallas)
# ---------------------------------------------------------------------------
def _fold_bn(w_oihw, gamma, beta, mean, var, eps=1e-5):
    """Fold eval-mode BN into weight columns (scale) and a shift vector."""
    scale = gamma / jnp.sqrt(var + eps)                       # (Cout,)
    cout = w_oihw.shape[0]
    # (Cout, Cin, KH, KW) -> (KH, KW, Cin, Cout) -> (KH*KW*Cin, Cout)
    w_kc = jnp.transpose(w_oihw, (2, 3, 1, 0)).reshape(-1, cout)
    w_kc = w_kc * scale[None, :]
    shift = beta - mean * scale
    return w_kc.astype(jnp.float32), shift.astype(jnp.float32)


def _im2col_nhwc(x_nhwc, kh, kw, stride, padding, dilation=1):
    """(N*OH*OW, KH*KW*C) patches, inner order (kh, kw, c): no transpose of the
    big tensor (the tiny weight is permuted to match instead)."""
    n, h, w, c = x_nhwc.shape
    xp = jnp.pad(x_nhwc, ((0, 0), (padding, padding), (padding, padding), (0, 0)))
    hp, wp = h + 2 * padding, w + 2 * padding
    oh = (hp - dilation * (kh - 1) - 1) // stride + 1
    ow = (wp - dilation * (kw - 1) - 1) // stride + 1
    taps = []
    for i in range(kh):
        for j in range(kw):
            hs, ws = i * dilation, j * dilation
            taps.append(xp[:, hs:hs + (oh - 1) * stride + 1:stride,
                           ws:ws + (ow - 1) * stride + 1:stride, :])
    patches = jnp.concatenate(taps, axis=-1)                  # (N,OH,OW,KH*KW*C)
    return patches.reshape(n * oh * ow, kh * kw * c), oh, ow


def _conv1x1_bn(x_nhwc, w_oihw, bn, *, relu, residual_nhwc=None,
                compute_dtype, out_dtype):
    n, h, w, cin = x_nhwc.shape
    cout = w_oihw.shape[0]
    w_kc, shift = _fold_bn(w_oihw, *bn)
    x2d = x_nhwc.reshape(n * h * w, cin)
    res2d = None
    if residual_nhwc is not None:
        res2d = residual_nhwc.reshape(n * h * w, cout)
    y = _pallas_gemm_bn(x2d, w_kc, shift, res2d, relu=relu,
                        compute_dtype=compute_dtype, out_dtype=out_dtype)
    return y.reshape(n, h, w, cout)


def _conv3x3_bn_relu(x_nhwc, w_oihw, bn, *, stride, compute_dtype, out_dtype):
    n = x_nhwc.shape[0]
    cout, _, kh, kw = w_oihw.shape
    w_kc, shift = _fold_bn(w_oihw, *bn)
    patches, oh, ow = _im2col_nhwc(x_nhwc, kh, kw, stride, padding=1)
    y = _pallas_gemm_bn(patches, w_kc, shift, None, relu=True,
                        compute_dtype=compute_dtype, out_dtype=out_dtype)
    return y.reshape(n, oh, ow, cout)


# ---------------------------------------------------------------------------
# Full Bottle2neck forward (eval mode)
# ---------------------------------------------------------------------------
@functools.partial(jax.jit, static_argnames=("scale", "stype", "stride",
                                             "width", "compute_dtype"))
def bottle2neck_forward(x_nchw, params, *, scale, stype, stride, width,
                        compute_dtype=jnp.bfloat16):
    x_nhwc = jnp.transpose(x_nchw, (0, 2, 3, 1)).astype(jnp.float32)
    inter_dtype = compute_dtype   # intermediate activations stay in MXU dtype

    # conv1 (1x1) + bn1 + relu
    out = _conv1x1_bn(x_nhwc, params["conv1_w"], params["bn1"], relu=True,
                      compute_dtype=compute_dtype, out_dtype=inter_dtype)

    nums = 1 if scale == 1 else scale - 1
    spx = [out[..., i * width:(i + 1) * width] for i in range(scale)]

    outs = []
    sp = None
    for i in range(nums):
        sp_in = spx[i] if (i == 0 or stype == "stage") else sp + spx[i]
        sp = _conv3x3_bn_relu(sp_in, params["convs_w"][i], params["bns"][i],
                              stride=stride, compute_dtype=compute_dtype,
                              out_dtype=inter_dtype)
        outs.append(sp)

    if scale != 1 and stype == "normal":
        outs.append(spx[nums])
    elif scale != 1 and stype == "stage":
        # AvgPool2d(3, stride, padding=1), count_include_pad=True
        p = spx[nums].astype(jnp.float32)
        s = lax.reduce_window(p, 0.0, lax.add, (1, 3, 3, 1),
                              (1, stride, stride, 1),
                              ((0, 0), (1, 1), (1, 1), (0, 0)))
        outs.append((s / 9.0).astype(inter_dtype))

    cat = jnp.concatenate(outs, axis=-1)

    # conv3 (1x1) + bn3 + residual add + final ReLU, fused in one kernel
    y = _conv1x1_bn(cat, params["conv3_w"], params["bn3"], relu=False,
                    residual_nhwc=x_nhwc, compute_dtype=compute_dtype,
                    out_dtype=jnp.float32)
    return jnp.transpose(y, (0, 3, 1, 2))


# ---------------------------------------------------------------------------
# Pure-JAX / XLA reference for verification
# ---------------------------------------------------------------------------
def _conv_bn_ref(x, w, gamma, beta, mean, var, *, stride=1, padding=0, eps=1e-5):
    y = lax.conv_general_dilated(
        x.astype(jnp.float32), w.astype(jnp.float32),
        window_strides=(stride, stride),
        padding=((padding, padding), (padding, padding)),
        dimension_numbers=("NCHW", "OIHW", "NCHW"))
    scale = (gamma / jnp.sqrt(var + eps)).reshape(1, -1, 1, 1)
    shift = (beta - mean * gamma / jnp.sqrt(var + eps)).reshape(1, -1, 1, 1)
    return y * scale + shift


def bottle2neck_ref(x, params, *, scale, stype, stride, width):
    residual = x
    out = jax.nn.relu(_conv_bn_ref(x, params["conv1_w"], *params["bn1"]))
    nums = 1 if scale == 1 else scale - 1
    spx = [out[:, i * width:(i + 1) * width] for i in range(scale)]
    acc = None
    sp = None
    for i in range(nums):
        sp = spx[i] if (i == 0 or stype == "stage") else sp + spx[i]
        sp = jax.nn.relu(_conv_bn_ref(sp, params["convs_w"][i], *params["bns"][i],
                                      stride=stride, padding=1))
        acc = sp if i == 0 else jnp.concatenate((acc, sp), axis=1)
    if scale != 1 and stype == "normal":
        acc = jnp.concatenate((acc, spx[nums]), axis=1)
    out = _conv_bn_ref(acc, params["conv3_w"], *params["bn3"])
    return jax.nn.relu(out + residual)


if __name__ == "__main__":
    # Bottle2neck(inplanes=32, planes=8, baseWidth=26, scale=4, stride=1,
    #             stype='normal', downsample=None), eval mode.
    N, H, W = 2, 16, 16
    inplanes, planes, baseWidth, scale_ = 32, 8, 26, 4
    stride, stype, expansion = 1, "normal", 4
    width = int(math.floor(planes * (baseWidth / 64.0)))   # = 3
    nums = 1 if scale_ == 1 else scale_ - 1

    key = jax.random.PRNGKey(0)
    k_iter = iter(jax.random.split(key, 16))

    def bn_params(k, c):
        kg, kb, km, kv = jax.random.split(k, 4)
        return (1.0 + 0.1 * jax.random.normal(kg, (c,), jnp.float32),
                0.1 * jax.random.normal(kb, (c,), jnp.float32),
                0.1 * jax.random.normal(km, (c,), jnp.float32),
                1.0 + 0.1 * jax.random.uniform(kv, (c,), jnp.float32))

    x = jax.random.normal(next(k_iter), (N, inplanes, H, W), jnp.float32)
    conv1_w = 0.2 * jax.random.normal(next(k_iter),
                                      (width * scale_, inplanes, 1, 1), jnp.float32)
    bn1 = bn_params(next(k_iter), width * scale_)
    convs_w = [0.2 * jax.random.normal(next(k_iter), (width, width, 3, 3),
                                       jnp.float32) for _ in range(nums)]
    bns = [bn_params(next(k_iter), width) for _ in range(nums)]
    conv3_w = 0.2 * jax.random.normal(next(k_iter),
                                      (planes * expansion, width * scale_, 1, 1),
                                      jnp.float32)
    bn3 = bn_params(next(k_iter), planes * expansion)

    params = {"conv1_w": conv1_w, "bn1": bn1, "convs_w": convs_w, "bns": bns,
              "conv3_w": conv3_w, "bn3": bn3}

    ref = jax.block_until_ready(
        bottle2neck_ref(x, params, scale=scale_, stype=stype,
                        stride=stride, width=width))

    # 1) float32 MXU path — tight check against the XLA reference
    out_f32 = jax.block_until_ready(
        bottle2neck_forward(x, params, scale=scale_, stype=stype, stride=stride,
                            width=width, compute_dtype=jnp.float32))
    assert out_f32.shape == (N, planes * expansion, H, W), out_f32.shape
    err_f32 = float(jnp.max(jnp.abs(out_f32 - ref)))
    assert err_f32 < 1e-3, err_f32

    # 2) bfloat16 MXU path (recommended on v6e/v7x) — loose numeric check
    out_bf16 = jax.block_until_ready(
        bottle2neck_forward(x, params, scale=scale_, stype=stype, stride=stride,
                            width=width, compute_dtype=jnp.bfloat16))
    err_bf16 = float(jnp.max(jnp.abs(out_bf16 - ref)))
    assert err_bf16 < 0.25, err_bf16

    print("KERNEL_OK")
</pallas_src>

<mosaic_0001>
module attributes {stable_mosaic.version = 11 : i64} {
  func.func @_gemm_bn_kernel(%arg0: i32, %arg1: i32, %arg2: memref<256x32xf32, #tpu.memory_space<vmem>>, %arg3: memref<32x128xf32, #tpu.memory_space<vmem>>, %arg4: memref<1x128xf32, #tpu.memory_space<vmem>>, %arg5: memref<256x128xf32, #tpu.memory_space<vmem>>, %arg6: memref<256x128xf32, #tpu.memory_space<vmem>>) attributes {dimension_semantics = [#tpu.dimension_semantics<parallel>, #tpu.dimension_semantics<arbitrary>], iteration_bounds = array<i64: 2, 1>, scalar_prefetch = 0 : i64, scratch_operands = 1 : i64, tpu.core_type = #tpu.core_type<tc>, window_params = [{transform_indices = @transform_0, window_bounds = array<i64: 256, 32>}, {transform_indices = @transform_1, window_bounds = array<i64: 32, 128>}, {pipeline_mode = #tpu.pipeline_mode<synchronous>, transform_indices = @transform_2, window_bounds = array<i64: 1, 128>}, {transform_indices = @transform_3, window_bounds = array<i64: 256, 128>}]} {
    %c0_i32 = arith.constant 0 : i32
    %0 = arith.cmpi eq, %arg1, %c0_i32 : i32
    %1 = arith.extui %0 : i1 to i32
    %c0_i32_0 = arith.constant 0 : i32
    %2 = arith.cmpi ne, %1, %c0_i32_0 : i32
    scf.if %2 {
      %cst_10 = arith.constant 0.000000e+00 : f32
      %12 = vector.broadcast %cst_10 : f32 to vector<256x128xf32>
      %c0_11 = arith.constant 0 : index
      %c0_12 = arith.constant 0 : index
      %13 = vector.load %arg6[%c0_11, %c0_12] : memref<256x128xf32, #tpu.memory_space<vmem>>, vector<256x128xf32>
      tpu.vector_store %arg6[%c0_11, %c0_12], %12 {strides = array<i32>} : memref<256x128xf32, #tpu.memory_space<vmem>>, vector<256x128xf32>,
    } else {
    }
    %c0 = arith.constant 0 : index
    %c0_1 = arith.constant 0 : index
    %3 = vector.load %arg6[%c0, %c0_1] : memref<256x128xf32, #tpu.memory_space<vmem>>, vector<256x128xf32>
    %c0_2 = arith.constant 0 : index
    %c0_3 = arith.constant 0 : index
    %4 = vector.load %arg2[%c0_2, %c0_3] : memref<256x32xf32, #tpu.memory_space<vmem>>, vector<256x32xf32>
    %c0_4 = arith.constant 0 : index
    %c0_5 = arith.constant 0 : index
    %5 = vector.load %arg3[%c0_4, %c0_5] : memref<32x128xf32, #tpu.memory_space<vmem>>, vector<32x128xf32>
    %cst = arith.constant dense<0.000000e+00> : vector<256x128xf32>
    %6 = tpu.matmul %4, %5, %cst {dimension_numbers = #tpu.dot_dimension_numbers<[1], [0], [0], [1], [0, 0, 1, 1], [], []>} : vector<256x32xf32>, vector<32x128xf32>, vector<256x128xf32> -> vector<256x128xf32>
    %7 = arith.addf %3, %6 : vector<256x128xf32>
    %c0_6 = arith.constant 0 : index
    %c0_7 = arith.constant 0 : index
    %8 = vector.load %arg6[%c0_6, %c0_7] : memref<256x128xf32, #tpu.memory_space<vmem>>, vector<256x128xf32>
    tpu.vector_store %arg6[%c0_6, %c0_7], %7 {strides = array<i32>} : memref<256x128xf32, #tpu.memory_space<vmem>>, vector<256x128xf32>,
    %c0_i32_8 = arith.constant 0 : i32
    %9 = arith.cmpi eq, %arg1, %c0_i32_8 : i32
    %10 = arith.extui %9 : i1 to i32
    %c0_i32_9 = arith.constant 0 : i32
    %11 = arith.cmpi ne, %10, %c0_i32_9 : i32
    scf.if %11 {
      %c0_10 = arith.constant 0 : index
      %c0_11 = arith.constant 0 : index
      %12 = vector.load %arg6[%c0_10, %c0_11] : memref<256x128xf32, #tpu.memory_space<vmem>>, vector<256x128xf32>
      %c0_12 = arith.constant 0 : index
      %c0_13 = arith.constant 0 : index
      %13 = vector.load %arg4[%c0_12, %c0_13] : memref<1x128xf32, #tpu.memory_space<vmem>>, vector<1x128xf32>
      %14 = vector.broadcast %13 : vector<1x128xf32> to vector<256x128xf32>
      %15 = arith.addf %12, %14 : vector<256x128xf32>
      %cst_14 = arith.constant 0.000000e+00 : f32
      %16 = vector.broadcast %cst_14 : f32 to vector<256x128xf32>
      %17 = arith.maximumf %15, %16 : vector<256x128xf32>
      %c0_15 = arith.constant 0 : index
      %c0_16 = arith.constant 0 : index
      %18 = vector.load %arg5[%c0_15, %c0_16] : memref<256x128xf32, #tpu.memory_space<vmem>>, vector<256x128xf32>
      tpu.vector_store %arg5[%c0_15, %c0_16], %17 {strides = array<i32>} : memref<256x128xf32, #tpu.memory_space<vmem>>, vector<256x128xf32>,
    } else {
    }
    return
  }
  func.func @transform_0(%arg0: i32, %arg1: i32) -> (i32, i32) {
    %c0_i32 = arith.constant 0 : i32
    return %arg0, %arg1 : i32, i32
  }
  func.func @transform_1(%arg0: i32, %arg1: i32) -> (i32, i32) {
    %c0_i32 = arith.constant 0 : i32
    %c0_i32_0 = arith.constant 0 : i32
    return %arg1, %c0_i32 : i32, i32
  }
  func.func @transform_2(%arg0: i32, %arg1: i32) -> (i32, i32) {
    %c0_i32 = arith.constant 0 : i32
    %c0_i32_0 = arith.constant 0 : i32
    %c0_i32_1 = arith.constant 0 : i32
    return %c0_i32, %c0_i32_0 : i32, i32
  }
  func.func @transform_3(%arg0: i32, %arg1: i32) -> (i32, i32) {
    %c0_i32 = arith.constant 0 : i32
    %c0_i32_0 = arith.constant 0 : i32
    return %arg0, %c0_i32 : i32, i32
  }
}

module attributes {stable_mosaic.version = 11 : i64} {
  func.func @_gemm_bn_kernel(%arg0: i32, %arg1: i32, %arg2: memref<256x27xf32, #tpu.memory_space<vmem>>, %arg3: memref<27x128xf32, #tpu.memory_space<vmem>>, %arg4: memref<1x128xf32, #tpu.memory_space<vmem>>, %arg5: memref<256x128xf32, #tpu.memory_space<vmem>>, %arg6: memref<256x128xf32, #tpu.memory_space<vmem>>) attributes {dimension_semantics = [#tpu.dimension_semantics<parallel>, #tpu.dimension_semantics<arbitrary>], iteration_bounds = array<i64: 2, 1>, scalar_prefetch = 0 : i64, scratch_operands = 1 : i64, tpu.core_type = #tpu.core_type<tc>, window_params = [{transform_indices = @transform_0, window_bounds = array<i64: 256, 27>}, {transform_indices = @transform_1, window_bounds = array<i64: 27, 128>}, {pipeline_mode = #tpu.pipeline_mode<synchronous>, transform_indices = @transform_2, window_bounds = array<i64: 1, 128>}, {transform_indices = @transform_3, window_bounds = array<i64: 256, 128>}]} {
    %c0_i32 = arith.constant 0 : i32
    %0 = arith.cmpi eq, %arg1, %c0_i32 : i32
    %1 = arith.extui %0 : i1 to i32
    %c0_i32_0 = arith.constant 0 : i32
    %2 = arith.cmpi ne, %1, %c0_i32_0 : i32
    scf.if %2 {
      %cst_10 = arith.constant 0.000000e+00 : f32
      %12 = vector.broadcast %cst_10 : f32 to vector<256x128xf32>
      %c0_11 = arith.constant 0 : index
      %c0_12 = arith.constant 0 : index
      %13 = vector.load %arg6[%c0_11, %c0_12] : memref<256x128xf32, #tpu.memory_space<vmem>>, vector<256x128xf32>
      tpu.vector_store %arg6[%c0_11, %c0_12], %12 {strides = array<i32>} : memref<256x128xf32, #tpu.memory_space<vmem>>, vector<256x128xf32>,
    } else {
    }
    %c0 = arith.constant 0 : index
    %c0_1 = arith.constant 0 : index
    %3 = vector.load %arg6[%c0, %c0_1] : memref<256x128xf32, #tpu.memory_space<vmem>>, vector<256x128xf32>
    %c0_2 = arith.constant 0 : index
    %c0_3 = arith.constant 0 : index
    %4 = vector.load %arg2[%c0_2, %c0_3] : memref<256x27xf32, #tpu.memory_space<vmem>>, vector<256x27xf32>
    %c0_4 = arith.constant 0 : index
    %c0_5 = arith.constant 0 : index
    %5 = vector.load %arg3[%c0_4, %c0_5] : memref<27x128xf32, #tpu.memory_space<vmem>>, vector<27x128xf32>
    %cst = arith.constant dense<0.000000e+00> : vector<256x128xf32>
    %6 = tpu.matmul %4, %5, %cst {dimension_numbers = #tpu.dot_dimension_numbers<[1], [0], [0], [1], [0, 0, 1, 1], [], []>} : vector<256x27xf32>, vector<27x128xf32>, vector<256x128xf32> -> vector<256x128xf32>
    %7 = arith.addf %3, %6 : vector<256x128xf32>
    %c0_6 = arith.constant 0 : index
    %c0_7 = arith.constant 0 : index
    %8 = vector.load %arg6[%c0_6, %c0_7] : memref<256x128xf32, #tpu.memory_space<vmem>>, vector<256x128xf32>
    tpu.vector_store %arg6[%c0_6, %c0_7], %7 {strides = array<i32>} : memref<256x128xf32, #tpu.memory_space<vmem>>, vector<256x128xf32>,
    %c0_i32_8 = arith.constant 0 : i32
    %9 = arith.cmpi eq, %arg1, %c0_i32_8 : i32
    %10 = arith.extui %9 : i1 to i32
    %c0_i32_9 = arith.constant 0 : i32
    %11 = arith.cmpi ne, %10, %c0_i32_9 : i32
    scf.if %11 {
      %c0_10 = arith.constant 0 : index
      %c0_11 = arith.constant 0 : index
      %12 = vector.load %arg6[%c0_10, %c0_11] : memref<256x128xf32, #tpu.memory_space<vmem>>, vector<256x128xf32>
      %c0_12 = arith.constant 0 : index
      %c0_13 = arith.constant 0 : index
      %13 = vector.load %arg4[%c0_12, %c0_13] : memref<1x128xf32, #tpu.memory_space<vmem>>, vector<1x128xf32>
      %14 = vector.broadcast %13 : vector<1x128xf32> to vector<256x128xf32>
      %15 = arith.addf %12, %14 : vector<256x128xf32>
      %cst_14 = arith.constant 0.000000e+00 : f32
      %16 = vector.broadcast %cst_14 : f32 to vector<256x128xf32>
      %17 = arith.maximumf %15, %16 : vector<256x128xf32>
      %c0_15 = arith.constant 0 : index
      %c0_16 = arith.constant 0 : index
      %18 = vector.load %arg5[%c0_15, %c0_16] : memref<256x128xf32, #tpu.memory_space<vmem>>, vector<256x128xf32>
      tpu.vector_store %arg5[%c0_15, %c0_16], %17 {strides = array<i32>} : memref<256x128xf32, #tpu.memory_space<vmem>>, vector<256x128xf32>,
    } else {
    }
    return
  }
  func.func @transform_0(%arg0: i32, %arg1: i32) -> (i32, i32) {
    %c0_i32 = arith.constant 0 : i32
    return %arg0, %arg1 : i32, i32
  }
  func.func @transform_1(%arg0: i32, %arg1: i32) -> (i32, i32) {
    %c0_i32 = arith.constant 0 : i32
    %c0_i32_0 = arith.constant 0 : i32
    return %arg1, %c0_i32 : i32, i32
  }
  func.func @transform_2(%arg0: i32, %arg1: i32) -> (i32, i32) {
    %c0_i32 = arith.constant 0 : i32
    %c0_i32_0 = arith.constant 0 : i32
    %c0_i32_1 = arith.constant 0 : i32
    return %c0_i32, %c0_i32_0 : i32, i32
  }
  func.func @transform_3(%arg0: i32, %arg1: i32) -> (i32, i32) {
    %c0_i32 = arith.constant 0 : i32
    %c0_i32_0 = arith.constant 0 : i32
    return %arg0, %c0_i32 : i32, i32
  }
}

module attributes {stable_mosaic.version = 11 : i64} {
  func.func @_gemm_bn_res_relu_kernel(%arg0: i32, %arg1: i32, %arg2: memref<256x12xf32, #tpu.memory_space<vmem>>, %arg3: memref<12x128xf32, #tpu.memory_space<vmem>>, %arg4: memref<1x128xf32, #tpu.memory_space<vmem>>, %arg5: memref<256x128xf32, #tpu.memory_space<vmem>>, %arg6: memref<256x128xf32, #tpu.memory_space<vmem>>, %arg7: memref<256x128xf32, #tpu.memory_space<vmem>>) attributes {dimension_semantics = [#tpu.dimension_semantics<parallel>, #tpu.dimension_semantics<arbitrary>], iteration_bounds = array<i64: 2, 1>, scalar_prefetch = 0 : i64, scratch_operands = 1 : i64, tpu.core_type = #tpu.core_type<tc>, window_params = [{transform_indices = @transform_0, window_bounds = array<i64: 256, 12>}, {transform_indices = @transform_1, window_bounds = array<i64: 12, 128>}, {pipeline_mode = #tpu.pipeline_mode<synchronous>, transform_indices = @transform_2, window_bounds = array<i64: 1, 128>}, {transform_indices = @transform_3, window_bounds = array<i64: 256, 128>}, {transform_indices = @transform_4, window_bounds = array<i64: 256, 128>}]} {
    %c0_i32 = arith.constant 0 : i32
    %0 = arith.cmpi eq, %arg1, %c0_i32 : i32
    %1 = arith.extui %0 : i1 to i32
    %c0_i32_0 = arith.constant 0 : i32
    %2 = arith.cmpi ne, %1, %c0_i32_0 : i32
    scf.if %2 {
      %cst_10 = arith.constant 0.000000e+00 : f32
      %12 = vector.broadcast %cst_10 : f32 to vector<256x128xf32>
      %c0_11 = arith.constant 0 : index
      %c0_12 = arith.constant 0 : index
      %13 = vector.load %arg7[%c0_11, %c0_12] : memref<256x128xf32, #tpu.memory_space<vmem>>, vector<256x128xf32>
      tpu.vector_store %arg7[%c0_11, %c0_12], %12 {strides = array<i32>} : memref<256x128xf32, #tpu.memory_space<vmem>>, vector<256x128xf32>,
    } else {
    }
    %c0 = arith.constant 0 : index
    %c0_1 = arith.constant 0 : index
    %3 = vector.load %arg7[%c0, %c0_1] : memref<256x128xf32, #tpu.memory_space<vmem>>, vector<256x128xf32>
    %c0_2 = arith.constant 0 : index
    %c0_3 = arith.constant 0 : index
    %4 = vector.load %arg2[%c0_2, %c0_3] : memref<256x12xf32, #tpu.memory_space<vmem>>, vector<256x12xf32>
    %c0_4 = arith.constant 0 : index
    %c0_5 = arith.constant 0 : index
    %5 = vector.load %arg3[%c0_4, %c0_5] : memref<12x128xf32, #tpu.memory_space<vmem>>, vector<12x128xf32>
    %cst = arith.constant dense<0.000000e+00> : vector<256x128xf32>
    %6 = tpu.matmul %4, %5, %cst {dimension_numbers = #tpu.dot_dimension_numbers<[1], [0], [0], [1], [0, 0, 1, 1], [], []>} : vector<256x12xf32>, vector<12x128xf32>, vector<256x128xf32> -> vector<256x128xf32>
    %7 = arith.addf %3, %6 : vector<256x128xf32>
    %c0_6 = arith.constant 0 : index
    %c0_7 = arith.constant 0 : index
    %8 = vector.load %arg7[%c0_6, %c0_7] : memref<256x128xf32, #tpu.memory_space<vmem>>, vector<256x128xf32>
    tpu.vector_store %arg7[%c0_6, %c0_7], %7 {strides = array<i32>} : memref<256x128xf32, #tpu.memory_space<vmem>>, vector<256x128xf32>,
    %c0_i32_8 = arith.constant 0 : i32
    %9 = arith.cmpi eq, %arg1, %c0_i32_8 : i32
    %10 = arith.extui %9 : i1 to i32
    %c0_i32_9 = arith.constant 0 : i32
    %11 = arith.cmpi ne, %10, %c0_i32_9 : i32
    scf.if %11 {
      %c0_10 = arith.constant 0 : index
      %c0_11 = arith.constant 0 : index
      %12 = vector.load %arg7[%c0_10, %c0_11] : memref<256x128xf32, #tpu.memory_space<vmem>>, vector<256x128xf32>
      %c0_12 = arith.constant 0 : index
      %c0_13 = arith.constant 0 : index
      %13 = vector.load %arg4[%c0_12, %c0_13] : memref<1x128xf32, #tpu.memory_space<vmem>>, vector<1x128xf32>
      %14 = vector.broadcast %13 : vector<1x128xf32> to vector<256x128xf32>
      %15 = arith.addf %12, %14 : vector<256x128xf32>
      %c0_14 = arith.constant 0 : index
      %c0_15 = arith.constant 0 : index
      %16 = vector.load %arg5[%c0_14, %c0_15] : memref<256x128xf32, #tpu.memory_space<vmem>>, vector<256x128xf32>
      %17 = arith.addf %15, %16 : vector<256x128xf32>
      %cst_16 = arith.constant 0.000000e+00 : f32
      %18 = vector.broadcast %cst_16 : f32 to vector<256x128xf32>
      %19 = arith.maximumf %17, %18 : vector<256x128xf32>
      %c0_17 = arith.constant 0 : index
      %c0_18 = arith.constant 0 : index
      %20 = vector.load %arg6[%c0_17, %c0_18] : memref<256x128xf32, #tpu.memory_space<vmem>>, vector<256x128xf32>
      tpu.vector_store %arg6[%c0_17, %c0_18], %19 {strides = array<i32>} : memref<256x128xf32, #tpu.memory_space<vmem>>, vector<256x128xf32>,
    } else {
    }
    return
  }
  func.func @transform_0(%arg0: i32, %arg1: i32) -> (i32, i32) {
    %c0_i32 = arith.constant 0 : i32
    return %arg0, %arg1 : i32, i32
  }
  func.func @transform_1(%arg0: i32, %arg1: i32) -> (i32, i32) {
    %c0_i32 = arith.constant 0 : i32
    %c0_i32_0 = arith.constant 0 : i32
    return %arg1, %c0_i32 : i32, i32
  }
  func.func @transform_2(%arg0: i32, %arg1: i32) -> (i32, i32) {
    %c0_i32 = arith.constant 0 : i32
    %c0_i32_0 = arith.constant 0 : i32
    %c0_i32_1 = arith.constant 0 : i32
    return %c0_i32, %c0_i32_0 : i32, i32
  }
  func.func @transform_3(%arg0: i32, %arg1: i32) -> (i32, i32) {
    %c0_i32 = arith.constant 0 : i32
    %c0_i32_0 = arith.constant 0 : i32
    return %arg0, %c0_i32 : i32, i32
  }
  func.func @transform_4(%arg0: i32, %arg1: i32) -> (i32, i32) {
    %c0_i32 = arith.constant 0 : i32
    %c0_i32_0 = arith.constant 0 : i32
    return %arg0, %c0_i32 : i32, i32
  }
}

</mosaic_0001>

<llo_original>
// kernel: bottle2neck_forward.5
$region0: #{bottle2neck_forward.5}
  #allocation0 [shape = 'u32[]', space=smem, size = 0x4, offset = 0x4, fixed_abs, tag = 'smem constant byte address 0x4 - core index']
  #allocation1 [shape = 'u32[144,128]{1,0:T(1,128)}', space=vmem, size = 0x12000, scoped, tag = 'internal scratch']
  #allocation2 [shape = 'f32[256,128]{1,0:T(8,128)}', space=vmem, size = 0x20000, scoped, tag = 'scratch operand']
  %s0 = inlined_call_operand.hbm [shape: f32[512,32], index: 0, kind: input, shape index: {}]
  %s1 = inlined_call_operand.vmem [shape: f32[32,128], index: 1, kind: input, shape index: {}]
  %s2 = inlined_call_operand.vmem [shape: f32[1,128], index: 2, kind: input, shape index: {}]
  %s3 = inlined_call_operand.vmem [shape: f32[512,128], index: 3, kind: output, shape index: {}]
  %s4 = sld [smem:[#allocation0]]
  $region57: #{bottle2neck_forward.5} parent=0
    _
  %s6 = ssub.s32 1, %s4
  %s7 = scalar_select 0, %s6, %s4
  $region1: #{bottle2neck_forward.5} parent=0
    #allocation3 [shape = 'u8[262144]{0}', space=vmem, size = 0x40000, scoped, tag = 'input window, operand 0']
    #allocation4 [shape = 's32[2]{0}', space=sflag, size = 0x8, scoped, tag = 'scoped memory for bottle2neck_forward.5']
    %8 = vsyncpa [#allocation4], 0
    %s9 = scalar_lea.sflag [#allocation4], 1
    %10 = vsyncpa %s9, 0
    loop: start=0, step=1, limit=4
    $region2: #{bottle2neck_forward.5} parent=1 // loop_pre_header
      _
    $region3: #{bottle2neck_forward.5} parent=1 // loop_header
      %s12 = sphi 0, %s16
      %p13 = scmp.ge.s32.totalorder %s12, 4
      %s19 = sphi 0, %s31
      %s20 = sphi 0, %s27
      %s21 = sphi 0, %s19
      %s22 = sphi 0, %s20
      %s23 = sphi 0, %s21
      %s24 = sphi 0, %s22
      %s36 = sphi 0, %s38
      %s39 = sphi 0, %s36
      %s40 = sphi 0, %s39
      %s56 = sphi 0, %s40
      %s62 = sphi 0, %s64
      %s65 = sphi 0, %s62
      %s66 = sphi 0, %s65
      %s82 = sphi 0, %s66
      %s86 = sphi 0, %s86
      %s88 = sphi 0, %s86
      %s89 = sphi 0, %s88
      %s103 = sphi 0, %s89
      %s109 = sphi 0, %s111
      %s112 = sphi 0, %s109
      %s113 = sphi 0, %s112
      %s129 = sphi 0, %s113
    $region4: #{bottle2neck_forward.5} parent=1 // loop_header_branch
      %15 = sbr.rel (%p13) target = $region8
    $region5: #{bottle2neck_forward.5} parent=1 // loop_body
      %s17 = ssub.s32 %s12, 1
      %s18 = ssub.s32 %s12, 2
      %s25 = sadd.s32 1, %s20
      %p26 = scmp.ge.s32.totalorder %s25, 1
      %s27 = scalar_select %p26, 0, %s25
      %s28 = sadd.s32 1, %s19
      %s29 = scalar_select %p26, %s28, %s19
      %p30 = scmp.ge.s32.totalorder %s29, 2
      %s31 = scalar_select %p30, 0, %s29
      %s32 = ssub.s32 %s19, %s31
      %s33 = ssub.s32 %s20, %s27
      %s34 = sor.u32 %s32, %s33
      %p35 = scmp.eq.s32.totalorder %s34, 0
      %s37 = sadd.s32 %s36, 1
      %s38 = scalar_select %p35, %s36, %s37
      %p41 = pneg %p35
      %p42 = scmp.eq.s32.totalorder %s12, 1
      %p43 = por %p41, %p42
      %p44 = scmp.ne.s32.totalorder %s36, %s39
      %p45 = scmp.eq.s32.totalorder %s12, 0
      %p46 = por %p44, %p45
      %p47 = scmp.ne.s32.totalorder %s36, %s39
      %p48 = scmp.eq.s32.totalorder %s17, 1
      %p49 = por %p47, %p48
      %p50 = scmp.ne.s32.totalorder %s39, %s40
      %p51 = scmp.eq.s32.totalorder %s17, 0
      %p52 = por %p50, %p51
      %p53 = scmp.ne.s32.totalorder %s39, %s40
      %p54 = scmp.eq.s32.totalorder %s18, 1
      %p55 = por %p53, %p54
      %p57 = scmp.ne.s32.totalorder %s40, %s56
      %p58 = scmp.eq.s32.totalorder %s18, 0
      %p59 = por %p57, %p58
      %s60 = ssub.s32 %s20, %s27
      %p61 = scmp.eq.s32.totalorder %s60, 0
      %s63 = sadd.s32 %s62, 1
      %s64 = scalar_select %p61, %s62, %s63
      %p67 = pneg %p61
      %p68 = scmp.eq.s32.totalorder %s12, 1
      %p69 = por %p67, %p68
      %p70 = scmp.ne.s32.totalorder %s62, %s65
      %p71 = scmp.eq.s32.totalorder %s12, 0
      %p72 = por %p70, %p71
      %p73 = scmp.ne.s32.totalorder %s62, %s65
      %p74 = scmp.eq.s32.totalorder %s17, 1
      %p75 = por %p73, %p74
      %p76 = scmp.ne.s32.totalorder %s65, %s66
      %p77 = scmp.eq.s32.totalorder %s17, 0
      %p78 = por %p76, %p77
      %p79 = scmp.ne.s32.totalorder %s65, %s66
      %p80 = scmp.eq.s32.totalorder %s18, 1
      %p81 = por %p79, %p80
      %p83 = scmp.ne.s32.totalorder %s66, %s82
      %p84 = scmp.eq.s32.totalorder %s18, 0
      %p85 = por %p83, %p84
      %s87 = sadd.s32 %s86, 1
      %p90 = scmp.eq.s32.totalorder %s12, 1
      %p91 = scmp.ne.s32.totalorder %s86, %s88
      %p92 = scmp.eq.s32.totalorder %s12, 0
      %p93 = por %p91, %p92
      %p94 = scmp.ne.s32.totalorder %s86, %s88
      %p95 = scmp.eq.s32.totalorder %s17, 1
      %p96 = por %p94, %p95
      %p97 = scmp.ne.s32.totalorder %s88, %s89
      %p98 = scmp.eq.s32.totalorder %s17, 0
      %p99 = por %p97, %p98
      %p100 = scmp.ne.s32.totalorder %s88, %s89
      %p101 = scmp.eq.s32.totalorder %s18, 1
      %p102 = por %p100, %p101
      %p104 = scmp.ne.s32.totalorder %s89, %s103
      %p105 = scmp.eq.s32.totalorder %s18, 0
      %p106 = por %p104, %p105
      %s107 = ssub.s32 %s19, %s31
      %p108 = scmp.eq.s32.totalorder %s107, 0
      %s110 = sadd.s32 %s109, 1
      %s111 = scalar_select %p108, %s109, %s110
      %p114 = pneg %p108
      %p115 = scmp.eq.s32.totalorder %s12, 1
      %p116 = por %p114, %p115
      %p117 = scmp.ne.s32.totalorder %s109, %s112
      %p118 = scmp.eq.s32.totalorder %s12, 0
      %p119 = por %p117, %p118
      %p120 = scmp.ne.s32.totalorder %s109, %s112
      %p121 = scmp.eq.s32.totalorder %s17, 1
      %p122 = por %p120, %p121
      %p123 = scmp.ne.s32.totalorder %s112, %s113
      %p124 = scmp.eq.s32.totalorder %s17, 0
      %p125 = por %p123, %p124
      %p126 = scmp.ne.s32.totalorder %s112, %s113
      %p127 = scmp.eq.s32.totalorder %s18, 1
      %p128 = por %p126, %p127
      %p130 = scmp.ne.s32.totalorder %s113, %s129
      %p131 = scmp.eq.s32.totalorder %s18, 0
      %p132 = por %p130, %p131
      %p133 = scmp.le.s32.totalorder 1, %s12
      %p134 = scmp.lt.s32.totalorder %s12, 3
      %p135 = pnand %p133, %p134
      %p136 = pneg %p135
      // Predicated region
      $region9: #{bottle2neck_forward.5} parent=5 // pred_check
        _
      $region10: #{bottle2neck_forward.5} parent=5 // pred_check_branch
        %138 = sbr.rel (%p135) target = $region12
      $region11: #{bottle2neck_forward.5} parent=5 // pred_region
        %s139 = ssub.s32 %s12, 1
        // Predicated region
        $region13: #{bottle2neck_forward.5} parent=11 // pred_check
          %p140 = pneg %p78
        $region14: #{bottle2neck_forward.5} parent=11 // pred_check_branch
          %142 = sbr.rel (%p140) target = $region16
        $region15: #{bottle2neck_forward.5} parent=11 // pred_region
          %s143 = smul.u32 4, %s22
          %p144 = scmp.lt.s32.totalorder %s143, 3
          %s145 = scalar_select %p144, %s143, 3
          %s146 = smul.addr %s145, 8
          %s147 = scalar_lea.vmem %s1, %s146
          %s148 = smul.u32 4, %s22
        $region16: #{bottle2neck_forward.5} parent=11 // pred_fallthru
          _
        // Predicated region
        $region17: #{bottle2neck_forward.5} parent=11 // pred_check
          %p149 = pneg %p99
        $region18: #{bottle2neck_forward.5} parent=11 // pred_check_branch
          %151 = sbr.rel (%p149) target = $region20
        $region19: #{bottle2neck_forward.5} parent=11 // pred_region
          _
        $region20: #{bottle2neck_forward.5} parent=11 // pred_fallthru
          _
      $region12: #{bottle2neck_forward.5} parent=5 // pred_fallthru
        _
      %p152 = scmp.lt.s32.totalorder %s12, 2
      // Predicated region
      $region21: #{bottle2neck_forward.5} parent=5 // pred_check
        %p153 = pneg %p152
      $region22: #{bottle2neck_forward.5} parent=5 // pred_check_branch
        %155 = sbr.rel (%p153) target = $region24
      $region23: #{bottle2neck_forward.5} parent=5 // pred_region
        // Predicated region
        $region25: #{bottle2neck_forward.5} parent=23 // pred_check
          %p156 = pneg %p46
        $region26: #{bottle2neck_forward.5} parent=23 // pred_check_branch
          %158 = sbr.rel (%p156) target = $region28
        $region27: #{bottle2neck_forward.5} parent=23 // pred_region
          %s159 = sand.u32 %s36, 1
          %s160 = scalar_lea.sflag [#allocation4], %s159
          %s161 = sand.u32 %s36, 1
          %s162 = smul.addr %s161, 256
          %s163 = scalar_lea.vmem [#allocation3], %s162
          %s164 = smul.u32 32, %s19
          %s166 = ssub.s32 4096, 4096
          %167 = vsyncadd %s160, %s166
          %s168 = sadd.s32 %s20, %s164
          %s169 = smul.addr %s168, 128
          %s170 = scalar_lea.hbm %s0, %s169
          %s171 = sshll.u32 %s163, 4
          %s172 = int_to_ptr.vmem [resolvable:$true] %s171
          %177 = dma.hbm_to_vmem [thread:$0]  %s170, 4096, %s172, %s160, 128, 128, 8
        $region28: #{bottle2neck_forward.5} parent=23 // pred_fallthru
          _
      $region24: #{bottle2neck_forward.5} parent=5 // pred_fallthru
        _
      %p178 = scmp.le.s32.totalorder 1, %s12
      %p179 = scmp.lt.s32.totalorder %s12, 3
      %p180 = pnand %p178, %p179
      %p181 = pneg %p180
      // Predicated region
      $region29: #{bottle2neck_forward.5} parent=5 // pred_check
        _
      $region30: #{bottle2neck_forward.5} parent=5 // pred_check_branch
        %183 = sbr.rel (%p180) target = $region32
      $region31: #{bottle2neck_forward.5} parent=5 // pred_region
        %s184 = ssub.s32 %s12, 1
        %s185 = sand.u32 %s39, 1
        %s186 = scalar_lea.sflag [#allocation4], %s185
        %s187 = sand.u32 %s39, 1
        %s188 = smul.addr %s187, 256
        %s189 = scalar_lea.vmem [#allocation3], %s188
        // Predicated region
        $region33: #{bottle2neck_forward.5} parent=31 // pred_check
          %p190 = pneg %p52
        $region34: #{bottle2neck_forward.5} parent=31 // pred_check_branch
          %192 = sbr.rel (%p190) target = $region36
        $region35: #{bottle2neck_forward.5} parent=31 // pred_region
          %193 = dma.done %s186, 4096
        $region36: #{bottle2neck_forward.5} parent=31 // pred_fallthru
          _
        %s194 = sand.u32 %s39, 1
        %s195 = scalar_lea.sflag [#allocation4], %s194
        %s196 = sand.u32 %s39, 1
        %s197 = smul.addr %s196, 256
        %s198 = scalar_lea.vmem [#allocation3], %s197
        %p199 = pneg %p52
        %p200 = pneg %p49
        %s201 = smul.u32 4, %s22
        %p202 = scmp.lt.s32.totalorder %s201, 3
        %s203 = scalar_select %p202, %s201, 3
        %s204 = smul.addr %s203, 8
        %s205 = scalar_lea.vmem %s1, %s204
        %p206 = pneg %p78
        %p207 = pneg %p75
        %p208 = pneg %p99
        %p209 = pneg %p96
        %p210 = pneg %p125
        %p211 = pneg %p122
        %s212 = smul.u32 32, %s21
        %p213 = scmp.lt.s32.totalorder %s212, 63
        %s214 = scalar_select %p213, %s212, 63
        %s215 = smul.addr %s214, 8
        %s216 = scalar_lea.vmem %s3, %s215
        %s217 = smul.u32 32, %s21
        %s218 = smul.u32 4, %s22
        %p219 = scmp.lt.s32.totalorder %s218, 3
        %s220 = scalar_select %p219, %s218, 3
        %s221 = smul.addr %s220, 8
        %s222 = scalar_lea.vmem %s1, %s221
        %s223 = smul.u32 4, %s22
        %s224 = smul.u32 32, %s21
        %p225 = scmp.lt.s32.totalorder %s224, 63
        %s226 = scalar_select %p225, %s224, 63
        %s227 = smul.addr %s226, 8
        %s228 = scalar_lea.vmem %s3, %s227
        %s229 = smul.u32 32, %s21
        %p230 = scmp.eq.s32.totalorder %s22, 0
        // Predicated region
        $region37: #{bottle2neck_forward.5} parent=31 // pred_check
          %p231 = pneg %p230
        $region38: #{bottle2neck_forward.5} parent=31 // pred_check_branch
          %233 = sbr.rel (%p231) target = $region40
        $region39: #{bottle2neck_forward.5} parent=31 // pred_region
          %234 = vst [vmem:[#allocation2] sm:$0xff] 0.0
          %235 = vst [vmem:[#allocation2 + $0x8] sm:$0xff] 0.0
          %236 = vst [vmem:[#allocation2 + $0x10] sm:$0xff] 0.0
          %237 = vst [vmem:[#allocation2 + $0x18] sm:$0xff] 0.0
          %238 = vst [vmem:[#allocation2 + $0x20] sm:$0xff] 0.0
          %239 = vst [vmem:[#allocation2 + $0x28] sm:$0xff] 0.0
          %240 = vst [vmem:[#allocation2 + $0x30] sm:$0xff] 0.0
          %241 = vst [vmem:[#allocation2 + $0x38] sm:$0xff] 0.0
          %242 = vst [vmem:[#allocation2 + $0x40] sm:$0xff] 0.0
          %243 = vst [vmem:[#allocation2 + $0x48] sm:$0xff] 0.0
          %244 = vst [vmem:[#allocation2 + $0x50] sm:$0xff] 0.0
          %245 = vst [vmem:[#allocation2 + $0x58] sm:$0xff] 0.0
          %246 = vst [vmem:[#allocation2 + $0x60] sm:$0xff] 0.0
          %247 = vst [vmem:[#allocation2 + $0x68] sm:$0xff] 0.0
          %248 = vst [vmem:[#allocation2 + $0x70] sm:$0xff] 0.0
          %249 = vst [vmem:[#allocation2 + $0x78] sm:$0xff] 0.0
          %250 = vst [vmem:[#allocation2 + $0x80] sm:$0xff] 0.0
          %251 = vst [vmem:[#allocation2 + $0x88] sm:$0xff] 0.0
          %252 = vst [vmem:[#allocation2 + $0x90] sm:$0xff] 0.0
          %253 = vst [vmem:[#allocation2 + $0x98] sm:$0xff] 0.0
          %254 = vst [vmem:[#allocation2 + $0xa0] sm:$0xff] 0.0
          %255 = vst [vmem:[#allocation2 + $0xa8] sm:$0xff] 0.0
          %256 = vst [vmem:[#allocation2 + $0xb0] sm:$0xff] 0.0
          %257 = vst [vmem:[#allocation2 + $0xb8] sm:$0xff] 0.0
          %258 = vst [vmem:[#allocation2 + $0xc0] sm:$0xff] 0.0
          %259 = vst [vmem:[#allocation2 + $0xc8] sm:$0xff] 0.0
          %260 = vst [vmem:[#allocation2 + $0xd0] sm:$0xff] 0.0
          %261 = vst [vmem:[#allocation2 + $0xd8] sm:$0xff] 0.0
          %262 = vst [vmem:[#allocation2 + $0xe0] sm:$0xff] 0.0
          %263 = vst [vmem:[#allocation2 + $0xe8] sm:$0xff] 0.0
          %264 = vst [vmem:[#allocation2 + $0xf0] sm:$0xff] 0.0
          %265 = vst [vmem:[#allocation2 + $0xf8] sm:$0xff] 0.0
        $region40: #{bottle2neck_forward.5} parent=31 // pred_fallthru
          _
        %v266 = vld [vmem:[#allocation2] sm:$0xff]
        %v267 = vld [vmem:[#allocation2 + $0x8] sm:$0xff]
        %v268 = vld [vmem:[#allocation2 + $0x10] sm:$0xff]
        %v269 = vld [vmem:[#allocation2 + $0x18] sm:$0xff]
        %v270 = vld [vmem:[#allocation2 + $0x20] sm:$0xff]
        %v271 = vld [vmem:[#allocation2 + $0x28] sm:$0xff]
        %v272 = vld [vmem:[#allocation2 + $0x30] sm:$0xff]
        %v273 = vld [vmem:[#allocation2 + $0x38] sm:$0xff]
        %v274 = vld [vmem:[#allocation2 + $0x40] sm:$0xff]
        %v275 = vld [vmem:[#allocation2 + $0x48] sm:$0xff]
        %v276 = vld [vmem:[#allocation2 + $0x50] sm:$0xff]
        %v277 = vld [vmem:[#allocation2 + $0x58] sm:$0xff]
        %v278 = vld [vmem:[#allocation2 + $0x60] sm:$0xff]
        %v279 = vld [vmem:[#allocation2 + $0x68] sm:$0xff]
        %v280 = vld [vmem:[#allocation2 + $0x70] sm:$0xff]
        %v281 = vld [vmem:[#allocation2 + $0x78] sm:$0xff]
        %v282 = vld [vmem:[#allocation2 + $0x80] sm:$0xff]
        %v283 = vld [vmem:[#allocation2 + $0x88] sm:$0xff]
        %v284 = vld [vmem:[#allocation2 + $0x90] sm:$0xff]
        %v285 = vld [vmem:[#allocation2 + $0x98] sm:$0xff]
        %v286 = vld [vmem:[#allocation2 + $0xa0] sm:$0xff]
        %v287 = vld [vmem:[#allocation2 + $0xa8] sm:$0xff]
        %v288 = vld [vmem:[#allocation2 + $0xb0] sm:$0xff]
        %v289 = vld [vmem:[#allocation2 + $0xb8] sm:$0xff]
        %v290 = vld [vmem:[#allocation2 + $0xc0] sm:$0xff]
        %v291 = vld [vmem:[#allocation2 + $0xc8] sm:$0xff]
        %v292 = vld [vmem:[#allocation2 + $0xd0] sm:$0xff]
        %v293 = vld [vmem:[#allocation2 + $0xd8] sm:$0xff]
        %v294 = vld [vmem:[#allocation2 + $0xe0] sm:$0xff]
        %v295 = vld [vmem:[#allocation2 + $0xe8] sm:$0xff]
        %v296 = vld [vmem:[#allocation2 + $0xf0] sm:$0xff]
        %v297 = vld [vmem:[#allocation2 + $0xf8] sm:$0xff]
        %v298 = vld [vmem:[%s189] sm:$0xff]
        %v299 = vld [vmem:[%s189 + $0x8] sm:$0xff]
        %v300 = vld [vmem:[%s189 + $0x10] sm:$0xff]
        %v301 = vld [vmem:[%s189 + $0x18] sm:$0xff]
        %v302 = vld [vmem:[%s189 + $0x20] sm:$0xff]
        %v303 = vld [vmem:[%s189 + $0x28] sm:$0xff]
        %v304 = vld [vmem:[%s189 + $0x30] sm:$0xff]
        %v305 = vld [vmem:[%s189 + $0x38] sm:$0xff]
        %v306 = vld [vmem:[%s189 + $0x40] sm:$0xff]
        %v307 = vld [vmem:[%s189 + $0x48] sm:$0xff]
        %v308 = vld [vmem:[%s189 + $0x50] sm:$0xff]
        %v309 = vld [vmem:[%s189 + $0x58] sm:$0xff]
        %v310 = vld [vmem:[%s189 + $0x60] sm:$0xff]
        %v311 = vld [vmem:[%s189 + $0x68] sm:$0xff]
        %v312 = vld [vmem:[%s189 + $0x70] sm:$0xff]
        %v313 = vld [vmem:[%s189 + $0x78] sm:$0xff]
        %v314 = vld [vmem:[%s189 + $0x80] sm:$0xff]
        %v315 = vld [vmem:[%s189 + $0x88] sm:$0xff]
        %v316 = vld [vmem:[%s189 + $0x90] sm:$0xff]
        %v317 = vld [vmem:[%s189 + $0x98] sm:$0xff]
        %v318 = vld [vmem:[%s189 + $0xa0] sm:$0xff]
        %v319 = vld [vmem:[%s189 + $0xa8] sm:$0xff]
        %v320 = vld [vmem:[%s189 + $0xb0] sm:$0xff]
        %v321 = vld [vmem:[%s189 + $0xb8] sm:$0xff]
        %v322 = vld [vmem:[%s189 + $0xc0] sm:$0xff]
        %v323 = vld [vmem:[%s189 + $0xc8] sm:$0xff]
        %v324 = vld [vmem:[%s189 + $0xd0] sm:$0xff]
        %v325 = vld [vmem:[%s189 + $0xd8] sm:$0xff]
        %v326 = vld [vmem:[%s189 + $0xe0] sm:$0xff]
        %v327 = vld [vmem:[%s189 + $0xe8] sm:$0xff]
        %v328 = vld [vmem:[%s189 + $0xf0] sm:$0xff]
        %v329 = vld [vmem:[%s189 + $0xf8] sm:$0xff]
        %v330 = vld [vmem:[%s222] sm:$0xff]
        %v331 = vld [vmem:[%s222 + $0x8] sm:$0xff]
        %v332 = vld [vmem:[%s222 + $0x10] sm:$0xff]
        %v333 = vld [vmem:[%s222 + $0x18] sm:$0xff]
        %vm334 = vcmask 261120
        %v336 = vsel %vm334, %v298, 0
        %v339 = vsel %vm334, %v299, 0
        %v342 = vsel %vm334, %v300, 0
        %v345 = vsel %vm334, %v301, 0
        %v348 = vsel %vm334, %v302, 0
        %v351 = vsel %vm334, %v303, 0
        %v354 = vsel %vm334, %v304, 0
        %v357 = vsel %vm334, %v305, 0
        %v360 = vsel %vm334, %v306, 0
        %v363 = vsel %vm334, %v307, 0
        %v366 = vsel %vm334, %v308, 0
        %v369 = vsel %vm334, %v309, 0
        %v372 = vsel %vm334, %v310, 0
        %v375 = vsel %vm334, %v311, 0
        %v378 = vsel %vm334, %v312, 0
        %v381 = vsel %vm334, %v313, 0
        %v384 = vsel %vm334, %v314, 0
        %v387 = vsel %vm334, %v315, 0
        %v390 = vsel %vm334, %v316, 0
        %v393 = vsel %vm334, %v317, 0
        %v396 = vsel %vm334, %v318, 0
        %v399 = vsel %vm334, %v319, 0
        %v402 = vsel %vm334, %v320, 0
        %v405 = vsel %vm334, %v321, 0
        %v408 = vsel %vm334, %v322, 0
        %v411 = vsel %vm334, %v323, 0
        %v414 = vsel %vm334, %v324, 0
        %v417 = vsel %vm334, %v325, 0
        %v420 = vsel %vm334, %v326, 0
        %v423 = vsel %vm334, %v327, 0
        %v426 = vsel %vm334, %v328, 0
        %v429 = vsel %vm334, %v329, 0
        %431 = vmatprep.subr.mxu0 0.0
        %432 = vmatpush1.msra.mxu0 %v330
        %433 = vmatprep.subr.mxu0 0.0
        %434 = vmatpush1.msra.mxu0 %v331
        %435 = vmatprep.subr.mxu0 0.0
        %436 = vmatpush1.msra.mxu0 %v332
        %437 = vmatprep.subr.mxu0 0.0
        %438 = vmatpush1.msra.mxu0 %v333
        %439 = vmatprep.subr.mxu0 0.0
        %440 = vmatpush1.msra.mxu0 0.0
        %441 = vmatprep.subr.mxu0 0.0
        %442 = vmatpush1.msra.mxu0 0.0
        %443 = vmatprep.subr.mxu0 0.0
        %444 = vmatpush1.msra.mxu0 0.0
        %445 = vmatprep.subr.mxu0 0.0
        %446 = vmatpush1.msra.mxu0 0.0
        %447 = vmatprep.subr.mxu0 0.0
        %448 = vmatpush1.msra.mxu0 0.0
        %449 = vmatprep.subr.mxu0 0.0
        %450 = vmatpush1.msra.mxu0 0.0
        %451 = vmatprep.subr.mxu0 0.0
        %452 = vmatpush1.msra.mxu0 0.0
        %453 = vmatprep.subr.mxu0 0.0
        %454 = vmatpush1.msra.mxu0 0.0
        %455 = vmatprep.subr.mxu0 0.0
        %456 = vmatpush1.msra.mxu0 0.0
        %457 = vmatprep.subr.mxu0 0.0
        %458 = vmatpush1.msra.mxu0 0.0
        %459 = vmatprep.subr.mxu0 0.0
        %460 = vmatpush1.msra.mxu0 0.0
        %461 = vmatprep.subr.mxu0 0.0
        %462 = vmatpush1.msra.mxu0 0.0
        %463 = vmatprep.subr.mxu0 0.0
        %464 = vmatpush1.msra.mxu0 0.0
        %465 = vmatprep.subr.mxu0 0.0
        %466 = vmatpush1.msra.mxu0 0.0
        %467 = vmatprep.subr.mxu0 0.0
        %468 = vmatpush1.msra.mxu0 0.0
        %469 = vmatprep.subr.mxu0 0.0
        %470 = vmatpush1.msra.mxu0 0.0
        %471 = vmatprep.subr.mxu0 0.0
        %472 = vmatpush1.msra.mxu0 0.0
        %473 = vmatprep.subr.mxu0 0.0
        %474 = vmatpush1.msra.mxu0 0.0
        %475 = vmatprep.subr.mxu0 0.0
        %476 = vmatpush1.msra.mxu0 0.0
        %477 = vmatprep.subr.mxu0 0.0
        %478 = vmatpush1.msra.mxu0 0.0
        %479 = vmatprep.subr.mxu0 0.0
        %480 = vmatpush1.msra.mxu0 0.0
        %481 = vmatprep.subr.mxu0 0.0
        %482 = vmatpush1.msra.mxu0 0.0
        %483 = vmatprep.subr.mxu0 0.0
        %484 = vmatpush1.msra.mxu0 0.0
        %485 = vmatprep.subr.mxu0 0.0
        %486 = vmatpush1.msra.mxu0 0.0
        %487 = vmatprep.subr.mxu0 0.0
        %488 = vmatpush1.msra.mxu0 0.0
        %489 = vmatprep.subr.mxu0 0.0
        %490 = vmatpush1.msra.mxu0 0.0
        %491 = vmatprep.subr.mxu0 0.0
        %492 = vmatpush1.msra.mxu0 0.0
        %493 = vmatprep.subr.mxu0 0.0
        %494 = vmatpush1.msra.mxu0 0.0
        %495 = vmatprep.mubr.f32.mxu0 0.0
        %496 = vmatmul.mubr.f32.gmra.mrb[0].mxu0 %v336
        %v497 = vpop.f32.mrb[0].mxu0
        %v498 = vadd.f32 0.0, %v497
        %v499 = vpop.f32.mrb[0].mxu0
        %500 = vmatprep.mubr.f32.mxu0 0.0
        %501 = vmatmul.mubr.f32.gmra.mrb[0].mxu0 %v339
        %v502 = vpop.f32.mrb[0].mxu0
        %v503 = vadd.f32 0.0, %v502
        %v504 = vpop.f32.mrb[0].mxu0
        %505 = vmatprep.mubr.f32.mxu0 0.0
        %506 = vmatmul.mubr.f32.gmra.mrb[0].mxu0 %v342
        %v507 = vpop.f32.mrb[0].mxu0
        %v508 = vadd.f32 0.0, %v507
        %v509 = vpop.f32.mrb[0].mxu0
        %510 = vmatprep.mubr.f32.mxu0 0.0
        %511 = vmatmul.mubr.f32.gmra.mrb[0].mxu0 %v345
        %v512 = vpop.f32.mrb[0].mxu0
        %v513 = vadd.f32 0.0, %v512
        %v514 = vpop.f32.mrb[0].mxu0
        %515 = vmatprep.mubr.f32.mxu0 0.0
        %516 = vmatmul.mubr.f32.gmra.mrb[0].mxu0 %v348
        %v517 = vpop.f32.mrb[0].mxu0
        %v518 = vadd.f32 0.0, %v517
        %v519 = vpop.f32.mrb[0].mxu0
        %520 = vmatprep.mubr.f32.mxu0 0.0
        %521 = vmatmul.mubr.f32.gmra.mrb[0].mxu0 %v351
        %v522 = vpop.f32.mrb[0].mxu0
        %v523 = vadd.f32 0.0, %v522
        %v524 = vpop.f32.mrb[0].mxu0
        %525 = vmatprep.mubr.f32.mxu0 0.0
        %526 = vmatmul.mubr.f32.gmra.mrb[0].mxu0 %v354
        %v527 = vpop.f32.mrb[0].mxu0
        %v528 = vadd.f32 0.0, %v527
        %v529 = vpop.f32.mrb[0].mxu0
        %530 = vmatprep.mubr.f32.mxu0 0.0
        %531 = vmatmul.mubr.f32.gmra.mrb[0].mxu0 %v357
        %v532 = vpop.f32.mrb[0].mxu0
        %v533 = vadd.f32 0.0, %v532
        %v534 = vpop.f32.mrb[0].mxu0
        %535 = vmatprep.mubr.f32.mxu0 0.0
        %536 = vmatmul.mubr.f32.gmra.mrb[0].mxu0 %v360
        %v537 = vpop.f32.mrb[0].mxu0
        %v538 = vadd.f32 0.0, %v537
        %v539 = vpop.f32.mrb[0].mxu0
        %540 = vmatprep.mubr.f32.mxu0 0.0
        %541 = vmatmul.mubr.f32.gmra.mrb[0].mxu0 %v363
        %v542 = vpop.f32.mrb[0].mxu0
        %v543 = vadd.f32 0.0, %v542
        %v544 = vpop.f32.mrb[0].mxu0
        %545 = vmatprep.mubr.f32.mxu0 0.0
        %546 = vmatmul.mubr.f32.gmra.mrb[0].mxu0 %v366
        %v547 = vpop.f32.mrb[0].mxu0
        %v548 = vadd.f32 0.0, %v547
        %v549 = vpop.f32.mrb[0].mxu0
        %550 = vmatprep.mubr.f32.mxu0 0.0
        %551 = vmatmul.mubr.f32.gmra.mrb[0].mxu0 %v369
        %v552 = vpop.f32.mrb[0].mxu0
        %v553 = vadd.f32 0.0, %v552
        %v554 = vpop.f32.mrb[0].mxu0
        %555 = vmatprep.mubr.f32.mxu0 0.0
        %556 = vmatmul.mubr.f32.gmra.mrb[0].mxu0 %v372
        %v557 = vpop.f32.mrb[0].mxu0
        %v558 = vadd.f32 0.0, %v557
        %v559 = vpop.f32.mrb[0].mxu0
        %560 = vmatprep.mubr.f32.mxu0 0.0
        %561 = vmatmul.mubr.f32.gmra.mrb[0].mxu0 %v375
        %v562 = vpop.f32.mrb[0].mxu0
        %v563 = vadd.f32 0.0, %v562
        %v564 = vpop.f32.mrb[0].mxu0
        %565 = vmatprep.mubr.f32.mxu0 0.0
        %566 = vmatmul.mubr.f32.gmra.mrb[0].mxu0 %v378
        %v567 = vpop.f32.mrb[0].mxu0
        %v568 = vadd.f32 0.0, %v567
        %v569 = vpop.f32.mrb[0].mxu0
        %570 = vmatprep.mubr.f32.mxu0 0.0
        %571 = vmatmul.mubr.f32.gmra.mrb[0].mxu0 %v381
        %v572 = vpop.f32.mrb[0].mxu0
        %v573 = vadd.f32 0.0, %v572
        %v574 = vpop.f32.mrb[0].mxu0
        %575 = vmatprep.mubr.f32.mxu0 0.0
        %576 = vmatmul.mubr.f32.gmra.mrb[0].mxu0 %v384
        %v577 = vpop.f32.mrb[0].mxu0
        %v578 = vadd.f32 0.0, %v577
        %v579 = vpop.f32.mrb[0].mxu0
        %580 = vmatprep.mubr.f32.mxu0 0.0
        %581 = vmatmul.mubr.f32.gmra.mrb[0].mxu0 %v387
        %v582 = vpop.f32.mrb[0].mxu0
        %v583 = vadd.f32 0.0, %v582
        %v584 = vpop.f32.mrb[0].mxu0
        %585 = vmatprep.mubr.f32.mxu0 0.0
        %586 = vmatmul.mubr.f32.gmra.mrb[0].mxu0 %v390
        %v587 = vpop.f32.mrb[0].mxu0
        %v588 = vadd.f32 0.0, %v587
        %v589 = vpop.f32.mrb[0].mxu0
        %590 = vmatprep.mubr.f32.mxu0 0.0
        %591 = vmatmul.mubr.f32.gmra.mrb[0].mxu0 %v393
        %v592 = vpop.f32.mrb[0].mxu0
        %v593 = vadd.f32 0.0, %v592
        %v594 = vpop.f32.mrb[0].mxu0
        %595 = vmatprep.mubr.f32.mxu0 0.0
        %596 = vmatmul.mubr.f32.gmra.mrb[0].mxu0 %v396
        %v597 = vpop.f32.mrb[0].mxu0
        %v598 = vadd.f32 0.0, %v597
        %v599 = vpop.f32.mrb[0].mxu0
        %600 = vmatprep.mubr.f32.mxu0 0.0
        %601 = vmatmul.mubr.f32.gmra.mrb[0].mxu0 %v399
        %v602 = vpop.f32.mrb[0].mxu0
        %v603 = vadd.f32 0.0, %v602
        %v604 = vpop.f32.mrb[0].mxu0
        %605 = vmatprep.mubr.f32.mxu0 0.0
        %606 = vmatmul.mubr.f32.gmra.mrb[0].mxu0 %v402
        %v607 = vpop.f32.mrb[0].mxu0
        %v608 = vadd.f32 0.0, %v607
        %v609 = vpop.f32.mrb[0].mxu0
        %610 = vmatprep.mubr.f32.mxu0 0.0
        %611 = vmatmul.mubr.f32.gmra.mrb[0].mxu0 %v405
        %v612 = vpop.f32.mrb[0].mxu0
        %v613 = vadd.f32 0.0, %v612
        %v614 = vpop.f32.mrb[0].mxu0
        %615 = vmatprep.mubr.f32.mxu0 0.0
        %616 = vmatmul.mubr.f32.gmra.mrb[0].mxu0 %v408
        %v617 = vpop.f32.mrb[0].mxu0
        %v618 = vadd.f32 0.0, %v617
        %v619 = vpop.f32.mrb[0].mxu0
        %620 = vmatprep.mubr.f32.mxu0 0.0
        %621 = vmatmul.mubr.f32.gmra.mrb[0].mxu0 %v411
        %v622 = vpop.f32.mrb[0].mxu0
        %v623 = vadd.f32 0.0, %v622
        %v624 = vpop.f32.mrb[0].mxu0
        %625 = vmatprep.mubr.f32.mxu0 0.0
        %626 = vmatmul.mubr.f32.gmra.mrb[0].mxu0 %v414
        %v627 = vpop.f32.mrb[0].mxu0
        %v628 = vadd.f32 0.0, %v627
        %v629 = vpop.f32.mrb[0].mxu0
        %630 = vmatprep.mubr.f32.mxu0 0.0
        %631 = vmatmul.mubr.f32.gmra.mrb[0].mxu0 %v417
        %v632 = vpop.f32.mrb[0].mxu0
        %v633 = vadd.f32 0.0, %v632
        %v634 = vpop.f32.mrb[0].mxu0
        %635 = vmatprep.mubr.f32.mxu0 0.0
        %636 = vmatmul.mubr.f32.gmra.mrb[0].mxu0 %v420
        %v637 = vpop.f32.mrb[0].mxu0
        %v638 = vadd.f32 0.0, %v637
        %v639 = vpop.f32.mrb[0].mxu0
        %640 = vmatprep.mubr.f32.mxu0 0.0
        %641 = vmatmul.mubr.f32.gmra.mrb[0].mxu0 %v423
        %v642 = vpop.f32.mrb[0].mxu0
        %v643 = vadd.f32 0.0, %v642
        %v644 = vpop.f32.mrb[0].mxu0
        %645 = vmatprep.mubr.f32.mxu0 0.0
        %646 = vmatmul.mubr.f32.gmra.mrb[0].mxu0 %v426
        %v647 = vpop.f32.mrb[0].mxu0
        %v648 = vadd.f32 0.0, %v647
        %v649 = vpop.f32.mrb[0].mxu0
        %650 = vmatprep.mubr.f32.mxu0 0.0
        %651 = vmatmul.mubr.f32.gmra.mrb[0].mxu0 %v429
        %v652 = vpop.f32.mrb[0].mxu0
        %v653 = vadd.f32 0.0, %v652
        %v654 = vpop.f32.mrb[0].mxu0
        %655 = vdwg.mxu0
        %v656 = vadd.f32 %v266, %v498
        %v657 = vadd.f32 %v267, %v503
        %v658 = vadd.f32 %v268, %v508
        %v659 = vadd.f32 %v269, %v513
        %v660 = vadd.f32 %v270, %v518
        %v661 = vadd.f32 %v271, %v523
        %v662 = vadd.f32 %v272, %v528
        %v663 = vadd.f32 %v273, %v533
        %v664 = vadd.f32 %v274, %v538
        %v665 = vadd.f32 %v275, %v543
        %v666 = vadd.f32 %v276, %v548
        %v667 = vadd.f32 %v277, %v553
        %v668 = vadd.f32 %v278, %v558
        %v669 = vadd.f32 %v279, %v563
        %v670 = vadd.f32 %v280, %v568
        %v671 = vadd.f32 %v281, %v573
        %v672 = vadd.f32 %v282, %v578
        %v673 = vadd.f32 %v283, %v583
        %v674 = vadd.f32 %v284, %v588
        %v675 = vadd.f32 %v285, %v593
        %v676 = vadd.f32 %v286, %v598
        %v677 = vadd.f32 %v287, %v603
        %v678 = vadd.f32 %v288, %v608
        %v679 = vadd.f32 %v289, %v613
        %v680 = vadd.f32 %v290, %v618
        %v681 = vadd.f32 %v291, %v623
        %v682 = vadd.f32 %v292, %v628
        %v683 = vadd.f32 %v293, %v633
        %v684 = vadd.f32 %v294, %v638
        %v685 = vadd.f32 %v295, %v643
        %v686 = vadd.f32 %v296, %v648
        %v687 = vadd.f32 %v297, %v653
        %688 = vst [vmem:[#allocation2] sm:$0xff] %v656
        %689 = vst [vmem:[#allocation2 + $0x8] sm:$0xff] %v657
        %690 = vst [vmem:[#allocation2 + $0x10] sm:$0xff] %v658
        %691 = vst [vmem:[#allocation2 + $0x18] sm:$0xff] %v659
        %692 = vst [vmem:[#allocation2 + $0x20] sm:$0xff] %v660
        %693 = vst [vmem:[#allocation2 + $0x28] sm:$0xff] %v661
        %694 = vst [vmem:[#allocation2 + $0x30] sm:$0xff] %v662
        %695 = vst [vmem:[#allocation2 + $0x38] sm:$0xff] %v663
        %696 = vst [vmem:[#allocation2 + $0x40] sm:$0xff] %v664
        %697 = vst [vmem:[#allocation2 + $0x48] sm:$0xff] %v665
        %698 = vst [vmem:[#allocation2 + $0x50] sm:$0xff] %v666
        %699 = vst [vmem:[#allocation2 + $0x58] sm:$0xff] %v667
        %700 = vst [vmem:[#allocation2 + $0x60] sm:$0xff] %v668
        %701 = vst [vmem:[#allocation2 + $0x68] sm:$0xff] %v669
        %702 = vst [vmem:[#allocation2 + $0x70] sm:$0xff] %v670
        %703 = vst [vmem:[#allocation2 + $0x78] sm:$0xff] %v671
        %704 = vst [vmem:[#allocation2 + $0x80] sm:$0xff] %v672
        %705 = vst [vmem:[#allocation2 + $0x88] sm:$0xff] %v673
        %706 = vst [vmem:[#allocation2 + $0x90] sm:$0xff] %v674
        %707 = vst [vmem:[#allocation2 + $0x98] sm:$0xff] %v675
        %708 = vst [vmem:[#allocation2 + $0xa0] sm:$0xff] %v676
        %709 = vst [vmem:[#allocation2 + $0xa8] sm:$0xff] %v677
        %710 = vst [vmem:[#allocation2 + $0xb0] sm:$0xff] %v678
        %711 = vst [vmem:[#allocation2 + $0xb8] sm:$0xff] %v679
        %712 = vst [vmem:[#allocation2 + $0xc0] sm:$0xff] %v680
        %713 = vst [vmem:[#allocation2 + $0xc8] sm:$0xff] %v681
        %714 = vst [vmem:[#allocation2 + $0xd0] sm:$0xff] %v682
        %715 = vst [vmem:[#allocation2 + $0xd8] sm:$0xff] %v683
        %716 = vst [vmem:[#allocation2 + $0xe0] sm:$0xff] %v684
        %717 = vst [vmem:[#allocation2 + $0xe8] sm:$0xff] %v685
        %718 = vst [vmem:[#allocation2 + $0xf0] sm:$0xff] %v686
        %719 = vst [vmem:[#allocation2 + $0xf8] sm:$0xff] %v687
        // Predicated region
        $region41: #{bottle2neck_forward.5} parent=31 // pred_check
          %p720 = pneg %p230
        $region42: #{bottle2neck_forward.5} parent=31 // pred_check_branch
          %722 = sbr.rel (%p720) target = $region44
        $region43: #{bottle2neck_forward.5} parent=31 // pred_region
          %v723 = vld [vmem:[#allocation2] sm:$0xff]
          %v724 = vld [vmem:[#allocation2 + $0x8] sm:$0xff]
          %v725 = vld [vmem:[#allocation2 + $0x10] sm:$0xff]
          %v726 = vld [vmem:[#allocation2 + $0x18] sm:$0xff]
          %v727 = vld [vmem:[#allocation2 + $0x20] sm:$0xff]
          %v728 = vld [vmem:[#allocation2 + $0x28] sm:$0xff]
          %v729 = vld [vmem:[#allocation2 + $0x30] sm:$0xff]
          %v730 = vld [vmem:[#allocation2 + $0x38] sm:$0xff]
          %v731 = vld [vmem:[#allocation2 + $0x40] sm:$0xff]
          %v732 = vld [vmem:[#allocation2 + $0x48] sm:$0xff]
          %v733 = vld [vmem:[#allocation2 + $0x50] sm:$0xff]
          %v734 = vld [vmem:[#allocation2 + $0x58] sm:$0xff]
          %v735 = vld [vmem:[#allocation2 + $0x60] sm:$0xff]
          %v736 = vld [vmem:[#allocation2 + $0x68] sm:$0xff]
          %v737 = vld [vmem:[#allocation2 + $0x70] sm:$0xff]
          %v738 = vld [vmem:[#allocation2 + $0x78] sm:$0xff]
          %v739 = vld [vmem:[#allocation2 + $0x80] sm:$0xff]
          %v740 = vld [vmem:[#allocation2 + $0x88] sm:$0xff]
          %v741 = vld [vmem:[#allocation2 + $0x90] sm:$0xff]
          %v742 = vld [vmem:[#allocation2 + $0x98] sm:$0xff]
          %v743 = vld [vmem:[#allocation2 + $0xa0] sm:$0xff]
          %v744 = vld [vmem:[#allocation2 + $0xa8] sm:$0xff]
          %v745 = vld [vmem:[#allocation2 + $0xb0] sm:$0xff]
          %v746 = vld [vmem:[#allocation2 + $0xb8] sm:$0xff]
          %v747 = vld [vmem:[#allocation2 + $0xc0] sm:$0xff]
          %v748 = vld [vmem:[#allocation2 + $0xc8] sm:$0xff]
          %v749 = vld [vmem:[#allocation2 + $0xd0] sm:$0xff]
          %v750 = vld [vmem:[#allocation2 + $0xd8] sm:$0xff]
          %v751 = vld [vmem:[#allocation2 + $0xe0] sm:$0xff]
          %v752 = vld [vmem:[#allocation2 + $0xe8] sm:$0xff]
          %v753 = vld [vmem:[#allocation2 + $0xf0] sm:$0xff]
          %v754 = vld [vmem:[#allocation2 + $0xf8] sm:$0xff]
          %v755 = vld [vmem:[%s2] sm:$0x1]
          %v757 = vlaneseq
          %v758 = vshrl.u32 %v757, 7
          %v759 = vsub.s32 0, %v758
          %v760 = vrot.slane %v755, %v759
          %v762 = vadd.f32 %v723, %v760
          %v763 = vadd.f32 %v724, %v760
          %v764 = vadd.f32 %v725, %v760
          %v765 = vadd.f32 %v726, %v760
          %v766 = vadd.f32 %v727, %v760
          %v767 = vadd.f32 %v728, %v760
          %v768 = vadd.f32 %v729, %v760
          %v769 = vadd.f32 %v730, %v760
          %v770 = vadd.f32 %v731, %v760
          %v771 = vadd.f32 %v732, %v760
          %v772 = vadd.f32 %v733, %v760
          %v773 = vadd.f32 %v734, %v760
          %v774 = vadd.f32 %v735, %v760
          %v775 = vadd.f32 %v736, %v760
          %v776 = vadd.f32 %v737, %v760
          %v777 = vadd.f32 %v738, %v760
          %v778 = vadd.f32 %v739, %v760
          %v779 = vadd.f32 %v740, %v760
          %v780 = vadd.f32 %v741, %v760
          %v781 = vadd.f32 %v742, %v760
          %v782 = vadd.f32 %v743, %v760
          %v783 = vadd.f32 %v744, %v760
          %v784 = vadd.f32 %v745, %v760
          %v785 = vadd.f32 %v746, %v760
          %v786 = vadd.f32 %v747, %v760
          %v787 = vadd.f32 %v748, %v760
          %v788 = vadd.f32 %v749, %v760
          %v789 = vadd.f32 %v750, %v760
          %v790 = vadd.f32 %v751, %v760
          %v791 = vadd.f32 %v752, %v760
          %v792 = vadd.f32 %v753, %v760
          %v793 = vadd.f32 %v754, %v760
          %v794 = vmax.f32 %v762, 0.0
          %v795 = vmax.f32 %v763, 0.0
          %v796 = vmax.f32 %v764, 0.0
          %v797 = vmax.f32 %v765, 0.0
          %v798 = vmax.f32 %v766, 0.0
          %v799 = vmax.f32 %v767, 0.0
          %v800 = vmax.f32 %v768, 0.0
          %v801 = vmax.f32 %v769, 0.0
          %v802 = vmax.f32 %v770, 0.0
          %v803 = vmax.f32 %v771, 0.0
          %v804 = vmax.f32 %v772, 0.0
          %v805 = vmax.f32 %v773, 0.0
          %v806 = vmax.f32 %v774, 0.0
          %v807 = vmax.f32 %v775, 0.0
          %v808 = vmax.f32 %v776, 0.0
          %v809 = vmax.f32 %v777, 0.0
          %v810 = vmax.f32 %v778, 0.0
          %v811 = vmax.f32 %v779, 0.0
          %v812 = vmax.f32 %v780, 0.0
          %v813 = vmax.f32 %v781, 0.0
          %v814 = vmax.f32 %v782, 0.0
          %v815 = vmax.f32 %v783, 0.0
          %v816 = vmax.f32 %v784, 0.0
          %v817 = vmax.f32 %v785, 0.0
          %v818 = vmax.f32 %v786, 0.0
          %v819 = vmax.f32 %v787, 0.0
          %v820 = vmax.f32 %v788, 0.0
          %v821 = vmax.f32 %v789, 0.0
          %v822 = vmax.f32 %v790, 0.0
          %v823 = vmax.f32 %v791, 0.0
          %v824 = vmax.f32 %v792, 0.0
          %v825 = vmax.f32 %v793, 0.0
          %826 = vst [vmem:[%s228] sm:$0xff] %v794
          %827 = vst [vmem:[%s228 + $0x8] sm:$0xff] %v795
          %828 = vst [vmem:[%s228 + $0x10] sm:$0xff] %v796
          %829 = vst [vmem:[%s228 + $0x18] sm:$0xff] %v797
          %830 = vst [vmem:[%s228 + $0x20] sm:$0xff] %v798
          %831 = vst [vmem:[%s228 + $0x28] sm:$0xff] %v799
          %832 = vst [vmem:[%s228 + $0x30] sm:$0xff] %v800
          %833 = vst [vmem:[%s228 + $0x38] sm:$0xff] %v801
          %834 = vst [vmem:[%s228 + $0x40] sm:$0xff] %v802
          %835 = vst [vmem:[%s228 + $0x48] sm:$0xff] %v803
          %836 = vst [vmem:[%s228 + $0x50] sm:$0xff] %v804
          %837 = vst [vmem:[%s228 + $0x58] sm:$0xff] %v805
          %838 = vst [vmem:[%s228 + $0x60] sm:$0xff] %v806
          %839 = vst [vmem:[%s228 + $0x68] sm:$0xff] %v807
          %840 = vst [vmem:[%s228 + $0x70] sm:$0xff] %v808
          %841 = vst [vmem:[%s228 + $0x78] sm:$0xff] %v809
          %842 = vst [vmem:[%s228 + $0x80] sm:$0xff] %v810
          %843 = vst [vmem:[%s228 + $0x88] sm:$0xff] %v811
          %844 = vst [vmem:[%s228 + $0x90] sm:$0xff] %v812
          %845 = vst [vmem:[%s228 + $0x98] sm:$0xff] %v813
          %846 = vst [vmem:[%s228 + $0xa0] sm:$0xff] %v814
          %847 = vst [vmem:[%s228 + $0xa8] sm:$0xff] %v815
          %848 = vst [vmem:[%s228 + $0xb0] sm:$0xff] %v816
          %849 = vst [vmem:[%s228 + $0xb8] sm:$0xff] %v817
          %850 = vst [vmem:[%s228 + $0xc0] sm:$0xff] %v818
          %851 = vst [vmem:[%s228 + $0xc8] sm:$0xff] %v819
          %852 = vst [vmem:[%s228 + $0xd0] sm:$0xff] %v820
          %853 = vst [vmem:[%s228 + $0xd8] sm:$0xff] %v821
          %854 = vst [vmem:[%s228 + $0xe0] sm:$0xff] %v822
          %855 = vst [vmem:[%s228 + $0xe8] sm:$0xff] %v823
          %856 = vst [vmem:[%s228 + $0xf0] sm:$0xff] %v824
          %857 = vst [vmem:[%s228 + $0xf8] sm:$0xff] %v825
        $region44: #{bottle2neck_forward.5} parent=31 // pred_fallthru
          _
        %s858 = smul.u32 32, %s21
        %p859 = scmp.lt.s32.totalorder %s858, 63
        %s860 = scalar_select %p859, %s858, 63
        %s861 = smul.addr %s860, 8
        %s862 = scalar_lea.vmem %s3, %s861
        // Predicated region
        $region45: #{bottle2neck_forward.5} parent=31 // pred_check
          %p863 = pneg %p122
        $region46: #{bottle2neck_forward.5} parent=31 // pred_check_branch
          %865 = sbr.rel (%p863) target = $region48
        $region47: #{bottle2neck_forward.5} parent=31 // pred_region
          %s866 = smul.u32 32, %s21
        $region48: #{bottle2neck_forward.5} parent=31 // pred_fallthru
          _
      $region32: #{bottle2neck_forward.5} parent=5 // pred_fallthru
        _
      %p867 = scmp.le.s32.totalorder 2, %s12
      // Predicated region
      $region49: #{bottle2neck_forward.5} parent=5 // pred_check
        %p868 = pneg %p867
      $region50: #{bottle2neck_forward.5} parent=5 // pred_check_branch
        %870 = sbr.rel (%p868) target = $region52
      $region51: #{bottle2neck_forward.5} parent=5 // pred_region
        %s871 = ssub.s32 %s12, 2
        // Predicated region
        $region53: #{bottle2neck_forward.5} parent=51 // pred_check
          %p872 = pneg %p128
        $region54: #{bottle2neck_forward.5} parent=51 // pred_check_branch
          %874 = sbr.rel (%p872) target = $region56
        $region55: #{bottle2neck_forward.5} parent=51 // pred_region
          %s875 = smul.u32 32, %s23
          %p876 = scmp.lt.s32.totalorder %s875, 63
          %s877 = scalar_select %p876, %s875, 63
          %s878 = smul.addr %s877, 8
          %s879 = scalar_lea.vmem %s3, %s878
        $region56: #{bottle2neck_forward.5} parent=51 // pred_fallthru
          _
      $region52: #{bottle2neck_forward.5} parent=5 // pred_fallthru
        _
    $region6: #{bottle2neck_forward.5} parent=1 // loop_footer
      %s16 = sadd.s32 1, %s12
    $region7: #{bottle2neck_forward.5} parent=1 // loop_footer_branch
      %11 = sbr.rel target = $region3
    $region8: #{bottle2neck_forward.5} parent=1 // loop_exit
      _
    %880 = vsyncpa [#allocation4], 1
    %s881 = scalar_lea.sflag [#allocation4], 1
    %882 = vsyncpa %s881, 1

// kernel: bottle2neck_forward.6
$region0: #{bottle2neck_forward.6}
  #allocation0 [shape = 'u32[]', space=smem, size = 0x4, offset = 0x4, fixed_abs, tag = 'smem constant byte address 0x4 - core index']
  #allocation1 [shape = 'u32[144,128]{1,0:T(1,128)}', space=vmem, size = 0x12000, scoped, tag = 'internal scratch']
  #allocation2 [shape = 'f32[256,128]{1,0:T(8,128)}', space=vmem, size = 0x20000, scoped, tag = 'scratch operand']
  %s0 = inlined_call_operand.vmem [shape: f32[512,27], index: 0, kind: input, shape index: {}]
  %s1 = inlined_call_operand.vmem [shape: f32[27,128], index: 1, kind: input, shape index: {}]
  %s2 = inlined_call_operand.vmem [shape: f32[1,128], index: 2, kind: input, shape index: {}]
  %s3 = inlined_call_operand.vmem [shape: f32[512,128], index: 3, kind: output, shape index: {}]
  %s4 = sld [smem:[#allocation0]]
  $region53: #{bottle2neck_forward.6} parent=0
    _
  %s6 = ssub.s32 1, %s4
  %s7 = scalar_select 0, %s6, %s4
  loop: start=0, step=1, limit=4
  $region2: #{bottle2neck_forward.6} parent=0 // loop_pre_header
    _
  $region3: #{bottle2neck_forward.6} parent=0 // loop_header
    %s9 = sphi 0, %s13
    %p10 = scmp.ge.s32.totalorder %s9, 4
    %s16 = sphi 0, %s28
    %s17 = sphi 0, %s24
    %s18 = sphi 0, %s16
    %s19 = sphi 0, %s17
    %s20 = sphi 0, %s18
    %s21 = sphi 0, %s19
    %s33 = sphi 0, %s35
    %s36 = sphi 0, %s33
    %s37 = sphi 0, %s36
    %s53 = sphi 0, %s37
    %s59 = sphi 0, %s61
    %s62 = sphi 0, %s59
    %s63 = sphi 0, %s62
    %s79 = sphi 0, %s63
    %s83 = sphi 0, %s83
    %s85 = sphi 0, %s83
    %s86 = sphi 0, %s85
    %s100 = sphi 0, %s86
    %s106 = sphi 0, %s108
    %s109 = sphi 0, %s106
    %s110 = sphi 0, %s109
    %s126 = sphi 0, %s110
  $region4: #{bottle2neck_forward.6} parent=0 // loop_header_branch
    %12 = sbr.rel (%p10) target = $region8
  $region5: #{bottle2neck_forward.6} parent=0 // loop_body
    %s14 = ssub.s32 %s9, 1
    %s15 = ssub.s32 %s9, 2
    %s22 = sadd.s32 1, %s17
    %p23 = scmp.ge.s32.totalorder %s22, 1
    %s24 = scalar_select %p23, 0, %s22
    %s25 = sadd.s32 1, %s16
    %s26 = scalar_select %p23, %s25, %s16
    %p27 = scmp.ge.s32.totalorder %s26, 2
    %s28 = scalar_select %p27, 0, %s26
    %s29 = ssub.s32 %s16, %s28
    %s30 = ssub.s32 %s17, %s24
    %s31 = sor.u32 %s29, %s30
    %p32 = scmp.eq.s32.totalorder %s31, 0
    %s34 = sadd.s32 %s33, 1
    %s35 = scalar_select %p32, %s33, %s34
    %p38 = pneg %p32
    %p39 = scmp.eq.s32.totalorder %s9, 1
    %p40 = por %p38, %p39
    %p41 = scmp.ne.s32.totalorder %s33, %s36
    %p42 = scmp.eq.s32.totalorder %s9, 0
    %p43 = por %p41, %p42
    %p44 = scmp.ne.s32.totalorder %s33, %s36
    %p45 = scmp.eq.s32.totalorder %s14, 1
    %p46 = por %p44, %p45
    %p47 = scmp.ne.s32.totalorder %s36, %s37
    %p48 = scmp.eq.s32.totalorder %s14, 0
    %p49 = por %p47, %p48
    %p50 = scmp.ne.s32.totalorder %s36, %s37
    %p51 = scmp.eq.s32.totalorder %s15, 1
    %p52 = por %p50, %p51
    %p54 = scmp.ne.s32.totalorder %s37, %s53
    %p55 = scmp.eq.s32.totalorder %s15, 0
    %p56 = por %p54, %p55
    %s57 = ssub.s32 %s17, %s24
    %p58 = scmp.eq.s32.totalorder %s57, 0
    %s60 = sadd.s32 %s59, 1
    %s61 = scalar_select %p58, %s59, %s60
    %p64 = pneg %p58
    %p65 = scmp.eq.s32.totalorder %s9, 1
    %p66 = por %p64, %p65
    %p67 = scmp.ne.s32.totalorder %s59, %s62
    %p68 = scmp.eq.s32.totalorder %s9, 0
    %p69 = por %p67, %p68
    %p70 = scmp.ne.s32.totalorder %s59, %s62
    %p71 = scmp.eq.s32.totalorder %s14, 1
    %p72 = por %p70, %p71
    %p73 = scmp.ne.s32.totalorder %s62, %s63
    %p74 = scmp.eq.s32.totalorder %s14, 0
    %p75 = por %p73, %p74
    %p76 = scmp.ne.s32.totalorder %s62, %s63
    %p77 = scmp.eq.s32.totalorder %s15, 1
    %p78 = por %p76, %p77
    %p80 = scmp.ne.s32.totalorder %s63, %s79
    %p81 = scmp.eq.s32.totalorder %s15, 0
    %p82 = por %p80, %p81
    %s84 = sadd.s32 %s83, 1
    %p87 = scmp.eq.s32.totalorder %s9, 1
    %p88 = scmp.ne.s32.totalorder %s83, %s85
    %p89 = scmp.eq.s32.totalorder %s9, 0
    %p90 = por %p88, %p89
    %p91 = scmp.ne.s32.totalorder %s83, %s85
    %p92 = scmp.eq.s32.totalorder %s14, 1
    %p93 = por %p91, %p92
    %p94 = scmp.ne.s32.totalorder %s85, %s86
    %p95 = scmp.eq.s32.totalorder %s14, 0
    %p96 = por %p94, %p95
    %p97 = scmp.ne.s32.totalorder %s85, %s86
    %p98 = scmp.eq.s32.totalorder %s15, 1
    %p99 = por %p97, %p98
    %p101 = scmp.ne.s32.totalorder %s86, %s100
    %p102 = scmp.eq.s32.totalorder %s15, 0
    %p103 = por %p101, %p102
    %s104 = ssub.s32 %s16, %s28
    %p105 = scmp.eq.s32.totalorder %s104, 0
    %s107 = sadd.s32 %s106, 1
    %s108 = scalar_select %p105, %s106, %s107
    %p111 = pneg %p105
    %p112 = scmp.eq.s32.totalorder %s9, 1
    %p113 = por %p111, %p112
    %p114 = scmp.ne.s32.totalorder %s106, %s109
    %p115 = scmp.eq.s32.totalorder %s9, 0
    %p116 = por %p114, %p115
    %p117 = scmp.ne.s32.totalorder %s106, %s109
    %p118 = scmp.eq.s32.totalorder %s14, 1
    %p119 = por %p117, %p118
    %p120 = scmp.ne.s32.totalorder %s109, %s110
    %p121 = scmp.eq.s32.totalorder %s14, 0
    %p122 = por %p120, %p121
    %p123 = scmp.ne.s32.totalorder %s109, %s110
    %p124 = scmp.eq.s32.totalorder %s15, 1
    %p125 = por %p123, %p124
    %p127 = scmp.ne.s32.totalorder %s110, %s126
    %p128 = scmp.eq.s32.totalorder %s15, 0
    %p129 = por %p127, %p128
    %p130 = scmp.le.s32.totalorder 1, %s9
    %p131 = scmp.lt.s32.totalorder %s9, 3
    %p132 = pnand %p130, %p131
    %p133 = pneg %p132
    // Predicated region
    $region9: #{bottle2neck_forward.6} parent=5 // pred_check
      _
    $region10: #{bottle2neck_forward.6} parent=5 // pred_check_branch
      %135 = sbr.rel (%p132) target = $region12
    $region11: #{bottle2neck_forward.6} parent=5 // pred_region
      %s136 = ssub.s32 %s9, 1
      // Predicated region
      $region13: #{bottle2neck_forward.6} parent=11 // pred_check
        %p137 = pneg %p75
      $region14: #{bottle2neck_forward.6} parent=11 // pred_check_branch
        %139 = sbr.rel (%p137) target = $region16
      $region15: #{bottle2neck_forward.6} parent=11 // pred_region
        %s140 = smul.u32 4, %s19
        %p141 = scmp.lt.s32.totalorder %s140, 3
        %s142 = scalar_select %p141, %s140, 3
        %s143 = smul.addr %s142, 8
        %s144 = scalar_lea.vmem %s1, %s143
        %s145 = smul.u32 4, %s19
      $region16: #{bottle2neck_forward.6} parent=11 // pred_fallthru
        _
      // Predicated region
      $region17: #{bottle2neck_forward.6} parent=11 // pred_check
        %p146 = pneg %p96
      $region18: #{bottle2neck_forward.6} parent=11 // pred_check_branch
        %148 = sbr.rel (%p146) target = $region20
      $region19: #{bottle2neck_forward.6} parent=11 // pred_region
        _
      $region20: #{bottle2neck_forward.6} parent=11 // pred_fallthru
        _
    $region12: #{bottle2neck_forward.6} parent=5 // pred_fallthru
      _
    %p149 = scmp.lt.s32.totalorder %s9, 2
    // Predicated region
    $region21: #{bottle2neck_forward.6} parent=5 // pred_check
      %p150 = pneg %p149
    $region22: #{bottle2neck_forward.6} parent=5 // pred_check_branch
      %152 = sbr.rel (%p150) target = $region24
    $region23: #{bottle2neck_forward.6} parent=5 // pred_region
      // Predicated region
      $region25: #{bottle2neck_forward.6} parent=23 // pred_check
        %p153 = pneg %p43
      $region26: #{bottle2neck_forward.6} parent=23 // pred_check_branch
        %155 = sbr.rel (%p153) target = $region28
      $region27: #{bottle2neck_forward.6} parent=23 // pred_region
        %s156 = smul.u32 32, %s16
        %p157 = scmp.lt.s32.totalorder %s156, 63
        %s158 = scalar_select %p157, %s156, 63
        %p159 = scmp.lt.s32.totalorder %s17, 0
        %s160 = scalar_select %p159, %s17, 0
        %s161 = sadd.s32 %s160, %s158
        %s162 = smul.addr %s161, 8
        %s163 = scalar_lea.vmem %s0, %s162
        %s164 = smul.u32 32, %s16
      $region28: #{bottle2neck_forward.6} parent=23 // pred_fallthru
        _
    $region24: #{bottle2neck_forward.6} parent=5 // pred_fallthru
      _
    %p165 = scmp.le.s32.totalorder 1, %s9
    %p166 = scmp.lt.s32.totalorder %s9, 3
    %p167 = pnand %p165, %p166
    %p168 = pneg %p167
    // Predicated region
    $region29: #{bottle2neck_forward.6} parent=5 // pred_check
      _
    $region30: #{bottle2neck_forward.6} parent=5 // pred_check_branch
      %170 = sbr.rel (%p167) target = $region32
    $region31: #{bottle2neck_forward.6} parent=5 // pred_region
      %s171 = ssub.s32 %s9, 1
      %s172 = smul.u32 32, %s18
      %p173 = scmp.lt.s32.totalorder %s172, 63
      %s174 = scalar_select %p173, %s172, 63
      %p175 = scmp.lt.s32.totalorder %s19, 0
      %s176 = scalar_select %p175, %s19, 0
      %s177 = sadd.s32 %s176, %s174
      %s178 = smul.addr %s177, 8
      %s179 = scalar_lea.vmem %s0, %s178
      %p180 = pneg %p49
      %p181 = pneg %p46
      %s182 = smul.u32 4, %s19
      %p183 = scmp.lt.s32.totalorder %s182, 3
      %s184 = scalar_select %p183, %s182, 3
      %s185 = smul.addr %s184, 8
      %s186 = scalar_lea.vmem %s1, %s185
      %p187 = pneg %p75
      %p188 = pneg %p72
      %p189 = pneg %p96
      %p190 = pneg %p93
      %p191 = pneg %p122
      %p192 = pneg %p119
      %s193 = smul.u32 32, %s18
      %p194 = scmp.lt.s32.totalorder %s193, 63
      %s195 = scalar_select %p194, %s193, 63
      %s196 = smul.addr %s195, 8
      %s197 = scalar_lea.vmem %s3, %s196
      %s198 = smul.u32 32, %s18
      %p199 = scmp.lt.s32.totalorder %s198, 63
      %s200 = scalar_select %p199, %s198, 63
      %p201 = scmp.lt.s32.totalorder %s19, 0
      %s202 = scalar_select %p201, %s19, 0
      %s203 = sadd.s32 %s202, %s200
      %s204 = smul.addr %s203, 8
      %s205 = scalar_lea.vmem %s0, %s204
      %s206 = smul.u32 32, %s18
      %s207 = smul.u32 4, %s19
      %p208 = scmp.lt.s32.totalorder %s207, 3
      %s209 = scalar_select %p208, %s207, 3
      %s210 = smul.addr %s209, 8
      %s211 = scalar_lea.vmem %s1, %s210
      %s212 = smul.u32 4, %s19
      %s213 = smul.u32 32, %s18
      %p214 = scmp.lt.s32.totalorder %s213, 63
      %s215 = scalar_select %p214, %s213, 63
      %s216 = smul.addr %s215, 8
      %s217 = scalar_lea.vmem %s3, %s216
      %s218 = smul.u32 32, %s18
      %p219 = scmp.eq.s32.totalorder %s19, 0
      // Predicated region
      $region33: #{bottle2neck_forward.6} parent=31 // pred_check
        %p220 = pneg %p219
      $region34: #{bottle2neck_forward.6} parent=31 // pred_check_branch
        %222 = sbr.rel (%p220) target = $region36
      $region35: #{bottle2neck_forward.6} parent=31 // pred_region
        %223 = vst [vmem:[#allocation2] sm:$0xff] 0.0
        %224 = vst [vmem:[#allocation2 + $0x8] sm:$0xff] 0.0
        %225 = vst [vmem:[#allocation2 + $0x10] sm:$0xff] 0.0
        %226 = vst [vmem:[#allocation2 + $0x18] sm:$0xff] 0.0
        %227 = vst [vmem:[#allocation2 + $0x20] sm:$0xff] 0.0
        %228 = vst [vmem:[#allocation2 + $0x28] sm:$0xff] 0.0
        %229 = vst [vmem:[#allocation2 + $0x30] sm:$0xff] 0.0
        %230 = vst [vmem:[#allocation2 + $0x38] sm:$0xff] 0.0
        %231 = vst [vmem:[#allocation2 + $0x40] sm:$0xff] 0.0
        %232 = vst [vmem:[#allocation2 + $0x48] sm:$0xff] 0.0
        %233 = vst [vmem:[#allocation2 + $0x50] sm:$0xff] 0.0
        %234 = vst [vmem:[#allocation2 + $0x58] sm:$0xff] 0.0
        %235 = vst [vmem:[#allocation2 + $0x60] sm:$0xff] 0.0
        %236 = vst [vmem:[#allocation2 + $0x68] sm:$0xff] 0.0
        %237 = vst [vmem:[#allocation2 + $0x70] sm:$0xff] 0.0
        %238 = vst [vmem:[#allocation2 + $0x78] sm:$0xff] 0.0
        %239 = vst [vmem:[#allocation2 + $0x80] sm:$0xff] 0.0
        %240 = vst [vmem:[#allocation2 + $0x88] sm:$0xff] 0.0
        %241 = vst [vmem:[#allocation2 + $0x90] sm:$0xff] 0.0
        %242 = vst [vmem:[#allocation2 + $0x98] sm:$0xff] 0.0
        %243 = vst [vmem:[#allocation2 + $0xa0] sm:$0xff] 0.0
        %244 = vst [vmem:[#allocation2 + $0xa8] sm:$0xff] 0.0
        %245 = vst [vmem:[#allocation2 + $0xb0] sm:$0xff] 0.0
        %246 = vst [vmem:[#allocation2 + $0xb8] sm:$0xff] 0.0
        %247 = vst [vmem:[#allocation2 + $0xc0] sm:$0xff] 0.0
        %248 = vst [vmem:[#allocation2 + $0xc8] sm:$0xff] 0.0
        %249 = vst [vmem:[#allocation2 + $0xd0] sm:$0xff] 0.0
        %250 = vst [vmem:[#allocation2 + $0xd8] sm:$0xff] 0.0
        %251 = vst [vmem:[#allocation2 + $0xe0] sm:$0xff] 0.0
        %252 = vst [vmem:[#allocation2 + $0xe8] sm:$0xff] 0.0
        %253 = vst [vmem:[#allocation2 + $0xf0] sm:$0xff] 0.0
        %254 = vst [vmem:[#allocation2 + $0xf8] sm:$0xff] 0.0
      $region36: #{bottle2neck_forward.6} parent=31 // pred_fallthru
        _
      %v255 = vld [vmem:[#allocation2] sm:$0xff]
      %v256 = vld [vmem:[#allocation2 + $0x8] sm:$0xff]
      %v257 = vld [vmem:[#allocation2 + $0x10] sm:$0xff]
      %v258 = vld [vmem:[#allocation2 + $0x18] sm:$0xff]
      %v259 = vld [vmem:[#allocation2 + $0x20] sm:$0xff]
      %v260 = vld [vmem:[#allocation2 + $0x28] sm:$0xff]
      %v261 = vld [vmem:[#allocation2 + $0x30] sm:$0xff]
      %v262 = vld [vmem:[#allocation2 + $0x38] sm:$0xff]
      %v263 = vld [vmem:[#allocation2 + $0x40] sm:$0xff]
      %v264 = vld [vmem:[#allocation2 + $0x48] sm:$0xff]
      %v265 = vld [vmem:[#allocation2 + $0x50] sm:$0xff]
      %v266 = vld [vmem:[#allocation2 + $0x58] sm:$0xff]
      %v267 = vld [vmem:[#allocation2 + $0x60] sm:$0xff]
      %v268 = vld [vmem:[#allocation2 + $0x68] sm:$0xff]
      %v269 = vld [vmem:[#allocation2 + $0x70] sm:$0xff]
      %v270 = vld [vmem:[#allocation2 + $0x78] sm:$0xff]
      %v271 = vld [vmem:[#allocation2 + $0x80] sm:$0xff]
      %v272 = vld [vmem:[#allocation2 + $0x88] sm:$0xff]
      %v273 = vld [vmem:[#allocation2 + $0x90] sm:$0xff]
      %v274 = vld [vmem:[#allocation2 + $0x98] sm:$0xff]
      %v275 = vld [vmem:[#allocation2 + $0xa0] sm:$0xff]
      %v276 = vld [vmem:[#allocation2 + $0xa8] sm:$0xff]
      %v277 = vld [vmem:[#allocation2 + $0xb0] sm:$0xff]
      %v278 = vld [vmem:[#allocation2 + $0xb8] sm:$0xff]
      %v279 = vld [vmem:[#allocation2 + $0xc0] sm:$0xff]
      %v280 = vld [vmem:[#allocation2 + $0xc8] sm:$0xff]
      %v281 = vld [vmem:[#allocation2 + $0xd0] sm:$0xff]
      %v282 = vld [vmem:[#allocation2 + $0xd8] sm:$0xff]
      %v283 = vld [vmem:[#allocation2 + $0xe0] sm:$0xff]
      %v284 = vld [vmem:[#allocation2 + $0xe8] sm:$0xff]
      %v285 = vld [vmem:[#allocation2 + $0xf0] sm:$0xff]
      %v286 = vld [vmem:[#allocation2 + $0xf8] sm:$0xff]
      %v287 = vld [vmem:[%s205] sm:$0xff]
      %v288 = vld [vmem:[%s205 + $0x8] sm:$0xff]
      %v289 = vld [vmem:[%s205 + $0x10] sm:$0xff]
      %v290 = vld [vmem:[%s205 + $0x18] sm:$0xff]
      %v291 = vld [vmem:[%s205 + $0x20] sm:$0xff]
      %v292 = vld [vmem:[%s205 + $0x28] sm:$0xff]
      %v293 = vld [vmem:[%s205 + $0x30] sm:$0xff]
      %v294 = vld [vmem:[%s205 + $0x38] sm:$0xff]
      %v295 = vld [vmem:[%s205 + $0x40] sm:$0xff]
      %v296 = vld [vmem:[%s205 + $0x48] sm:$0xff]
      %v297 = vld [vmem:[%s205 + $0x50] sm:$0xff]
      %v298 = vld [vmem:[%s205 + $0x58] sm:$0xff]
      %v299 = vld [vmem:[%s205 + $0x60] sm:$0xff]
      %v300 = vld [vmem:[%s205 + $0x68] sm:$0xff]
      %v301 = vld [vmem:[%s205 + $0x70] sm:$0xff]
      %v302 = vld [vmem:[%s205 + $0x78] sm:$0xff]
      %v303 = vld [vmem:[%s205 + $0x80] sm:$0xff]
      %v304 = vld [vmem:[%s205 + $0x88] sm:$0xff]
      %v305 = vld [vmem:[%s205 + $0x90] sm:$0xff]
      %v306 = vld [vmem:[%s205 + $0x98] sm:$0xff]
      %v307 = vld [vmem:[%s205 + $0xa0] sm:$0xff]
      %v308 = vld [vmem:[%s205 + $0xa8] sm:$0xff]
      %v309 = vld [vmem:[%s205 + $0xb0] sm:$0xff]
      %v310 = vld [vmem:[%s205 + $0xb8] sm:$0xff]
      %v311 = vld [vmem:[%s205 + $0xc0] sm:$0xff]
      %v312 = vld [vmem:[%s205 + $0xc8] sm:$0xff]
      %v313 = vld [vmem:[%s205 + $0xd0] sm:$0xff]
      %v314 = vld [vmem:[%s205 + $0xd8] sm:$0xff]
      %v315 = vld [vmem:[%s205 + $0xe0] sm:$0xff]
      %v316 = vld [vmem:[%s205 + $0xe8] sm:$0xff]
      %v317 = vld [vmem:[%s205 + $0xf0] sm:$0xff]
      %v318 = vld [vmem:[%s205 + $0xf8] sm:$0xff]
      %v319 = vld [vmem:[%s211] sm:$0xff]
      %v320 = vld [vmem:[%s211 + $0x8] sm:$0xff]
      %v321 = vld [vmem:[%s211 + $0x10] sm:$0xff]
      %v322 = vld [vmem:[%s211 + $0x18] sm:$0x7]
      %vm323 = vcmask 220160
      %v325 = vsel %vm323, %v287, 0
      %v328 = vsel %vm323, %v288, 0
      %v331 = vsel %vm323, %v289, 0
      %v334 = vsel %vm323, %v290, 0
      %v337 = vsel %vm323, %v291, 0
      %v340 = vsel %vm323, %v292, 0
      %v343 = vsel %vm323, %v293, 0
      %v346 = vsel %vm323, %v294, 0
      %v349 = vsel %vm323, %v295, 0
      %v352 = vsel %vm323, %v296, 0
      %v355 = vsel %vm323, %v297, 0
      %v358 = vsel %vm323, %v298, 0
      %v361 = vsel %vm323, %v299, 0
      %v364 = vsel %vm323, %v300, 0
      %v367 = vsel %vm323, %v301, 0
      %v370 = vsel %vm323, %v302, 0
      %v373 = vsel %vm323, %v303, 0
      %v376 = vsel %vm323, %v304, 0
      %v379 = vsel %vm323, %v305, 0
      %v382 = vsel %vm323, %v306, 0
      %v385 = vsel %vm323, %v307, 0
      %v388 = vsel %vm323, %v308, 0
      %v391 = vsel %vm323, %v309, 0
      %v394 = vsel %vm323, %v310, 0
      %v397 = vsel %vm323, %v311, 0
      %v400 = vsel %vm323, %v312, 0
      %v403 = vsel %vm323, %v313, 0
      %v406 = vsel %vm323, %v314, 0
      %v409 = vsel %vm323, %v315, 0
      %v412 = vsel %vm323, %v316, 0
      %v415 = vsel %vm323, %v317, 0
      %v418 = vsel %vm323, %v318, 0
      %vm420 = vcmask 1042432
      %v422 = vsel %vm420, %v322, 0
      %424 = vmatprep.subr.mxu0 0.0
      %425 = vmatpush1.msra.mxu0 %v319
      %426 = vmatprep.subr.mxu0 0.0
      %427 = vmatpush1.msra.mxu0 %v320
      %428 = vmatprep.subr.mxu0 0.0
      %429 = vmatpush1.msra.mxu0 %v321
      %430 = vmatprep.subr.mxu0 0.0
      %431 = vmatpush1.msra.mxu0 %v422
      %432 = vmatprep.subr.mxu0 0.0
      %433 = vmatpush1.msra.mxu0 0.0
      %434 = vmatprep.subr.mxu0 0.0
      %435 = vmatpush1.msra.mxu0 0.0
      %436 = vmatprep.subr.mxu0 0.0
      %437 = vmatpush1.msra.mxu0 0.0
      %438 = vmatprep.subr.mxu0 0.0
      %439 = vmatpush1.msra.mxu0 0.0
      %440 = vmatprep.subr.mxu0 0.0
      %441 = vmatpush1.msra.mxu0 0.0
      %442 = vmatprep.subr.mxu0 0.0
      %443 = vmatpush1.msra.mxu0 0.0
      %444 = vmatprep.subr.mxu0 0.0
      %445 = vmatpush1.msra.mxu0 0.0
      %446 = vmatprep.subr.mxu0 0.0
      %447 = vmatpush1.msra.mxu0 0.0
      %448 = vmatprep.subr.mxu0 0.0
      %449 = vmatpush1.msra.mxu0 0.0
      %450 = vmatprep.subr.mxu0 0.0
      %451 = vmatpush1.msra.mxu0 0.0
      %452 = vmatprep.subr.mxu0 0.0
      %453 = vmatpush1.msra.mxu0 0.0
      %454 = vmatprep.subr.mxu0 0.0
      %455 = vmatpush1.msra.mxu0 0.0
      %456 = vmatprep.subr.mxu0 0.0
      %457 = vmatpush1.msra.mxu0 0.0
      %458 = vmatprep.subr.mxu0 0.0
      %459 = vmatpush1.msra.mxu0 0.0
      %460 = vmatprep.subr.mxu0 0.0
      %461 = vmatpush1.msra.mxu0 0.0
      %462 = vmatprep.subr.mxu0 0.0
      %463 = vmatpush1.msra.mxu0 0.0
      %464 = vmatprep.subr.mxu0 0.0
      %465 = vmatpush1.msra.mxu0 0.0
      %466 = vmatprep.subr.mxu0 0.0
      %467 = vmatpush1.msra.mxu0 0.0
      %468 = vmatprep.subr.mxu0 0.0
      %469 = vmatpush1.msra.mxu0 0.0
      %470 = vmatprep.subr.mxu0 0.0
      %471 = vmatpush1.msra.mxu0 0.0
      %472 = vmatprep.subr.mxu0 0.0
      %473 = vmatpush1.msra.mxu0 0.0
      %474 = vmatprep.subr.mxu0 0.0
      %475 = vmatpush1.msra.mxu0 0.0
      %476 = vmatprep.subr.mxu0 0.0
      %477 = vmatpush1.msra.mxu0 0.0
      %478 = vmatprep.subr.mxu0 0.0
      %479 = vmatpush1.msra.mxu0 0.0
      %480 = vmatprep.subr.mxu0 0.0
      %481 = vmatpush1.msra.mxu0 0.0
      %482 = vmatprep.subr.mxu0 0.0
      %483 = vmatpush1.msra.mxu0 0.0
      %484 = vmatprep.subr.mxu0 0.0
      %485 = vmatpush1.msra.mxu0 0.0
      %486 = vmatprep.subr.mxu0 0.0
      %487 = vmatpush1.msra.mxu0 0.0
      %488 = vmatprep.mubr.f32.mxu0 0.0
      %489 = vmatmul.mubr.f32.gmra.mrb[0].mxu0 %v325
      %v490 = vpop.f32.mrb[0].mxu0
      %v491 = vadd.f32 0.0, %v490
      %v492 = vpop.f32.mrb[0].mxu0
      %493 = vmatprep.mubr.f32.mxu0 0.0
      %494 = vmatmul.mubr.f32.gmra.mrb[0].mxu0 %v328
      %v495 = vpop.f32.mrb[0].mxu0
      %v496 = vadd.f32 0.0, %v495
      %v497 = vpop.f32.mrb[0].mxu0
      %498 = vmatprep.mubr.f32.mxu0 0.0
      %499 = vmatmul.mubr.f32.gmra.mrb[0].mxu0 %v331
      %v500 = vpop.f32.mrb[0].mxu0
      %v501 = vadd.f32 0.0, %v500
      %v502 = vpop.f32.mrb[0].mxu0
      %503 = vmatprep.mubr.f32.mxu0 0.0
      %504 = vmatmul.mubr.f32.gmra.mrb[0].mxu0 %v334
      %v505 = vpop.f32.mrb[0].mxu0
      %v506 = vadd.f32 0.0, %v505
      %v507 = vpop.f32.mrb[0].mxu0
      %508 = vmatprep.mubr.f32.mxu0 0.0
      %509 = vmatmul.mubr.f32.gmra.mrb[0].mxu0 %v337
      %v510 = vpop.f32.mrb[0].mxu0
      %v511 = vadd.f32 0.0, %v510
      %v512 = vpop.f32.mrb[0].mxu0
      %513 = vmatprep.mubr.f32.mxu0 0.0
      %514 = vmatmul.mubr.f32.gmra.mrb[0].mxu0 %v340
      %v515 = vpop.f32.mrb[0].mxu0
      %v516 = vadd.f32 0.0, %v515
      %v517 = vpop.f32.mrb[0].mxu0
      %518 = vmatprep.mubr.f32.mxu0 0.0
      %519 = vmatmul.mubr.f32.gmra.mrb[0].mxu0 %v343
      %v520 = vpop.f32.mrb[0].mxu0
      %v521 = vadd.f32 0.0, %v520
      %v522 = vpop.f32.mrb[0].mxu0
      %523 = vmatprep.mubr.f32.mxu0 0.0
      %524 = vmatmul.mubr.f32.gmra.mrb[0].mxu0 %v346
      %v525 = vpop.f32.mrb[0].mxu0
      %v526 = vadd.f32 0.0, %v525
      %v527 = vpop.f32.mrb[0].mxu0
      %528 = vmatprep.mubr.f32.mxu0 0.0
      %529 = vmatmul.mubr.f32.gmra.mrb[0].mxu0 %v349
      %v530 = vpop.f32.mrb[0].mxu0
      %v531 = vadd.f32 0.0, %v530
      %v532 = vpop.f32.mrb[0].mxu0
      %533 = vmatprep.mubr.f32.mxu0 0.0
      %534 = vmatmul.mubr.f32.gmra.mrb[0].mxu0 %v352
      %v535 = vpop.f32.mrb[0].mxu0
      %v536 = vadd.f32 0.0, %v535
      %v537 = vpop.f32.mrb[0].mxu0
      %538 = vmatprep.mubr.f32.mxu0 0.0
      %539 = vmatmul.mubr.f32.gmra.mrb[0].mxu0 %v355
      %v540 = vpop.f32.mrb[0].mxu0
      %v541 = vadd.f32 0.0, %v540
      %v542 = vpop.f32.mrb[0].mxu0
      %543 = vmatprep.mubr.f32.mxu0 0.0
      %544 = vmatmul.mubr.f32.gmra.mrb[0].mxu0 %v358
      %v545 = vpop.f32.mrb[0].mxu0
      %v546 = vadd.f32 0.0, %v545
      %v547 = vpop.f32.mrb[0].mxu0
      %548 = vmatprep.mubr.f32.mxu0 0.0
      %549 = vmatmul.mubr.f32.gmra.mrb[0].mxu0 %v361
      %v550 = vpop.f32.mrb[0].mxu0
      %v551 = vadd.f32 0.0, %v550
      %v552 = vpop.f32.mrb[0].mxu0
      %553 = vmatprep.mubr.f32.mxu0 0.0
      %554 = vmatmul.mubr.f32.gmra.mrb[0].mxu0 %v364
      %v555 = vpop.f32.mrb[0].mxu0
      %v556 = vadd.f32 0.0, %v555
      %v557 = vpop.f32.mrb[0].mxu0
      %558 = vmatprep.mubr.f32.mxu0 0.0
      %559 = vmatmul.mubr.f32.gmra.mrb[0].mxu0 %v367
      %v560 = vpop.f32.mrb[0].mxu0
      %v561 = vadd.f32 0.0, %v560
      %v562 = vpop.f32.mrb[0].mxu0
      %563 = vmatprep.mubr.f32.mxu0 0.0
      %564 = vmatmul.mubr.f32.gmra.mrb[0].mxu0 %v370
      %v565 = vpop.f32.mrb[0].mxu0
      %v566 = vadd.f32 0.0, %v565
      %v567 = vpop.f32.mrb[0].mxu0
      %568 = vmatprep.mubr.f32.mxu0 0.0
      %569 = vmatmul.mubr.f32.gmra.mrb[0].mxu0 %v373
      %v570 = vpop.f32.mrb[0].mxu0
      %v571 = vadd.f32 0.0, %v570
      %v572 = vpop.f32.mrb[0].mxu0
      %573 = vmatprep.mubr.f32.mxu0 0.0
      %574 = vmatmul.mubr.f32.gmra.mrb[0].mxu0 %v376
      %v575 = vpop.f32.mrb[0].mxu0
      %v576 = vadd.f32 0.0, %v575
      %v577 = vpop.f32.mrb[0].mxu0
      %578 = vmatprep.mubr.f32.mxu0 0.0
      %579 = vmatmul.mubr.f32.gmra.mrb[0].mxu0 %v379
      %v580 = vpop.f32.mrb[0].mxu0
      %v581 = vadd.f32 0.0, %v580
      %v582 = vpop.f32.mrb[0].mxu0
      %583 = vmatprep.mubr.f32.mxu0 0.0
      %584 = vmatmul.mubr.f32.gmra.mrb[0].mxu0 %v382
      %v585 = vpop.f32.mrb[0].mxu0
      %v586 = vadd.f32 0.0, %v585
      %v587 = vpop.f32.mrb[0].mxu0
      %588 = vmatprep.mubr.f32.mxu0 0.0
      %589 = vmatmul.mubr.f32.gmra.mrb[0].mxu0 %v385
      %v590 = vpop.f32.mrb[0].mxu0
      %v591 = vadd.f32 0.0, %v590
      %v592 = vpop.f32.mrb[0].mxu0
      %593 = vmatprep.mubr.f32.mxu0 0.0
      %594 = vmatmul.mubr.f32.gmra.mrb[0].mxu0 %v388
      %v595 = vpop.f32.mrb[0].mxu0
      %v596 = vadd.f32 0.0, %v595
      %v597 = vpop.f32.mrb[0].mxu0
      %598 = vmatprep.mubr.f32.mxu0 0.0
      %599 = vmatmul.mubr.f32.gmra.mrb[0].mxu0 %v391
      %v600 = vpop.f32.mrb[0].mxu0
      %v601 = vadd.f32 0.0, %v600
      %v602 = vpop.f32.mrb[0].mxu0
      %603 = vmatprep.mubr.f32.mxu0 0.0
      %604 = vmatmul.mubr.f32.gmra.mrb[0].mxu0 %v394
      %v605 = vpop.f32.mrb[0].mxu0
      %v606 = vadd.f32 0.0, %v605
      %v607 = vpop.f32.mrb[0].mxu0
      %608 = vmatprep.mubr.f32.mxu0 0.0
      %609 = vmatmul.mubr.f32.gmra.mrb[0].mxu0 %v397
      %v610 = vpop.f32.mrb[0].mxu0
      %v611 = vadd.f32 0.0, %v610
      %v612 = vpop.f32.mrb[0].mxu0
      %613 = vmatprep.mubr.f32.mxu0 0.0
      %614 = vmatmul.mubr.f32.gmra.mrb[0].mxu0 %v400
      %v615 = vpop.f32.mrb[0].mxu0
      %v616 = vadd.f32 0.0, %v615
      %v617 = vpop.f32.mrb[0].mxu0
      %618 = vmatprep.mubr.f32.mxu0 0.0
      %619 = vmatmul.mubr.f32.gmra.mrb[0].mxu0 %v403
      %v620 = vpop.f32.mrb[0].mxu0
      %v621 = vadd.f32 0.0, %v620
      %v622 = vpop.f32.mrb[0].mxu0
      %623 = vmatprep.mubr.f32.mxu0 0.0
      %624 = vmatmul.mubr.f32.gmra.mrb[0].mxu0 %v406
      %v625 = vpop.f32.mrb[0].mxu0
      %v626 = vadd.f32 0.0, %v625
      %v627 = vpop.f32.mrb[0].mxu0
      %628 = vmatprep.mubr.f32.mxu0 0.0
      %629 = vmatmul.mubr.f32.gmra.mrb[0].mxu0 %v409
      %v630 = vpop.f32.mrb[0].mxu0
      %v631 = vadd.f32 0.0, %v630
      %v632 = vpop.f32.mrb[0].mxu0
      %633 = vmatprep.mubr.f32.mxu0 0.0
      %634 = vmatmul.mubr.f32.gmra.mrb[0].mxu0 %v412
      %v635 = vpop.f32.mrb[0].mxu0
      %v636 = vadd.f32 0.0, %v635
      %v637 = vpop.f32.mrb[0].mxu0
      %638 = vmatprep.mubr.f32.mxu0 0.0
      %639 = vmatmul.mubr.f32.gmra.mrb[0].mxu0 %v415
      %v640 = vpop.f32.mrb[0].mxu0
      %v641 = vadd.f32 0.0, %v640
      %v642 = vpop.f32.mrb[0].mxu0
      %643 = vmatprep.mubr.f32.mxu0 0.0
      %644 = vmatmul.mubr.f32.gmra.mrb[0].mxu0 %v418
      %v645 = vpop.f32.mrb[0].mxu0
      %v646 = vadd.f32 0.0, %v645
      %v647 = vpop.f32.mrb[0].mxu0
      %648 = vdwg.mxu0
      %v649 = vadd.f32 %v255, %v491
      %v650 = vadd.f32 %v256, %v496
      %v651 = vadd.f32 %v257, %v501
      %v652 = vadd.f32 %v258, %v506
      %v653 = vadd.f32 %v259, %v511
      %v654 = vadd.f32 %v260, %v516
      %v655 = vadd.f32 %v261, %v521
      %v656 = vadd.f32 %v262, %v526
      %v657 = vadd.f32 %v263, %v531
      %v658 = vadd.f32 %v264, %v536
      %v659 = vadd.f32 %v265, %v541
      %v660 = vadd.f32 %v266, %v546
      %v661 = vadd.f32 %v267, %v551
      %v662 = vadd.f32 %v268, %v556
      %v663 = vadd.f32 %v269, %v561
      %v664 = vadd.f32 %v270, %v566
      %v665 = vadd.f32 %v271, %v571
      %v666 = vadd.f32 %v272, %v576
      %v667 = vadd.f32 %v273, %v581
      %v668 = vadd.f32 %v274, %v586
      %v669 = vadd.f32 %v275, %v591
      %v670 = vadd.f32 %v276, %v596
      %v671 = vadd.f32 %v277, %v601
      %v672 = vadd.f32 %v278, %v606
      %v673 = vadd.f32 %v279, %v611
      %v674 = vadd.f32 %v280, %v616
      %v675 = vadd.f32 %v281, %v621
      %v676 = vadd.f32 %v282, %v626
      %v677 = vadd.f32 %v283, %v631
      %v678 = vadd.f32 %v284, %v636
      %v679 = vadd.f32 %v285, %v641
      %v680 = vadd.f32 %v286, %v646
      %681 = vst [vmem:[#allocation2] sm:$0xff] %v649
      %682 = vst [vmem:[#allocation2 + $0x8] sm:$0xff] %v650
      %683 = vst [vmem:[#allocation2 + $0x10] sm:$0xff] %v651
      %684 = vst [vmem:[#allocation2 + $0x18] sm:$0xff] %v652
      %685 = vst [vmem:[#allocation2 + $0x20] sm:$0xff] %v653
      %686 = vst [vmem:[#allocation2 + $0x28] sm:$0xff] %v654
      %687 = vst [vmem:[#allocation2 + $0x30] sm:$0xff] %v655
      %688 = vst [vmem:[#allocation2 + $0x38] sm:$0xff] %v656
      %689 = vst [vmem:[#allocation2 + $0x40] sm:$0xff] %v657
      %690 = vst [vmem:[#allocation2 + $0x48] sm:$0xff] %v658
      %691 = vst [vmem:[#allocation2 + $0x50] sm:$0xff] %v659
      %692 = vst [vmem:[#allocation2 + $0x58] sm:$0xff] %v660
      %693 = vst [vmem:[#allocation2 + $0x60] sm:$0xff] %v661
      %694 = vst [vmem:[#allocation2 + $0x68] sm:$0xff] %v662
      %695 = vst [vmem:[#allocation2 + $0x70] sm:$0xff] %v663
      %696 = vst [vmem:[#allocation2 + $0x78] sm:$0xff] %v664
      %697 = vst [vmem:[#allocation2 + $0x80] sm:$0xff] %v665
      %698 = vst [vmem:[#allocation2 + $0x88] sm:$0xff] %v666
      %699 = vst [vmem:[#allocation2 + $0x90] sm:$0xff] %v667
      %700 = vst [vmem:[#allocation2 + $0x98] sm:$0xff] %v668
      %701 = vst [vmem:[#allocation2 + $0xa0] sm:$0xff] %v669
      %702 = vst [vmem:[#allocation2 + $0xa8] sm:$0xff] %v670
      %703 = vst [vmem:[#allocation2 + $0xb0] sm:$0xff] %v671
      %704 = vst [vmem:[#allocation2 + $0xb8] sm:$0xff] %v672
      %705 = vst [vmem:[#allocation2 + $0xc0] sm:$0xff] %v673
      %706 = vst [vmem:[#allocation2 + $0xc8] sm:$0xff] %v674
      %707 = vst [vmem:[#allocation2 + $0xd0] sm:$0xff] %v675
      %708 = vst [vmem:[#allocation2 + $0xd8] sm:$0xff] %v676
      %709 = vst [vmem:[#allocation2 + $0xe0] sm:$0xff] %v677
      %710 = vst [vmem:[#allocation2 + $0xe8] sm:$0xff] %v678
      %711 = vst [vmem:[#allocation2 + $0xf0] sm:$0xff] %v679
      %712 = vst [vmem:[#allocation2 + $0xf8] sm:$0xff] %v680
      // Predicated region
      $region37: #{bottle2neck_forward.6} parent=31 // pred_check
        %p713 = pneg %p219
      $region38: #{bottle2neck_forward.6} parent=31 // pred_check_branch
        %715 = sbr.rel (%p713) target = $region40
      $region39: #{bottle2neck_forward.6} parent=31 // pred_region
        %v716 = vld [vmem:[#allocation2] sm:$0xff]
        %v717 = vld [vmem:[#allocation2 + $0x8] sm:$0xff]
        %v718 = vld [vmem:[#allocation2 + $0x10] sm:$0xff]
        %v719 = vld [vmem:[#allocation2 + $0x18] sm:$0xff]
        %v720 = vld [vmem:[#allocation2 + $0x20] sm:$0xff]
        %v721 = vld [vmem:[#allocation2 + $0x28] sm:$0xff]
        %v722 = vld [vmem:[#allocation2 + $0x30] sm:$0xff]
        %v723 = vld [vmem:[#allocation2 + $0x38] sm:$0xff]
        %v724 = vld [vmem:[#allocation2 + $0x40] sm:$0xff]
        %v725 = vld [vmem:[#allocation2 + $0x48] sm:$0xff]
        %v726 = vld [vmem:[#allocation2 + $0x50] sm:$0xff]
        %v727 = vld [vmem:[#allocation2 + $0x58] sm:$0xff]
        %v728 = vld [vmem:[#allocation2 + $0x60] sm:$0xff]
        %v729 = vld [vmem:[#allocation2 + $0x68] sm:$0xff]
        %v730 = vld [vmem:[#allocation2 + $0x70] sm:$0xff]
        %v731 = vld [vmem:[#allocation2 + $0x78] sm:$0xff]
        %v732 = vld [vmem:[#allocation2 + $0x80] sm:$0xff]
        %v733 = vld [vmem:[#allocation2 + $0x88] sm:$0xff]
        %v734 = vld [vmem:[#allocation2 + $0x90] sm:$0xff]
        %v735 = vld [vmem:[#allocation2 + $0x98] sm:$0xff]
        %v736 = vld [vmem:[#allocation2 + $0xa0] sm:$0xff]
        %v737 = vld [vmem:[#allocation2 + $0xa8] sm:$0xff]
        %v738 = vld [vmem:[#allocation2 + $0xb0] sm:$0xff]
        %v739 = vld [vmem:[#allocation2 + $0xb8] sm:$0xff]
        %v740 = vld [vmem:[#allocation2 + $0xc0] sm:$0xff]
        %v741 = vld [vmem:[#allocation2 + $0xc8] sm:$0xff]
        %v742 = vld [vmem:[#allocation2 + $0xd0] sm:$0xff]
        %v743 = vld [vmem:[#allocation2 + $0xd8] sm:$0xff]
        %v744 = vld [vmem:[#allocation2 + $0xe0] sm:$0xff]
        %v745 = vld [vmem:[#allocation2 + $0xe8] sm:$0xff]
        %v746 = vld [vmem:[#allocation2 + $0xf0] sm:$0xff]
        %v747 = vld [vmem:[#allocation2 + $0xf8] sm:$0xff]
        %v748 = vld [vmem:[%s2] sm:$0x1]
        %v750 = vlaneseq
        %v751 = vshrl.u32 %v750, 7
        %v752 = vsub.s32 0, %v751
        %v753 = vrot.slane %v748, %v752
        %v755 = vadd.f32 %v716, %v753
        %v756 = vadd.f32 %v717, %v753
        %v757 = vadd.f32 %v718, %v753
        %v758 = vadd.f32 %v719, %v753
        %v759 = vadd.f32 %v720, %v753
        %v760 = vadd.f32 %v721, %v753
        %v761 = vadd.f32 %v722, %v753
        %v762 = vadd.f32 %v723, %v753
        %v763 = vadd.f32 %v724, %v753
        %v764 = vadd.f32 %v725, %v753
        %v765 = vadd.f32 %v726, %v753
        %v766 = vadd.f32 %v727, %v753
        %v767 = vadd.f32 %v728, %v753
        %v768 = vadd.f32 %v729, %v753
        %v769 = vadd.f32 %v730, %v753
        %v770 = vadd.f32 %v731, %v753
        %v771 = vadd.f32 %v732, %v753
        %v772 = vadd.f32 %v733, %v753
        %v773 = vadd.f32 %v734, %v753
        %v774 = vadd.f32 %v735, %v753
        %v775 = vadd.f32 %v736, %v753
        %v776 = vadd.f32 %v737, %v753
        %v777 = vadd.f32 %v738, %v753
        %v778 = vadd.f32 %v739, %v753
        %v779 = vadd.f32 %v740, %v753
        %v780 = vadd.f32 %v741, %v753
        %v781 = vadd.f32 %v742, %v753
        %v782 = vadd.f32 %v743, %v753
        %v783 = vadd.f32 %v744, %v753
        %v784 = vadd.f32 %v745, %v753
        %v785 = vadd.f32 %v746, %v753
        %v786 = vadd.f32 %v747, %v753
        %v787 = vmax.f32 %v755, 0.0
        %v788 = vmax.f32 %v756, 0.0
        %v789 = vmax.f32 %v757, 0.0
        %v790 = vmax.f32 %v758, 0.0
        %v791 = vmax.f32 %v759, 0.0
        %v792 = vmax.f32 %v760, 0.0
        %v793 = vmax.f32 %v761, 0.0
        %v794 = vmax.f32 %v762, 0.0
        %v795 = vmax.f32 %v763, 0.0
        %v796 = vmax.f32 %v764, 0.0
        %v797 = vmax.f32 %v765, 0.0
        %v798 = vmax.f32 %v766, 0.0
        %v799 = vmax.f32 %v767, 0.0
        %v800 = vmax.f32 %v768, 0.0
        %v801 = vmax.f32 %v769, 0.0
        %v802 = vmax.f32 %v770, 0.0
        %v803 = vmax.f32 %v771, 0.0
        %v804 = vmax.f32 %v772, 0.0
        %v805 = vmax.f32 %v773, 0.0
        %v806 = vmax.f32 %v774, 0.0
        %v807 = vmax.f32 %v775, 0.0
        %v808 = vmax.f32 %v776, 0.0
        %v809 = vmax.f32 %v777, 0.0
        %v810 = vmax.f32 %v778, 0.0
        %v811 = vmax.f32 %v779, 0.0
        %v812 = vmax.f32 %v780, 0.0
        %v813 = vmax.f32 %v781, 0.0
        %v814 = vmax.f32 %v782, 0.0
        %v815 = vmax.f32 %v783, 0.0
        %v816 = vmax.f32 %v784, 0.0
        %v817 = vmax.f32 %v785, 0.0
        %v818 = vmax.f32 %v786, 0.0
        %819 = vst [vmem:[%s217] sm:$0xff] %v787
        %820 = vst [vmem:[%s217 + $0x8] sm:$0xff] %v788
        %821 = vst [vmem:[%s217 + $0x10] sm:$0xff] %v789
        %822 = vst [vmem:[%s217 + $0x18] sm:$0xff] %v790
        %823 = vst [vmem:[%s217 + $0x20] sm:$0xff] %v791
        %824 = vst [vmem:[%s217 + $0x28] sm:$0xff] %v792
        %825 = vst [vmem:[%s217 + $0x30] sm:$0xff] %v793
        %826 = vst [vmem:[%s217 + $0x38] sm:$0xff] %v794
        %827 = vst [vmem:[%s217 + $0x40] sm:$0xff] %v795
        %828 = vst [vmem:[%s217 + $0x48] sm:$0xff] %v796
        %829 = vst [vmem:[%s217 + $0x50] sm:$0xff] %v797
        %830 = vst [vmem:[%s217 + $0x58] sm:$0xff] %v798
        %831 = vst [vmem:[%s217 + $0x60] sm:$0xff] %v799
        %832 = vst [vmem:[%s217 + $0x68] sm:$0xff] %v800
        %833 = vst [vmem:[%s217 + $0x70] sm:$0xff] %v801
        %834 = vst [vmem:[%s217 + $0x78] sm:$0xff] %v802
        %835 = vst [vmem:[%s217 + $0x80] sm:$0xff] %v803
        %836 = vst [vmem:[%s217 + $0x88] sm:$0xff] %v804
        %837 = vst [vmem:[%s217 + $0x90] sm:$0xff] %v805
        %838 = vst [vmem:[%s217 + $0x98] sm:$0xff] %v806
        %839 = vst [vmem:[%s217 + $0xa0] sm:$0xff] %v807
        %840 = vst [vmem:[%s217 + $0xa8] sm:$0xff] %v808
        %841 = vst [vmem:[%s217 + $0xb0] sm:$0xff] %v809
        %842 = vst [vmem:[%s217 + $0xb8] sm:$0xff] %v810
        %843 = vst [vmem:[%s217 + $0xc0] sm:$0xff] %v811
        %844 = vst [vmem:[%s217 + $0xc8] sm:$0xff] %v812
        %845 = vst [vmem:[%s217 + $0xd0] sm:$0xff] %v813
        %846 = vst [vmem:[%s217 + $0xd8] sm:$0xff] %v814
        %847 = vst [vmem:[%s217 + $0xe0] sm:$0xff] %v815
        %848 = vst [vmem:[%s217 + $0xe8] sm:$0xff] %v816
        %849 = vst [vmem:[%s217 + $0xf0] sm:$0xff] %v817
        %850 = vst [vmem:[%s217 + $0xf8] sm:$0xff] %v818
      $region40: #{bottle2neck_forward.6} parent=31 // pred_fallthru
        _
      %s851 = smul.u32 32, %s18
      %p852 = scmp.lt.s32.totalorder %s851, 63
      %s853 = scalar_select %p852, %s851, 63
      %s854 = smul.addr %s853, 8
      %s855 = scalar_lea.vmem %s3, %s854
      // Predicated region
      $region41: #{bottle2neck_forward.6} parent=31 // pred_check
        %p856 = pneg %p119
      $region42: #{bottle2neck_forward.6} parent=31 // pred_check_branch
        %858 = sbr.rel (%p856) target = $region44
      $region43: #{bottle2neck_forward.6} parent=31 // pred_region
        %s859 = smul.u32 32, %s18
      $region44: #{bottle2neck_forward.6} parent=31 // pred_fallthru
        _
    $region32: #{bottle2neck_forward.6} parent=5 // pred_fallthru
      _
    %p860 = scmp.le.s32.totalorder 2, %s9
    // Predicated region
    $region45: #{bottle2neck_forward.6} parent=5 // pred_check
      %p861 = pneg %p860
    $region46: #{bottle2neck_forward.6} parent=5 // pred_check_branch
      %863 = sbr.rel (%p861) target = $region48
    $region47: #{bottle2neck_forward.6} parent=5 // pred_region
      %s864 = ssub.s32 %s9, 2
      // Predicated region
      $region49: #{bottle2neck_forward.6} parent=47 // pred_check
        %p865 = pneg %p125
      $region50: #{bottle2neck_forward.6} parent=47 // pred_check_branch
        %867 = sbr.rel (%p865) target = $region52
      $region51: #{bottle2neck_forward.6} parent=47 // pred_region
        %s868 = smul.u32 32, %s20
        %p869 = scmp.lt.s32.totalorder %s868, 63
        %s870 = scalar_select %p869, %s868, 63
        %s871 = smul.addr %s870, 8
        %s872 = scalar_lea.vmem %s3, %s871
      $region52: #{bottle2neck_forward.6} parent=47 // pred_fallthru
        _
    $region48: #{bottle2neck_forward.6} parent=5 // pred_fallthru
      _
  $region6: #{bottle2neck_forward.6} parent=0 // loop_footer
    %s13 = sadd.s32 1, %s9
  $region7: #{bottle2neck_forward.6} parent=0 // loop_footer_branch
    %8 = sbr.rel target = $region3
  $region8: #{bottle2neck_forward.6} parent=0 // loop_exit
    _

// kernel: bottle2neck_forward.9
$region0: #{bottle2neck_forward.9}
  #allocation0 [shape = 'u32[]', space=smem, size = 0x4, offset = 0x4, fixed_abs, tag = 'smem constant byte address 0x4 - core index']
  #allocation1 [shape = 'u32[144,128]{1,0:T(1,128)}', space=vmem, size = 0x12000, scoped, tag = 'internal scratch']
  #allocation2 [shape = 'f32[256,128]{1,0:T(8,128)}', space=vmem, size = 0x20000, scoped, tag = 'scratch operand']
  %s0 = inlined_call_operand.vmem [shape: f32[512,12], index: 0, kind: input, shape index: {}]
  %s1 = inlined_call_operand.vmem [shape: f32[12,128], index: 1, kind: input, shape index: {}]
  %s2 = inlined_call_operand.vmem [shape: f32[1,128], index: 2, kind: input, shape index: {}]
  %s3 = inlined_call_operand.vmem [shape: f32[512,128], index: 3, kind: input, shape index: {}]
  %s4 = inlined_call_operand.hbm [shape: f32[512,128], index: 4, kind: output, shape index: {}]
  %s5 = sld [smem:[#allocation0]]
  $region57: #{bottle2neck_forward.9} parent=0
    _
  %s7 = ssub.s32 1, %s5
  %s8 = scalar_select 0, %s7, %s5
  $region1: #{bottle2neck_forward.9} parent=0
    #allocation3 [shape = 'u8[262144]{0}', space=vmem, size = 0x40000, scoped, tag = 'output window, operand 0']
    #allocation4 [shape = 's32[2]{0}', space=sflag, size = 0x8, scoped, tag = 'scoped memory for bottle2neck_forward.9']
    %9 = vsyncpa [#allocation4], 0
    %s10 = scalar_lea.sflag [#allocation4], 1
    %11 = vsyncpa %s10, 0
    loop: start=0, step=1, limit=4
    $region2: #{bottle2neck_forward.9} parent=1 // loop_pre_header
      _
    $region3: #{bottle2neck_forward.9} parent=1 // loop_header
      %s13 = sphi 0, %s17
      %p14 = scmp.ge.s32.totalorder %s13, 4
      %s20 = sphi 0, %s32
      %s21 = sphi 0, %s28
      %s22 = sphi 0, %s20
      %s23 = sphi 0, %s21
      %s24 = sphi 0, %s22
      %s25 = sphi 0, %s23
      %s37 = sphi 0, %s39
      %s40 = sphi 0, %s37
      %s41 = sphi 0, %s40
      %s57 = sphi 0, %s41
      %s63 = sphi 0, %s65
      %s66 = sphi 0, %s63
      %s67 = sphi 0, %s66
      %s83 = sphi 0, %s67
      %s87 = sphi 0, %s87
      %s89 = sphi 0, %s87
      %s90 = sphi 0, %s89
      %s104 = sphi 0, %s90
      %s110 = sphi 0, %s112
      %s113 = sphi 0, %s110
      %s114 = sphi 0, %s113
      %s130 = sphi 0, %s114
      %s136 = sphi 0, %s138
      %s139 = sphi 0, %s136
      %s140 = sphi 0, %s139
      %s156 = sphi 0, %s140
    $region4: #{bottle2neck_forward.9} parent=1 // loop_header_branch
      %16 = sbr.rel (%p14) target = $region8
    $region5: #{bottle2neck_forward.9} parent=1 // loop_body
      %s18 = ssub.s32 %s13, 1
      %s19 = ssub.s32 %s13, 2
      %s26 = sadd.s32 1, %s21
      %p27 = scmp.ge.s32.totalorder %s26, 1
      %s28 = scalar_select %p27, 0, %s26
      %s29 = sadd.s32 1, %s20
      %s30 = scalar_select %p27, %s29, %s20
      %p31 = scmp.ge.s32.totalorder %s30, 2
      %s32 = scalar_select %p31, 0, %s30
      %s33 = ssub.s32 %s20, %s32
      %s34 = ssub.s32 %s21, %s28
      %s35 = sor.u32 %s33, %s34
      %p36 = scmp.eq.s32.totalorder %s35, 0
      %s38 = sadd.s32 %s37, 1
      %s39 = scalar_select %p36, %s37, %s38
      %p42 = pneg %p36
      %p43 = scmp.eq.s32.totalorder %s13, 1
      %p44 = por %p42, %p43
      %p45 = scmp.ne.s32.totalorder %s37, %s40
      %p46 = scmp.eq.s32.totalorder %s13, 0
      %p47 = por %p45, %p46
      %p48 = scmp.ne.s32.totalorder %s37, %s40
      %p49 = scmp.eq.s32.totalorder %s18, 1
      %p50 = por %p48, %p49
      %p51 = scmp.ne.s32.totalorder %s40, %s41
      %p52 = scmp.eq.s32.totalorder %s18, 0
      %p53 = por %p51, %p52
      %p54 = scmp.ne.s32.totalorder %s40, %s41
      %p55 = scmp.eq.s32.totalorder %s19, 1
      %p56 = por %p54, %p55
      %p58 = scmp.ne.s32.totalorder %s41, %s57
      %p59 = scmp.eq.s32.totalorder %s19, 0
      %p60 = por %p58, %p59
      %s61 = ssub.s32 %s21, %s28
      %p62 = scmp.eq.s32.totalorder %s61, 0
      %s64 = sadd.s32 %s63, 1
      %s65 = scalar_select %p62, %s63, %s64
      %p68 = pneg %p62
      %p69 = scmp.eq.s32.totalorder %s13, 1
      %p70 = por %p68, %p69
      %p71 = scmp.ne.s32.totalorder %s63, %s66
      %p72 = scmp.eq.s32.totalorder %s13, 0
      %p73 = por %p71, %p72
      %p74 = scmp.ne.s32.totalorder %s63, %s66
      %p75 = scmp.eq.s32.totalorder %s18, 1
      %p76 = por %p74, %p75
      %p77 = scmp.ne.s32.totalorder %s66, %s67
      %p78 = scmp.eq.s32.totalorder %s18, 0
      %p79 = por %p77, %p78
      %p80 = scmp.ne.s32.totalorder %s66, %s67
      %p81 = scmp.eq.s32.totalorder %s19, 1
      %p82 = por %p80, %p81
      %p84 = scmp.ne.s32.totalorder %s67, %s83
      %p85 = scmp.eq.s32.totalorder %s19, 0
      %p86 = por %p84, %p85
      %s88 = sadd.s32 %s87, 1
      %p91 = scmp.eq.s32.totalorder %s13, 1
      %p92 = scmp.ne.s32.totalorder %s87, %s89
      %p93 = scmp.eq.s32.totalorder %s13, 0
      %p94 = por %p92, %p93
      %p95 = scmp.ne.s32.totalorder %s87, %s89
      %p96 = scmp.eq.s32.totalorder %s18, 1
      %p97 = por %p95, %p96
      %p98 = scmp.ne.s32.totalorder %s89, %s90
      %p99 = scmp.eq.s32.totalorder %s18, 0
      %p100 = por %p98, %p99
      %p101 = scmp.ne.s32.totalorder %s89, %s90
      %p102 = scmp.eq.s32.totalorder %s19, 1
      %p103 = por %p101, %p102
      %p105 = scmp.ne.s32.totalorder %s90, %s104
      %p106 = scmp.eq.s32.totalorder %s19, 0
      %p107 = por %p105, %p106
      %s108 = ssub.s32 %s20, %s32
      %p109 = scmp.eq.s32.totalorder %s108, 0
      %s111 = sadd.s32 %s110, 1
      %s112 = scalar_select %p109, %s110, %s111
      %p115 = pneg %p109
      %p116 = scmp.eq.s32.totalorder %s13, 1
      %p117 = por %p115, %p116
      %p118 = scmp.ne.s32.totalorder %s110, %s113
      %p119 = scmp.eq.s32.totalorder %s13, 0
      %p120 = por %p118, %p119
      %p121 = scmp.ne.s32.totalorder %s110, %s113
      %p122 = scmp.eq.s32.totalorder %s18, 1
      %p123 = por %p121, %p122
      %p124 = scmp.ne.s32.totalorder %s113, %s114
      %p125 = scmp.eq.s32.totalorder %s18, 0
      %p126 = por %p124, %p125
      %p127 = scmp.ne.s32.totalorder %s113, %s114
      %p128 = scmp.eq.s32.totalorder %s19, 1
      %p129 = por %p127, %p128
      %p131 = scmp.ne.s32.totalorder %s114, %s130
      %p132 = scmp.eq.s32.totalorder %s19, 0
      %p133 = por %p131, %p132
      %s134 = ssub.s32 %s20, %s32
      %p135 = scmp.eq.s32.totalorder %s134, 0
      %s137 = sadd.s32 %s136, 1
      %s138 = scalar_select %p135, %s136, %s137
      %p141 = pneg %p135
      %p142 = scmp.eq.s32.totalorder %s13, 1
      %p143 = por %p141, %p142
      %p144 = scmp.ne.s32.totalorder %s136, %s139
      %p145 = scmp.eq.s32.totalorder %s13, 0
      %p146 = por %p144, %p145
      %p147 = scmp.ne.s32.totalorder %s136, %s139
      %p148 = scmp.eq.s32.totalorder %s18, 1
      %p149 = por %p147, %p148
      %p150 = scmp.ne.s32.totalorder %s139, %s140
      %p151 = scmp.eq.s32.totalorder %s18, 0
      %p152 = por %p150, %p151
      %p153 = scmp.ne.s32.totalorder %s139, %s140
      %p154 = scmp.eq.s32.totalorder %s19, 1
      %p155 = por %p153, %p154
      %p157 = scmp.ne.s32.totalorder %s140, %s156
      %p158 = scmp.eq.s32.totalorder %s19, 0
      %p159 = por %p157, %p158
      %p160 = scmp.le.s32.totalorder 1, %s13
      %p161 = scmp.lt.s32.totalorder %s13, 3
      %p162 = pnand %p160, %p161
      %p163 = pneg %p162
      // Predicated region
      $region9: #{bottle2neck_forward.9} parent=5 // pred_check
        _
      $region10: #{bottle2neck_forward.9} parent=5 // pred_check_branch
        %165 = sbr.rel (%p162) target = $region12
      $region11: #{bottle2neck_forward.9} parent=5 // pred_region
        %s166 = ssub.s32 %s13, 1
        // Predicated region
        $region13: #{bottle2neck_forward.9} parent=11 // pred_check
          %p167 = pneg %p79
        $region14: #{bottle2neck_forward.9} parent=11 // pred_check_branch
          %169 = sbr.rel (%p167) target = $region16
        $region15: #{bottle2neck_forward.9} parent=11 // pred_region
          %s170 = smul.u32 2, %s23
          %p171 = scmp.lt.s32.totalorder %s170, 1
          %s172 = scalar_select %p171, %s170, 1
          %s173 = smul.addr %s172, 8
          %s174 = scalar_lea.vmem %s1, %s173
          %s175 = smul.u32 2, %s23
        $region16: #{bottle2neck_forward.9} parent=11 // pred_fallthru
          _
        // Predicated region
        $region17: #{bottle2neck_forward.9} parent=11 // pred_check
          %p176 = pneg %p100
        $region18: #{bottle2neck_forward.9} parent=11 // pred_check_branch
          %178 = sbr.rel (%p176) target = $region20
        $region19: #{bottle2neck_forward.9} parent=11 // pred_region
          _
        $region20: #{bottle2neck_forward.9} parent=11 // pred_fallthru
          _
      $region12: #{bottle2neck_forward.9} parent=5 // pred_fallthru
        _
      %p179 = scmp.lt.s32.totalorder %s13, 2
      // Predicated region
      $region21: #{bottle2neck_forward.9} parent=5 // pred_check
        %p180 = pneg %p179
      $region22: #{bottle2neck_forward.9} parent=5 // pred_check_branch
        %182 = sbr.rel (%p180) target = $region24
      $region23: #{bottle2neck_forward.9} parent=5 // pred_region
        // Predicated region
        $region25: #{bottle2neck_forward.9} parent=23 // pred_check
          %p183 = pneg %p47
        $region26: #{bottle2neck_forward.9} parent=23 // pred_check_branch
          %185 = sbr.rel (%p183) target = $region28
        $region27: #{bottle2neck_forward.9} parent=23 // pred_region
          %s186 = smul.u32 32, %s20
          %p187 = scmp.lt.s32.totalorder %s186, 63
          %s188 = scalar_select %p187, %s186, 63
          %p189 = scmp.lt.s32.totalorder %s21, 0
          %s190 = scalar_select %p189, %s21, 0
          %s191 = sadd.s32 %s190, %s188
          %s192 = smul.addr %s191, 8
          %s193 = scalar_lea.vmem %s0, %s192
          %s194 = smul.u32 32, %s20
        $region28: #{bottle2neck_forward.9} parent=23 // pred_fallthru
          _
        // Predicated region
        $region29: #{bottle2neck_forward.9} parent=23 // pred_check
          %p195 = pneg %p120
        $region30: #{bottle2neck_forward.9} parent=23 // pred_check_branch
          %197 = sbr.rel (%p195) target = $region32
        $region31: #{bottle2neck_forward.9} parent=23 // pred_region
          %s198 = smul.u32 32, %s20
          %p199 = scmp.lt.s32.totalorder %s198, 63
          %s200 = scalar_select %p199, %s198, 63
          %s201 = smul.addr %s200, 8
          %s202 = scalar_lea.vmem %s3, %s201
          %s203 = smul.u32 32, %s20
        $region32: #{bottle2neck_forward.9} parent=23 // pred_fallthru
          _
      $region24: #{bottle2neck_forward.9} parent=5 // pred_fallthru
        _
      %p204 = scmp.le.s32.totalorder 1, %s13
      %p205 = scmp.lt.s32.totalorder %s13, 3
      %p206 = pnand %p204, %p205
      %p207 = pneg %p206
      // Predicated region
      $region33: #{bottle2neck_forward.9} parent=5 // pred_check
        _
      $region34: #{bottle2neck_forward.9} parent=5 // pred_check_branch
        %209 = sbr.rel (%p206) target = $region36
      $region35: #{bottle2neck_forward.9} parent=5 // pred_region
        %s210 = ssub.s32 %s13, 1
        %s211 = smul.u32 32, %s22
        %p212 = scmp.lt.s32.totalorder %s211, 63
        %s213 = scalar_select %p212, %s211, 63
        %p214 = scmp.lt.s32.totalorder %s23, 0
        %s215 = scalar_select %p214, %s23, 0
        %s216 = sadd.s32 %s215, %s213
        %s217 = smul.addr %s216, 8
        %s218 = scalar_lea.vmem %s0, %s217
        %p219 = pneg %p53
        %p220 = pneg %p50
        %s221 = smul.u32 2, %s23
        %p222 = scmp.lt.s32.totalorder %s221, 1
        %s223 = scalar_select %p222, %s221, 1
        %s224 = smul.addr %s223, 8
        %s225 = scalar_lea.vmem %s1, %s224
        %p226 = pneg %p79
        %p227 = pneg %p76
        %p228 = pneg %p100
        %p229 = pneg %p97
        %s230 = smul.u32 32, %s22
        %p231 = scmp.lt.s32.totalorder %s230, 63
        %s232 = scalar_select %p231, %s230, 63
        %s233 = smul.addr %s232, 8
        %s234 = scalar_lea.vmem %s3, %s233
        %p235 = pneg %p126
        %p236 = pneg %p123
        %p237 = pneg %p152
        %p238 = pneg %p149
        %s239 = sand.u32 %s139, 1
        %s240 = scalar_lea.sflag [#allocation4], %s239
        %s241 = sand.u32 %s139, 1
        %s242 = smul.addr %s241, 256
        %s243 = scalar_lea.vmem [#allocation3], %s242
        %s244 = smul.u32 32, %s22
        %p245 = scmp.lt.s32.totalorder %s244, 63
        %s246 = scalar_select %p245, %s244, 63
        %p247 = scmp.lt.s32.totalorder %s23, 0
        %s248 = scalar_select %p247, %s23, 0
        %s249 = sadd.s32 %s248, %s246
        %s250 = smul.addr %s249, 8
        %s251 = scalar_lea.vmem %s0, %s250
        %s252 = smul.u32 32, %s22
        %s253 = smul.u32 2, %s23
        %p254 = scmp.lt.s32.totalorder %s253, 1
        %s255 = scalar_select %p254, %s253, 1
        %s256 = smul.addr %s255, 8
        %s257 = scalar_lea.vmem %s1, %s256
        %s258 = smul.u32 2, %s23
        %s259 = smul.u32 32, %s22
        %p260 = scmp.lt.s32.totalorder %s259, 63
        %s261 = scalar_select %p260, %s259, 63
        %s262 = smul.addr %s261, 8
        %s263 = scalar_lea.vmem %s3, %s262
        %s264 = smul.u32 32, %s22
        %s265 = smul.u32 32, %s22
        %p266 = scmp.eq.s32.totalorder %s23, 0
        // Predicated region
        $region37: #{bottle2neck_forward.9} parent=35 // pred_check
          %p267 = pneg %p266
        $region38: #{bottle2neck_forward.9} parent=35 // pred_check_branch
          %269 = sbr.rel (%p267) target = $region40
        $region39: #{bottle2neck_forward.9} parent=35 // pred_region
          %270 = vst [vmem:[#allocation2] sm:$0xff] 0.0
          %271 = vst [vmem:[#allocation2 + $0x8] sm:$0xff] 0.0
          %272 = vst [vmem:[#allocation2 + $0x10] sm:$0xff] 0.0
          %273 = vst [vmem:[#allocation2 + $0x18] sm:$0xff] 0.0
          %274 = vst [vmem:[#allocation2 + $0x20] sm:$0xff] 0.0
          %275 = vst [vmem:[#allocation2 + $0x28] sm:$0xff] 0.0
          %276 = vst [vmem:[#allocation2 + $0x30] sm:$0xff] 0.0
          %277 = vst [vmem:[#allocation2 + $0x38] sm:$0xff] 0.0
          %278 = vst [vmem:[#allocation2 + $0x40] sm:$0xff] 0.0
          %279 = vst [vmem:[#allocation2 + $0x48] sm:$0xff] 0.0
          %280 = vst [vmem:[#allocation2 + $0x50] sm:$0xff] 0.0
          %281 = vst [vmem:[#allocation2 + $0x58] sm:$0xff] 0.0
          %282 = vst [vmem:[#allocation2 + $0x60] sm:$0xff] 0.0
          %283 = vst [vmem:[#allocation2 + $0x68] sm:$0xff] 0.0
          %284 = vst [vmem:[#allocation2 + $0x70] sm:$0xff] 0.0
          %285 = vst [vmem:[#allocation2 + $0x78] sm:$0xff] 0.0
          %286 = vst [vmem:[#allocation2 + $0x80] sm:$0xff] 0.0
          %287 = vst [vmem:[#allocation2 + $0x88] sm:$0xff] 0.0
          %288 = vst [vmem:[#allocation2 + $0x90] sm:$0xff] 0.0
          %289 = vst [vmem:[#allocation2 + $0x98] sm:$0xff] 0.0
          %290 = vst [vmem:[#allocation2 + $0xa0] sm:$0xff] 0.0
          %291 = vst [vmem:[#allocation2 + $0xa8] sm:$0xff] 0.0
          %292 = vst [vmem:[#allocation2 + $0xb0] sm:$0xff] 0.0
          %293 = vst [vmem:[#allocation2 + $0xb8] sm:$0xff] 0.0
          %294 = vst [vmem:[#allocation2 + $0xc0] sm:$0xff] 0.0
          %295 = vst [vmem:[#allocation2 + $0xc8] sm:$0xff] 0.0
          %296 = vst [vmem:[#allocation2 + $0xd0] sm:$0xff] 0.0
          %297 = vst [vmem:[#allocation2 + $0xd8] sm:$0xff] 0.0
          %298 = vst [vmem:[#allocation2 + $0xe0] sm:$0xff] 0.0
          %299 = vst [vmem:[#allocation2 + $0xe8] sm:$0xff] 0.0
          %300 = vst [vmem:[#allocation2 + $0xf0] sm:$0xff] 0.0
          %301 = vst [vmem:[#allocation2 + $0xf8] sm:$0xff] 0.0
        $region40: #{bottle2neck_forward.9} parent=35 // pred_fallthru
          _
        %v302 = vld [vmem:[#allocation2] sm:$0xff]
        %v303 = vld [vmem:[#allocation2 + $0x8] sm:$0xff]
        %v304 = vld [vmem:[#allocation2 + $0x10] sm:$0xff]
        %v305 = vld [vmem:[#allocation2 + $0x18] sm:$0xff]
        %v306 = vld [vmem:[#allocation2 + $0x20] sm:$0xff]
        %v307 = vld [vmem:[#allocation2 + $0x28] sm:$0xff]
        %v308 = vld [vmem:[#allocation2 + $0x30] sm:$0xff]
        %v309 = vld [vmem:[#allocation2 + $0x38] sm:$0xff]
        %v310 = vld [vmem:[#allocation2 + $0x40] sm:$0xff]
        %v311 = vld [vmem:[#allocation2 + $0x48] sm:$0xff]
        %v312 = vld [vmem:[#allocation2 + $0x50] sm:$0xff]
        %v313 = vld [vmem:[#allocation2 + $0x58] sm:$0xff]
        %v314 = vld [vmem:[#allocation2 + $0x60] sm:$0xff]
        %v315 = vld [vmem:[#allocation2 + $0x68] sm:$0xff]
        %v316 = vld [vmem:[#allocation2 + $0x70] sm:$0xff]
        %v317 = vld [vmem:[#allocation2 + $0x78] sm:$0xff]
        %v318 = vld [vmem:[#allocation2 + $0x80] sm:$0xff]
        %v319 = vld [vmem:[#allocation2 + $0x88] sm:$0xff]
        %v320 = vld [vmem:[#allocation2 + $0x90] sm:$0xff]
        %v321 = vld [vmem:[#allocation2 + $0x98] sm:$0xff]
        %v322 = vld [vmem:[#allocation2 + $0xa0] sm:$0xff]
        %v323 = vld [vmem:[#allocation2 + $0xa8] sm:$0xff]
        %v324 = vld [vmem:[#allocation2 + $0xb0] sm:$0xff]
        %v325 = vld [vmem:[#allocation2 + $0xb8] sm:$0xff]
        %v326 = vld [vmem:[#allocation2 + $0xc0] sm:$0xff]
        %v327 = vld [vmem:[#allocation2 + $0xc8] sm:$0xff]
        %v328 = vld [vmem:[#allocation2 + $0xd0] sm:$0xff]
        %v329 = vld [vmem:[#allocation2 + $0xd8] sm:$0xff]
        %v330 = vld [vmem:[#allocation2 + $0xe0] sm:$0xff]
        %v331 = vld [vmem:[#allocation2 + $0xe8] sm:$0xff]
        %v332 = vld [vmem:[#allocation2 + $0xf0] sm:$0xff]
        %v333 = vld [vmem:[#allocation2 + $0xf8] sm:$0xff]
        %v334 = vld [vmem:[%s251] sm:$0xff]
        %v335 = vld [vmem:[%s251 + $0x8] sm:$0xff]
        %v336 = vld [vmem:[%s251 + $0x10] sm:$0xff]
        %v337 = vld [vmem:[%s251 + $0x18] sm:$0xff]
        %v338 = vld [vmem:[%s251 + $0x20] sm:$0xff]
        %v339 = vld [vmem:[%s251 + $0x28] sm:$0xff]
        %v340 = vld [vmem:[%s251 + $0x30] sm:$0xff]
        %v341 = vld [vmem:[%s251 + $0x38] sm:$0xff]
        %v342 = vld [vmem:[%s251 + $0x40] sm:$0xff]
        %v343 = vld [vmem:[%s251 + $0x48] sm:$0xff]
        %v344 = vld [vmem:[%s251 + $0x50] sm:$0xff]
        %v345 = vld [vmem:[%s251 + $0x58] sm:$0xff]
        %v346 = vld [vmem:[%s251 + $0x60] sm:$0xff]
        %v347 = vld [vmem:[%s251 + $0x68] sm:$0xff]
        %v348 = vld [vmem:[%s251 + $0x70] sm:$0xff]
        %v349 = vld [vmem:[%s251 + $0x78] sm:$0xff]
        %v350 = vld [vmem:[%s251 + $0x80] sm:$0xff]
        %v351 = vld [vmem:[%s251 + $0x88] sm:$0xff]
        %v352 = vld [vmem:[%s251 + $0x90] sm:$0xff]
        %v353 = vld [vmem:[%s251 + $0x98] sm:$0xff]
        %v354 = vld [vmem:[%s251 + $0xa0] sm:$0xff]
        %v355 = vld [vmem:[%s251 + $0xa8] sm:$0xff]
        %v356 = vld [vmem:[%s251 + $0xb0] sm:$0xff]
        %v357 = vld [vmem:[%s251 + $0xb8] sm:$0xff]
        %v358 = vld [vmem:[%s251 + $0xc0] sm:$0xff]
        %v359 = vld [vmem:[%s251 + $0xc8] sm:$0xff]
        %v360 = vld [vmem:[%s251 + $0xd0] sm:$0xff]
        %v361 = vld [vmem:[%s251 + $0xd8] sm:$0xff]
        %v362 = vld [vmem:[%s251 + $0xe0] sm:$0xff]
        %v363 = vld [vmem:[%s251 + $0xe8] sm:$0xff]
        %v364 = vld [vmem:[%s251 + $0xf0] sm:$0xff]
        %v365 = vld [vmem:[%s251 + $0xf8] sm:$0xff]
        %v366 = vld [vmem:[%s257] sm:$0xff]
        %v367 = vld [vmem:[%s257 + $0x8] sm:$0xf]
        %vm368 = vcmask 97280
        %v370 = vsel %vm368, %v334, 0
        %v373 = vsel %vm368, %v335, 0
        %v376 = vsel %vm368, %v336, 0
        %v379 = vsel %vm368, %v337, 0
        %v382 = vsel %vm368, %v338, 0
        %v385 = vsel %vm368, %v339, 0
        %v388 = vsel %vm368, %v340, 0
        %v391 = vsel %vm368, %v341, 0
        %v394 = vsel %vm368, %v342, 0
        %v397 = vsel %vm368, %v343, 0
        %v400 = vsel %vm368, %v344, 0
        %v403 = vsel %vm368, %v345, 0
        %v406 = vsel %vm368, %v346, 0
        %v409 = vsel %vm368, %v347, 0
        %v412 = vsel %vm368, %v348, 0
        %v415 = vsel %vm368, %v349, 0
        %v418 = vsel %vm368, %v350, 0
        %v421 = vsel %vm368, %v351, 0
        %v424 = vsel %vm368, %v352, 0
        %v427 = vsel %vm368, %v353, 0
        %v430 = vsel %vm368, %v354, 0
        %v433 = vsel %vm368, %v355, 0
        %v436 = vsel %vm368, %v356, 0
        %v439 = vsel %vm368, %v357, 0
        %v442 = vsel %vm368, %v358, 0
        %v445 = vsel %vm368, %v359, 0
        %v448 = vsel %vm368, %v360, 0
        %v451 = vsel %vm368, %v361, 0
        %v454 = vsel %vm368, %v362, 0
        %v457 = vsel %vm368, %v363, 0
        %v460 = vsel %vm368, %v364, 0
        %v463 = vsel %vm368, %v365, 0
        %vm465 = vcmask 1043456
        %v467 = vsel %vm465, %v367, 0
        %469 = vmatprep.subr.mxu0 0.0
        %470 = vmatpush1.msra.mxu0 %v366
        %471 = vmatprep.subr.mxu0 0.0
        %472 = vmatpush1.msra.mxu0 %v467
        %473 = vmatprep.subr.mxu0 0.0
        %474 = vmatpush1.msra.mxu0 0.0
        %475 = vmatprep.subr.mxu0 0.0
        %476 = vmatpush1.msra.mxu0 0.0
        %477 = vmatprep.subr.mxu0 0.0
        %478 = vmatpush1.msra.mxu0 0.0
        %479 = vmatprep.subr.mxu0 0.0
        %480 = vmatpush1.msra.mxu0 0.0
        %481 = vmatprep.subr.mxu0 0.0
        %482 = vmatpush1.msra.mxu0 0.0
        %483 = vmatprep.subr.mxu0 0.0
        %484 = vmatpush1.msra.mxu0 0.0
        %485 = vmatprep.subr.mxu0 0.0
        %486 = vmatpush1.msra.mxu0 0.0
        %487 = vmatprep.subr.mxu0 0.0
        %488 = vmatpush1.msra.mxu0 0.0
        %489 = vmatprep.subr.mxu0 0.0
        %490 = vmatpush1.msra.mxu0 0.0
        %491 = vmatprep.subr.mxu0 0.0
        %492 = vmatpush1.msra.mxu0 0.0
        %493 = vmatprep.subr.mxu0 0.0
        %494 = vmatpush1.msra.mxu0 0.0
        %495 = vmatprep.subr.mxu0 0.0
        %496 = vmatpush1.msra.mxu0 0.0
        %497 = vmatprep.subr.mxu0 0.0
        %498 = vmatpush1.msra.mxu0 0.0
        %499 = vmatprep.subr.mxu0 0.0
        %500 = vmatpush1.msra.mxu0 0.0
        %501 = vmatprep.subr.mxu0 0.0
        %502 = vmatpush1.msra.mxu0 0.0
        %503 = vmatprep.subr.mxu0 0.0
        %504 = vmatpush1.msra.mxu0 0.0
        %505 = vmatprep.subr.mxu0 0.0
        %506 = vmatpush1.msra.mxu0 0.0
        %507 = vmatprep.subr.mxu0 0.0
        %508 = vmatpush1.msra.mxu0 0.0
        %509 = vmatprep.subr.mxu0 0.0
        %510 = vmatpush1.msra.mxu0 0.0
        %511 = vmatprep.subr.mxu0 0.0
        %512 = vmatpush1.msra.mxu0 0.0
        %513 = vmatprep.subr.mxu0 0.0
        %514 = vmatpush1.msra.mxu0 0.0
        %515 = vmatprep.subr.mxu0 0.0
        %516 = vmatpush1.msra.mxu0 0.0
        %517 = vmatprep.subr.mxu0 0.0
        %518 = vmatpush1.msra.mxu0 0.0
        %519 = vmatprep.subr.mxu0 0.0
        %520 = vmatpush1.msra.mxu0 0.0
        %521 = vmatprep.subr.mxu0 0.0
        %522 = vmatpush1.msra.mxu0 0.0
        %523 = vmatprep.subr.mxu0 0.0
        %524 = vmatpush1.msra.mxu0 0.0
        %525 = vmatprep.subr.mxu0 0.0
        %526 = vmatpush1.msra.mxu0 0.0
        %527 = vmatprep.subr.mxu0 0.0
        %528 = vmatpush1.msra.mxu0 0.0
        %529 = vmatprep.subr.mxu0 0.0
        %530 = vmatpush1.msra.mxu0 0.0
        %531 = vmatprep.subr.mxu0 0.0
        %532 = vmatpush1.msra.mxu0 0.0
        %533 = vmatprep.mubr.f32.mxu0 0.0
        %534 = vmatmul.mubr.f32.gmra.mrb[0].mxu0 %v370
        %v535 = vpop.f32.mrb[0].mxu0
        %v536 = vadd.f32 0.0, %v535
        %v537 = vpop.f32.mrb[0].mxu0
        %538 = vmatprep.mubr.f32.mxu0 0.0
        %539 = vmatmul.mubr.f32.gmra.mrb[0].mxu0 %v373
        %v540 = vpop.f32.mrb[0].mxu0
        %v541 = vadd.f32 0.0, %v540
        %v542 = vpop.f32.mrb[0].mxu0
        %543 = vmatprep.mubr.f32.mxu0 0.0
        %544 = vmatmul.mubr.f32.gmra.mrb[0].mxu0 %v376
        %v545 = vpop.f32.mrb[0].mxu0
        %v546 = vadd.f32 0.0, %v545
        %v547 = vpop.f32.mrb[0].mxu0
        %548 = vmatprep.mubr.f32.mxu0 0.0
        %549 = vmatmul.mubr.f32.gmra.mrb[0].mxu0 %v379
        %v550 = vpop.f32.mrb[0].mxu0
        %v551 = vadd.f32 0.0, %v550
        %v552 = vpop.f32.mrb[0].mxu0
        %553 = vmatprep.mubr.f32.mxu0 0.0
        %554 = vmatmul.mubr.f32.gmra.mrb[0].mxu0 %v382
        %v555 = vpop.f32.mrb[0].mxu0
        %v556 = vadd.f32 0.0, %v555
        %v557 = vpop.f32.mrb[0].mxu0
        %558 = vmatprep.mubr.f32.mxu0 0.0
        %559 = vmatmul.mubr.f32.gmra.mrb[0].mxu0 %v385
        %v560 = vpop.f32.mrb[0].mxu0
        %v561 = vadd.f32 0.0, %v560
        %v562 = vpop.f32.mrb[0].mxu0
        %563 = vmatprep.mubr.f32.mxu0 0.0
        %564 = vmatmul.mubr.f32.gmra.mrb[0].mxu0 %v388
        %v565 = vpop.f32.mrb[0].mxu0
        %v566 = vadd.f32 0.0, %v565
        %v567 = vpop.f32.mrb[0].mxu0
        %568 = vmatprep.mubr.f32.mxu0 0.0
        %569 = vmatmul.mubr.f32.gmra.mrb[0].mxu0 %v391
        %v570 = vpop.f32.mrb[0].mxu0
        %v571 = vadd.f32 0.0, %v570
        %v572 = vpop.f32.mrb[0].mxu0
        %573 = vmatprep.mubr.f32.mxu0 0.0
        %574 = vmatmul.mubr.f32.gmra.mrb[0].mxu0 %v394
        %v575 = vpop.f32.mrb[0].mxu0
        %v576 = vadd.f32 0.0, %v575
        %v577 = vpop.f32.mrb[0].mxu0
        %578 = vmatprep.mubr.f32.mxu0 0.0
        %579 = vmatmul.mubr.f32.gmra.mrb[0].mxu0 %v397
        %v580 = vpop.f32.mrb[0].mxu0
        %v581 = vadd.f32 0.0, %v580
        %v582 = vpop.f32.mrb[0].mxu0
        %583 = vmatprep.mubr.f32.mxu0 0.0
        %584 = vmatmul.mubr.f32.gmra.mrb[0].mxu0 %v400
        %v585 = vpop.f32.mrb[0].mxu0
        %v586 = vadd.f32 0.0, %v585
        %v587 = vpop.f32.mrb[0].mxu0
        %588 = vmatprep.mubr.f32.mxu0 0.0
        %589 = vmatmul.mubr.f32.gmra.mrb[0].mxu0 %v403
        %v590 = vpop.f32.mrb[0].mxu0
        %v591 = vadd.f32 0.0, %v590
        %v592 = vpop.f32.mrb[0].mxu0
        %593 = vmatprep.mubr.f32.mxu0 0.0
        %594 = vmatmul.mubr.f32.gmra.mrb[0].mxu0 %v406
        %v595 = vpop.f32.mrb[0].mxu0
        %v596 = vadd.f32 0.0, %v595
        %v597 = vpop.f32.mrb[0].mxu0
        %598 = vmatprep.mubr.f32.mxu0 0.0
        %599 = vmatmul.mubr.f32.gmra.mrb[0].mxu0 %v409
        %v600 = vpop.f32.mrb[0].mxu0
        %v601 = vadd.f32 0.0, %v600
        %v602 = vpop.f32.mrb[0].mxu0
        %603 = vmatprep.mubr.f32.mxu0 0.0
        %604 = vmatmul.mubr.f32.gmra.mrb[0].mxu0 %v412
        %v605 = vpop.f32.mrb[0].mxu0
        %v606 = vadd.f32 0.0, %v605
        %v607 = vpop.f32.mrb[0].mxu0
        %608 = vmatprep.mubr.f32.mxu0 0.0
        %609 = vmatmul.mubr.f32.gmra.mrb[0].mxu0 %v415
        %v610 = vpop.f32.mrb[0].mxu0
        %v611 = vadd.f32 0.0, %v610
        %v612 = vpop.f32.mrb[0].mxu0
        %613 = vmatprep.mubr.f32.mxu0 0.0
        %614 = vmatmul.mubr.f32.gmra.mrb[0].mxu0 %v418
        %v615 = vpop.f32.mrb[0].mxu0
        %v616 = vadd.f32 0.0, %v615
        %v617 = vpop.f32.mrb[0].mxu0
        %618 = vmatprep.mubr.f32.mxu0 0.0
        %619 = vmatmul.mubr.f32.gmra.mrb[0].mxu0 %v421
        %v620 = vpop.f32.mrb[0].mxu0
        %v621 = vadd.f32 0.0, %v620
        %v622 = vpop.f32.mrb[0].mxu0
        %623 = vmatprep.mubr.f32.mxu0 0.0
        %624 = vmatmul.mubr.f32.gmra.mrb[0].mxu0 %v424
        %v625 = vpop.f32.mrb[0].mxu0
        %v626 = vadd.f32 0.0, %v625
        %v627 = vpop.f32.mrb[0].mxu0
        %628 = vmatprep.mubr.f32.mxu0 0.0
        %629 = vmatmul.mubr.f32.gmra.mrb[0].mxu0 %v427
        %v630 = vpop.f32.mrb[0].mxu0
        %v631 = vadd.f32 0.0, %v630
        %v632 = vpop.f32.mrb[0].mxu0
        %633 = vmatprep.mubr.f32.mxu0 0.0
        %634 = vmatmul.mubr.f32.gmra.mrb[0].mxu0 %v430
        %v635 = vpop.f32.mrb[0].mxu0
        %v636 = vadd.f32 0.0, %v635
        %v637 = vpop.f32.mrb[0].mxu0
        %638 = vmatprep.mubr.f32.mxu0 0.0
        %639 = vmatmul.mubr.f32.gmra.mrb[0].mxu0 %v433
        %v640 = vpop.f32.mrb[0].mxu0
        %v641 = vadd.f32 0.0, %v640
        %v642 = vpop.f32.mrb[0].mxu0
        %643 = vmatprep.mubr.f32.mxu0 0.0
        %644 = vmatmul.mubr.f32.gmra.mrb[0].mxu0 %v436
        %v645 = vpop.f32.mrb[0].mxu0
        %v646 = vadd.f32 0.0, %v645
        %v647 = vpop.f32.mrb[0].mxu0
        %648 = vmatprep.mubr.f32.mxu0 0.0
        %649 = vmatmul.mubr.f32.gmra.mrb[0].mxu0 %v439
        %v650 = vpop.f32.mrb[0].mxu0
        %v651 = vadd.f32 0.0, %v650
        %v652 = vpop.f32.mrb[0].mxu0
        %653 = vmatprep.mubr.f32.mxu0 0.0
        %654 = vmatmul.mubr.f32.gmra.mrb[0].mxu0 %v442
        %v655 = vpop.f32.mrb[0].mxu0
        %v656 = vadd.f32 0.0, %v655
        %v657 = vpop.f32.mrb[0].mxu0
        %658 = vmatprep.mubr.f32.mxu0 0.0
        %659 = vmatmul.mubr.f32.gmra.mrb[0].mxu0 %v445
        %v660 = vpop.f32.mrb[0].mxu0
        %v661 = vadd.f32 0.0, %v660
        %v662 = vpop.f32.mrb[0].mxu0
        %663 = vmatprep.mubr.f32.mxu0 0.0
        %664 = vmatmul.mubr.f32.gmra.mrb[0].mxu0 %v448
        %v665 = vpop.f32.mrb[0].mxu0
        %v666 = vadd.f32 0.0, %v665
        %v667 = vpop.f32.mrb[0].mxu0
        %668 = vmatprep.mubr.f32.mxu0 0.0
        %669 = vmatmul.mubr.f32.gmra.mrb[0].mxu0 %v451
        %v670 = vpop.f32.mrb[0].mxu0
        %v671 = vadd.f32 0.0, %v670
        %v672 = vpop.f32.mrb[0].mxu0
        %673 = vmatprep.mubr.f32.mxu0 0.0
        %674 = vmatmul.mubr.f32.gmra.mrb[0].mxu0 %v454
        %v675 = vpop.f32.mrb[0].mxu0
        %v676 = vadd.f32 0.0, %v675
        %v677 = vpop.f32.mrb[0].mxu0
        %678 = vmatprep.mubr.f32.mxu0 0.0
        %679 = vmatmul.mubr.f32.gmra.mrb[0].mxu0 %v457
        %v680 = vpop.f32.mrb[0].mxu0
        %v681 = vadd.f32 0.0, %v680
        %v682 = vpop.f32.mrb[0].mxu0
        %683 = vmatprep.mubr.f32.mxu0 0.0
        %684 = vmatmul.mubr.f32.gmra.mrb[0].mxu0 %v460
        %v685 = vpop.f32.mrb[0].mxu0
        %v686 = vadd.f32 0.0, %v685
        %v687 = vpop.f32.mrb[0].mxu0
        %688 = vmatprep.mubr.f32.mxu0 0.0
        %689 = vmatmul.mubr.f32.gmra.mrb[0].mxu0 %v463
        %v690 = vpop.f32.mrb[0].mxu0
        %v691 = vadd.f32 0.0, %v690
        %v692 = vpop.f32.mrb[0].mxu0
        %693 = vdwg.mxu0
        %v694 = vadd.f32 %v302, %v536
        %v695 = vadd.f32 %v303, %v541
        %v696 = vadd.f32 %v304, %v546
        %v697 = vadd.f32 %v305, %v551
        %v698 = vadd.f32 %v306, %v556
        %v699 = vadd.f32 %v307, %v561
        %v700 = vadd.f32 %v308, %v566
        %v701 = vadd.f32 %v309, %v571
        %v702 = vadd.f32 %v310, %v576
        %v703 = vadd.f32 %v311, %v581
        %v704 = vadd.f32 %v312, %v586
        %v705 = vadd.f32 %v313, %v591
        %v706 = vadd.f32 %v314, %v596
        %v707 = vadd.f32 %v315, %v601
        %v708 = vadd.f32 %v316, %v606
        %v709 = vadd.f32 %v317, %v611
        %v710 = vadd.f32 %v318, %v616
        %v711 = vadd.f32 %v319, %v621
        %v712 = vadd.f32 %v320, %v626
        %v713 = vadd.f32 %v321, %v631
        %v714 = vadd.f32 %v322, %v636
        %v715 = vadd.f32 %v323, %v641
        %v716 = vadd.f32 %v324, %v646
        %v717 = vadd.f32 %v325, %v651
        %v718 = vadd.f32 %v326, %v656
        %v719 = vadd.f32 %v327, %v661
        %v720 = vadd.f32 %v328, %v666
        %v721 = vadd.f32 %v329, %v671
        %v722 = vadd.f32 %v330, %v676
        %v723 = vadd.f32 %v331, %v681
        %v724 = vadd.f32 %v332, %v686
        %v725 = vadd.f32 %v333, %v691
        %726 = vst [vmem:[#allocation2] sm:$0xff] %v694
        %727 = vst [vmem:[#allocation2 + $0x8] sm:$0xff] %v695
        %728 = vst [vmem:[#allocation2 + $0x10] sm:$0xff] %v696
        %729 = vst [vmem:[#allocation2 + $0x18] sm:$0xff] %v697
        %730 = vst [vmem:[#allocation2 + $0x20] sm:$0xff] %v698
        %731 = vst [vmem:[#allocation2 + $0x28] sm:$0xff] %v699
        %732 = vst [vmem:[#allocation2 + $0x30] sm:$0xff] %v700
        %733 = vst [vmem:[#allocation2 + $0x38] sm:$0xff] %v701
        %734 = vst [vmem:[#allocation2 + $0x40] sm:$0xff] %v702
        %735 = vst [vmem:[#allocation2 + $0x48] sm:$0xff] %v703
        %736 = vst [vmem:[#allocation2 + $0x50] sm:$0xff] %v704
        %737 = vst [vmem:[#allocation2 + $0x58] sm:$0xff] %v705
        %738 = vst [vmem:[#allocation2 + $0x60] sm:$0xff] %v706
        %739 = vst [vmem:[#allocation2 + $0x68] sm:$0xff] %v707
        %740 = vst [vmem:[#allocation2 + $0x70] sm:$0xff] %v708
        %741 = vst [vmem:[#allocation2 + $0x78] sm:$0xff] %v709
        %742 = vst [vmem:[#allocation2 + $0x80] sm:$0xff] %v710
        %743 = vst [vmem:[#allocation2 + $0x88] sm:$0xff] %v711
        %744 = vst [vmem:[#allocation2 + $0x90] sm:$0xff] %v712
        %745 = vst [vmem:[#allocation2 + $0x98] sm:$0xff] %v713
        %746 = vst [vmem:[#allocation2 + $0xa0] sm:$0xff] %v714
        %747 = vst [vmem:[#allocation2 + $0xa8] sm:$0xff] %v715
        %748 = vst [vmem:[#allocation2 + $0xb0] sm:$0xff] %v716
        %749 = vst [vmem:[#allocation2 + $0xb8] sm:$0xff] %v717
        %750 = vst [vmem:[#allocation2 + $0xc0] sm:$0xff] %v718
        %751 = vst [vmem:[#allocation2 + $0xc8] sm:$0xff] %v719
        %752 = vst [vmem:[#allocation2 + $0xd0] sm:$0xff] %v720
        %753 = vst [vmem:[#allocation2 + $0xd8] sm:$0xff] %v721
        %754 = vst [vmem:[#allocation2 + $0xe0] sm:$0xff] %v722
        %755 = vst [vmem:[#allocation2 + $0xe8] sm:$0xff] %v723
        %756 = vst [vmem:[#allocation2 + $0xf0] sm:$0xff] %v724
        %757 = vst [vmem:[#allocation2 + $0xf8] sm:$0xff] %v725
        // Predicated region
        $region41: #{bottle2neck_forward.9} parent=35 // pred_check
          %p758 = pneg %p266
        $region42: #{bottle2neck_forward.9} parent=35 // pred_check_branch
          %760 = sbr.rel (%p758) target = $region44
        $region43: #{bottle2neck_forward.9} parent=35 // pred_region
          %v761 = vld [vmem:[#allocation2] sm:$0xff]
          %v762 = vld [vmem:[#allocation2 + $0x8] sm:$0xff]
          %v763 = vld [vmem:[#allocation2 + $0x10] sm:$0xff]
          %v764 = vld [vmem:[#allocation2 + $0x18] sm:$0xff]
          %v765 = vld [vmem:[#allocation2 + $0x20] sm:$0xff]
          %v766 = vld [vmem:[#allocation2 + $0x28] sm:$0xff]
          %v767 = vld [vmem:[#allocation2 + $0x30] sm:$0xff]
          %v768 = vld [vmem:[#allocation2 + $0x38] sm:$0xff]
          %v769 = vld [vmem:[#allocation2 + $0x40] sm:$0xff]
          %v770 = vld [vmem:[#allocation2 + $0x48] sm:$0xff]
          %v771 = vld [vmem:[#allocation2 + $0x50] sm:$0xff]
          %v772 = vld [vmem:[#allocation2 + $0x58] sm:$0xff]
          %v773 = vld [vmem:[#allocation2 + $0x60] sm:$0xff]
          %v774 = vld [vmem:[#allocation2 + $0x68] sm:$0xff]
          %v775 = vld [vmem:[#allocation2 + $0x70] sm:$0xff]
          %v776 = vld [vmem:[#allocation2 + $0x78] sm:$0xff]
          %v777 = vld [vmem:[#allocation2 + $0x80] sm:$0xff]
          %v778 = vld [vmem:[#allocation2 + $0x88] sm:$0xff]
          %v779 = vld [vmem:[#allocation2 + $0x90] sm:$0xff]
          %v780 = vld [vmem:[#allocation2 + $0x98] sm:$0xff]
          %v781 = vld [vmem:[#allocation2 + $0xa0] sm:$0xff]
          %v782 = vld [vmem:[#allocation2 + $0xa8] sm:$0xff]
          %v783 = vld [vmem:[#allocation2 + $0xb0] sm:$0xff]
          %v784 = vld [vmem:[#allocation2 + $0xb8] sm:$0xff]
          %v785 = vld [vmem:[#allocation2 + $0xc0] sm:$0xff]
          %v786 = vld [vmem:[#allocation2 + $0xc8] sm:$0xff]
          %v787 = vld [vmem:[#allocation2 + $0xd0] sm:$0xff]
          %v788 = vld [vmem:[#allocation2 + $0xd8] sm:$0xff]
          %v789 = vld [vmem:[#allocation2 + $0xe0] sm:$0xff]
          %v790 = vld [vmem:[#allocation2 + $0xe8] sm:$0xff]
          %v791 = vld [vmem:[#allocation2 + $0xf0] sm:$0xff]
          %v792 = vld [vmem:[#allocation2 + $0xf8] sm:$0xff]
          %v793 = vld [vmem:[%s2] sm:$0x1]
          %v795 = vlaneseq
          %v796 = vshrl.u32 %v795, 7
          %v797 = vsub.s32 0, %v796
          %v798 = vrot.slane %v793, %v797
          %v800 = vadd.f32 %v761, %v798
          %v801 = vadd.f32 %v762, %v798
          %v802 = vadd.f32 %v763, %v798
          %v803 = vadd.f32 %v764, %v798
          %v804 = vadd.f32 %v765, %v798
          %v805 = vadd.f32 %v766, %v798
          %v806 = vadd.f32 %v767, %v798
          %v807 = vadd.f32 %v768, %v798
          %v808 = vadd.f32 %v769, %v798
          %v809 = vadd.f32 %v770, %v798
          %v810 = vadd.f32 %v771, %v798
          %v811 = vadd.f32 %v772, %v798
          %v812 = vadd.f32 %v773, %v798
          %v813 = vadd.f32 %v774, %v798
          %v814 = vadd.f32 %v775, %v798
          %v815 = vadd.f32 %v776, %v798
          %v816 = vadd.f32 %v777, %v798
          %v817 = vadd.f32 %v778, %v798
          %v818 = vadd.f32 %v779, %v798
          %v819 = vadd.f32 %v780, %v798
          %v820 = vadd.f32 %v781, %v798
          %v821 = vadd.f32 %v782, %v798
          %v822 = vadd.f32 %v783, %v798
          %v823 = vadd.f32 %v784, %v798
          %v824 = vadd.f32 %v785, %v798
          %v825 = vadd.f32 %v786, %v798
          %v826 = vadd.f32 %v787, %v798
          %v827 = vadd.f32 %v788, %v798
          %v828 = vadd.f32 %v789, %v798
          %v829 = vadd.f32 %v790, %v798
          %v830 = vadd.f32 %v791, %v798
          %v831 = vadd.f32 %v792, %v798
          %v832 = vld [vmem:[%s263] sm:$0xff]
          %v833 = vld [vmem:[%s263 + $0x8] sm:$0xff]
          %v834 = vld [vmem:[%s263 + $0x10] sm:$0xff]
          %v835 = vld [vmem:[%s263 + $0x18] sm:$0xff]
          %v836 = vld [vmem:[%s263 + $0x20] sm:$0xff]
          %v837 = vld [vmem:[%s263 + $0x28] sm:$0xff]
          %v838 = vld [vmem:[%s263 + $0x30] sm:$0xff]
          %v839 = vld [vmem:[%s263 + $0x38] sm:$0xff]
          %v840 = vld [vmem:[%s263 + $0x40] sm:$0xff]
          %v841 = vld [vmem:[%s263 + $0x48] sm:$0xff]
          %v842 = vld [vmem:[%s263 + $0x50] sm:$0xff]
          %v843 = vld [vmem:[%s263 + $0x58] sm:$0xff]
          %v844 = vld [vmem:[%s263 + $0x60] sm:$0xff]
          %v845 = vld [vmem:[%s263 + $0x68] sm:$0xff]
          %v846 = vld [vmem:[%s263 + $0x70] sm:$0xff]
          %v847 = vld [vmem:[%s263 + $0x78] sm:$0xff]
          %v848 = vld [vmem:[%s263 + $0x80] sm:$0xff]
          %v849 = vld [vmem:[%s263 + $0x88] sm:$0xff]
          %v850 = vld [vmem:[%s263 + $0x90] sm:$0xff]
          %v851 = vld [vmem:[%s263 + $0x98] sm:$0xff]
          %v852 = vld [vmem:[%s263 + $0xa0] sm:$0xff]
          %v853 = vld [vmem:[%s263 + $0xa8] sm:$0xff]
          %v854 = vld [vmem:[%s263 + $0xb0] sm:$0xff]
          %v855 = vld [vmem:[%s263 + $0xb8] sm:$0xff]
          %v856 = vld [vmem:[%s263 + $0xc0] sm:$0xff]
          %v857 = vld [vmem:[%s263 + $0xc8] sm:$0xff]
          %v858 = vld [vmem:[%s263 + $0xd0] sm:$0xff]
          %v859 = vld [vmem:[%s263 + $0xd8] sm:$0xff]
          %v860 = vld [vmem:[%s263 + $0xe0] sm:$0xff]
          %v861 = vld [vmem:[%s263 + $0xe8] sm:$0xff]
          %v862 = vld [vmem:[%s263 + $0xf0] sm:$0xff]
          %v863 = vld [vmem:[%s263 + $0xf8] sm:$0xff]
          %v864 = vadd.f32 %v800, %v832
          %v865 = vadd.f32 %v801, %v833
          %v866 = vadd.f32 %v802, %v834
          %v867 = vadd.f32 %v803, %v835
          %v868 = vadd.f32 %v804, %v836
          %v869 = vadd.f32 %v805, %v837
          %v870 = vadd.f32 %v806, %v838
          %v871 = vadd.f32 %v807, %v839
          %v872 = vadd.f32 %v808, %v840
          %v873 = vadd.f32 %v809, %v841
          %v874 = vadd.f32 %v810, %v842
          %v875 = vadd.f32 %v811, %v843
          %v876 = vadd.f32 %v812, %v844
          %v877 = vadd.f32 %v813, %v845
          %v878 = vadd.f32 %v814, %v846
          %v879 = vadd.f32 %v815, %v847
          %v880 = vadd.f32 %v816, %v848
          %v881 = vadd.f32 %v817, %v849
          %v882 = vadd.f32 %v818, %v850
          %v883 = vadd.f32 %v819, %v851
          %v884 = vadd.f32 %v820, %v852
          %v885 = vadd.f32 %v821, %v853
          %v886 = vadd.f32 %v822, %v854
          %v887 = vadd.f32 %v823, %v855
          %v888 = vadd.f32 %v824, %v856
          %v889 = vadd.f32 %v825, %v857
          %v890 = vadd.f32 %v826, %v858
          %v891 = vadd.f32 %v827, %v859
          %v892 = vadd.f32 %v828, %v860
          %v893 = vadd.f32 %v829, %v861
          %v894 = vadd.f32 %v830, %v862
          %v895 = vadd.f32 %v831, %v863
          %v896 = vmax.f32 %v864, 0.0
          %v897 = vmax.f32 %v865, 0.0
          %v898 = vmax.f32 %v866, 0.0
          %v899 = vmax.f32 %v867, 0.0
          %v900 = vmax.f32 %v868, 0.0
          %v901 = vmax.f32 %v869, 0.0
          %v902 = vmax.f32 %v870, 0.0
          %v903 = vmax.f32 %v871, 0.0
          %v904 = vmax.f32 %v872, 0.0
          %v905 = vmax.f32 %v873, 0.0
          %v906 = vmax.f32 %v874, 0.0
          %v907 = vmax.f32 %v875, 0.0
          %v908 = vmax.f32 %v876, 0.0
          %v909 = vmax.f32 %v877, 0.0
          %v910 = vmax.f32 %v878, 0.0
          %v911 = vmax.f32 %v879, 0.0
          %v912 = vmax.f32 %v880, 0.0
          %v913 = vmax.f32 %v881, 0.0
          %v914 = vmax.f32 %v882, 0.0
          %v915 = vmax.f32 %v883, 0.0
          %v916 = vmax.f32 %v884, 0.0
          %v917 = vmax.f32 %v885, 0.0
          %v918 = vmax.f32 %v886, 0.0
          %v919 = vmax.f32 %v887, 0.0
          %v920 = vmax.f32 %v888, 0.0
          %v921 = vmax.f32 %v889, 0.0
          %v922 = vmax.f32 %v890, 0.0
          %v923 = vmax.f32 %v891, 0.0
          %v924 = vmax.f32 %v892, 0.0
          %v925 = vmax.f32 %v893, 0.0
          %v926 = vmax.f32 %v894, 0.0
          %v927 = vmax.f32 %v895, 0.0
          %928 = vst [vmem:[%s243] sm:$0xff] %v896
          %929 = vst [vmem:[%s243 + $0x8] sm:$0xff] %v897
          %930 = vst [vmem:[%s243 + $0x10] sm:$0xff] %v898
          %931 = vst [vmem:[%s243 + $0x18] sm:$0xff] %v899
          %932 = vst [vmem:[%s243 + $0x20] sm:$0xff] %v900
          %933 = vst [vmem:[%s243 + $0x28] sm:$0xff] %v901
          %934 = vst [vmem:[%s243 + $0x30] sm:$0xff] %v902
          %935 = vst [vmem:[%s243 + $0x38] sm:$0xff] %v903
          %936 = vst [vmem:[%s243 + $0x40] sm:$0xff] %v904
          %937 = vst [vmem:[%s243 + $0x48] sm:$0xff] %v905
          %938 = vst [vmem:[%s243 + $0x50] sm:$0xff] %v906
          %939 = vst [vmem:[%s243 + $0x58] sm:$0xff] %v907
          %940 = vst [vmem:[%s243 + $0x60] sm:$0xff] %v908
          %941 = vst [vmem:[%s243 + $0x68] sm:$0xff] %v909
          %942 = vst [vmem:[%s243 + $0x70] sm:$0xff] %v910
          %943 = vst [vmem:[%s243 + $0x78] sm:$0xff] %v911
          %944 = vst [vmem:[%s243 + $0x80] sm:$0xff] %v912
          %945 = vst [vmem:[%s243 + $0x88] sm:$0xff] %v913
          %946 = vst [vmem:[%s243 + $0x90] sm:$0xff] %v914
          %947 = vst [vmem:[%s243 + $0x98] sm:$0xff] %v915
          %948 = vst [vmem:[%s243 + $0xa0] sm:$0xff] %v916
          %949 = vst [vmem:[%s243 + $0xa8] sm:$0xff] %v917
          %950 = vst [vmem:[%s243 + $0xb0] sm:$0xff] %v918
          %951 = vst [vmem:[%s243 + $0xb8] sm:$0xff] %v919
          %952 = vst [vmem:[%s243 + $0xc0] sm:$0xff] %v920
          %953 = vst [vmem:[%s243 + $0xc8] sm:$0xff] %v921
          %954 = vst [vmem:[%s243 + $0xd0] sm:$0xff] %v922
          %955 = vst [vmem:[%s243 + $0xd8] sm:$0xff] %v923
          %956 = vst [vmem:[%s243 + $0xe0] sm:$0xff] %v924
          %957 = vst [vmem:[%s243 + $0xe8] sm:$0xff] %v925
          %958 = vst [vmem:[%s243 + $0xf0] sm:$0xff] %v926
          %959 = vst [vmem:[%s243 + $0xf8] sm:$0xff] %v927
        $region44: #{bottle2neck_forward.9} parent=35 // pred_fallthru
          _
        %s960 = sand.u32 %s139, 1
        %s961 = scalar_lea.sflag [#allocation4], %s960
        %s962 = sand.u32 %s139, 1
        %s963 = smul.addr %s962, 256
        %s964 = scalar_lea.vmem [#allocation3], %s963
        // Predicated region
        $region45: #{bottle2neck_forward.9} parent=35 // pred_check
          %p965 = pneg %p149
        $region46: #{bottle2neck_forward.9} parent=35 // pred_check_branch
          %967 = sbr.rel (%p965) target = $region48
        $region47: #{bottle2neck_forward.9} parent=35 // pred_region
          %s968 = smul.u32 32, %s22
          %s970 = ssub.s32 4096, 4096
          %971 = vsyncadd %s961, %s970
          %s972 = smul.addr %s968, 128
          %s973 = scalar_lea.hbm %s4, %s972
          %s974 = sshll.u32 %s964, 4
          %s975 = int_to_ptr.vmem [resolvable:$true] %s974
          %980 = dma.vmem_to_hbm [thread:$0]  %s975, 4096, %s973, %s961, 128, 128, 8
        $region48: #{bottle2neck_forward.9} parent=35 // pred_fallthru
          _
      $region36: #{bottle2neck_forward.9} parent=5 // pred_fallthru
        _
      %p981 = scmp.le.s32.totalorder 2, %s13
      // Predicated region
      $region49: #{bottle2neck_forward.9} parent=5 // pred_check
        %p982 = pneg %p981
      $region50: #{bottle2neck_forward.9} parent=5 // pred_check_branch
        %984 = sbr.rel (%p982) target = $region52
      $region51: #{bottle2neck_forward.9} parent=5 // pred_region
        %s985 = ssub.s32 %s13, 2
        // Predicated region
        $region53: #{bottle2neck_forward.9} parent=51 // pred_check
          %p986 = pneg %p155
        $region54: #{bottle2neck_forward.9} parent=51 // pred_check_branch
          %988 = sbr.rel (%p986) target = $region56
        $region55: #{bottle2neck_forward.9} parent=51 // pred_region
          %s989 = sand.u32 %s140, 1
          %s990 = scalar_lea.sflag [#allocation4], %s989
          %s991 = sand.u32 %s140, 1
          %s992 = smul.addr %s991, 256
          %s993 = scalar_lea.vmem [#allocation3], %s992
          %994 = dma.done %s990, 4096
        $region56: #{bottle2neck_forward.9} parent=51 // pred_fallthru
          _
      $region52: #{bottle2neck_forward.9} parent=5 // pred_fallthru
        _
    $region6: #{bottle2neck_forward.9} parent=1 // loop_footer
      %s17 = sadd.s32 1, %s13
    $region7: #{bottle2neck_forward.9} parent=1 // loop_footer_branch
      %12 = sbr.rel target = $region3
    $region8: #{bottle2neck_forward.9} parent=1 // loop_exit
      _
    %995 = vsyncpa [#allocation4], 1
    %s996 = scalar_lea.sflag [#allocation4], 1
    %997 = vsyncpa %s996, 1

</llo_original>
